<compile_context>
chip_gen: v7x
topology: tpu7x:2x2x1
jax: 0.10.0
libtpu: 0.0.40
codegen_flags: <defaults>
</compile_context>

<pallas_src>
import math
import functools

import jax
import jax.numpy as jnp
from jax.experimental import pallas as pl
from jax.experimental.pallas import tpu as pltpu

LN_EPS = 1e-5                  # PyTorch nn.LayerNorm default
MM_DTYPE = jnp.bfloat16        # MXU operand dtype (f32 accumulation everywhere)

# Tile targets (shrunk automatically when a dimension is smaller / not divisible).
# 512 is a 256-multiple (full MXU width on v6e/v7x) and 128-aligned (v5e).
ROW_TILE = 512                 # M tile for projection / epilogue kernels
COL_TILE = 512                 # N tile of projections and K (d_ff) tile of the FFN
FFN_ROW_TILE = 256             # smaller M tile for FFN (x + acc + out live per step)
Q_TILE = 256                   # q-row tile for attention

# Flipped to False (and kernels re-traced) if this Pallas build rejects Buffered(1).
_SINGLE_BUFFER_RESIDENT = True


def _detect_vmem_limit():
    """Generation-dependent VMEM budget: ~75% of physical capacity, capped at 100 MiB."""
    try:
        cap = int(pltpu.get_tpu_info().vmem_capacity_bytes)
    except Exception:
        cap = 64 * 1024 * 1024          # conservative (v7x-sized) fallback
    return min((cap * 3) // 4, 100 * 1024 * 1024)


VMEM_LIMIT_BYTES = _detect_vmem_limit()


# ------------------------------------------------------------------ helpers

def _pick_tile(dim, preferred, align):
    """Largest multiple of `align` that divides `dim` and is <= `preferred`; else `dim`."""
    if dim <= preferred:
        return dim
    t = preferred - (preferred % align)
    while t >= align:
        if dim % t == 0:
            return t
        t -= align
    # TODO(synk): handle dims with no aligned divisor via a pl.cdiv grid + masked ragged tile.
    return dim


def _compiler_params(dimension_semantics):
    return pltpu.CompilerParams(dimension_semantics=dimension_semantics,
                                vmem_limit_bytes=VMEM_LIMIT_BYTES)


def _resident(shape):
    """Full-array block with a constant index_map (weight/bias resident across the grid).
    Single-buffered where supported: the block never changes, so double-buffering wastes VMEM."""
    index_map = lambda *_: (0,) * len(shape)
    if _SINGLE_BUFFER_RESIDENT:
        try:
            return pl.BlockSpec(shape, index_map, pipeline_mode=pl.Buffered(1))
        except (TypeError, AttributeError):       # older Pallas without pipeline_mode
            pass
    return pl.BlockSpec(shape, index_map)


def _layernorm(s, g, b):
    mu = jnp.mean(s, axis=-1, keepdims=True)
    var = jnp.mean(jnp.square(s - mu), axis=-1, keepdims=True)
    return (s - mu) * jax.lax.rsqrt(var + LN_EPS) * g + b


# ------------------------------------------------------------------ kernels

def linear_kernel(x_ref, w_ref, b_ref, o_ref):
    # o[i, j] = x[i, :] @ w[:, j] + b[j]        (bf16 MXU, f32 accumulation)
    x = x_ref[...].astype(MM_DTYPE)
    y = jnp.dot(x, w_ref[...], preferred_element_type=jnp.float32) + b_ref[...]
    o_ref[...] = y.astype(o_ref.dtype)


def out_proj_add_ln_kernel(ctx_ref, res_ref, wo_ref, bo_ref, g_ref, b_ref, o_ref):
    # o = LayerNorm(residual + ctx @ Wo + bo)   -- norm1 / norm2 fused epilogue
    # TODO(synk): for very large d_model, N-tile Wo with an accumulator like the FFN kernel.
    ctx = ctx_ref[...].astype(MM_DTYPE)
    proj = jnp.dot(ctx, wo_ref[...], preferred_element_type=jnp.float32) + bo_ref[...]
    s = res_ref[...].astype(jnp.float32) + proj
    o_ref[...] = _layernorm(s, g_ref[...], b_ref[...]).astype(o_ref.dtype)


def ffn_add_ln_kernel(x_ref, w1_ref, b1_ref, w2_ref, b2_ref, g_ref, b_ref, o_ref, acc_ref):
    # o = LayerNorm(x + relu(x @ W1 + b1) @ W2 + b2)   -- norm3 fused epilogue
    # d_ff is tiled as an "arbitrary" K grid axis; acc_ref accumulates the W2 partial sums,
    # so W1 / W2 / the ReLU intermediate never have to be whole-array resident.
    k = pl.program_id(1)

    @pl.when(k == 0)
    def _init():
        acc_ref[...] = jnp.zeros_like(acc_ref)

    h = jnp.dot(x_ref[...].astype(MM_DTYPE), w1_ref[...],
                preferred_element_type=jnp.float32) + b1_ref[...]
    h = jnp.maximum(h, 0.0)
    acc_ref[...] += jnp.dot(h.astype(MM_DTYPE), w2_ref[...],
                            preferred_element_type=jnp.float32)

    @pl.when(k == pl.num_programs(1) - 1)
    def _finalize():
        s = x_ref[...].astype(jnp.float32) + acc_ref[...] + b2_ref[...]
        o_ref[...] = _layernorm(s, g_ref[...], b_ref[...]).astype(o_ref.dtype)


def attention_kernel(q_ref, kv_ref, mask_ref, o_ref, *, num_heads, scale):
    # q_ref: (1, tq, D)    kv_ref: (1, Sk, 2D) packed k|v    mask_ref: (1, tq, Sk)
    # Heads are split in-kernel; the mask->bias select is computed ONCE (hoisted out of
    # the head loop) and head outputs are stored directly into o_ref (no concatenate).
    # TODO(synk): fold the heads into one batched MXU contraction and switch to a
    #             flash-style online softmax (KV grid axis) for long sequences.
    q = q_ref[0]                                  # (tq, D)  bf16
    kv = kv_ref[0]                                # (Sk, 2D) bf16
    d_model = q.shape[-1]
    dk = d_model // num_heads

    bias = jnp.where(mask_ref[0] == 0.0, -1e9, 0.0)   # (tq, Sk) f32, hoisted

    for h in range(num_heads):                    # static unroll; H is small
        sl = slice(h * dk, (h + 1) * dk)
        qh = (q[:, sl].astype(jnp.float32) * scale).astype(MM_DTYPE)  # scale folded into q
        kh = kv[:, sl]
        vh = kv[:, d_model + h * dk:d_model + (h + 1) * dk]
        s = jax.lax.dot_general(qh, kh, (((1,), (1,)), ((), ())),
                                preferred_element_type=jnp.float32)   # (tq, Sk)
        s = s + bias
        s = s - jnp.max(s, axis=-1, keepdims=True)
        p = jnp.exp(s)
        inv = pl.reciprocal(jnp.sum(p, axis=-1, keepdims=True), approx=True)
        oh = jnp.dot(p.astype(MM_DTYPE), vh, preferred_element_type=jnp.float32) * inv
        o_ref[0, :, sl] = oh.astype(o_ref.dtype)  # direct per-head store, no concat


# ------------------------------------------------------------ pallas wrappers

def linear(x2d, w, b, out_dtype):
    m, d_in = x2d.shape
    d_out = w.shape[1]
    tm = _pick_tile(m, ROW_TILE, 8)
    tn = _pick_tile(d_out, COL_TILE, 128)
    return pl.pallas_call(
        linear_kernel,
        out_shape=jax.ShapeDtypeStruct((m, d_out), out_dtype),
        grid=(m // tm, d_out // tn),
        in_specs=[
            pl.BlockSpec((tm, d_in), lambda i, j: (i, 0)),    # activations stream over M
            pl.BlockSpec((d_in, tn), lambda i, j: (0, j)),    # weight streams over N
            pl.BlockSpec((1, tn), lambda i, j: (0, j)),
        ],
        out_specs=pl.BlockSpec((tm, tn), lambda i, j: (i, j)),
        compiler_params=_compiler_params(("parallel", "parallel")),
    )(x2d, w, b)


def out_proj_add_ln(ctx2d, res2d, wo, bo, gamma, beta):
    m, d = res2d.shape
    tm = _pick_tile(m, ROW_TILE, 8)
    return pl.pallas_call(
        out_proj_add_ln_kernel,
        out_shape=jax.ShapeDtypeStruct((m, d), res2d.dtype),
        grid=(m // tm,),
        in_specs=[
            pl.BlockSpec((tm, d), lambda i: (i, 0)),          # attention context
            pl.BlockSpec((tm, d), lambda i: (i, 0)),          # residual
            _resident((d, d)),                                # Wo resident, single-buffered
            _resident((1, d)),
            _resident((1, d)),
            _resident((1, d)),
        ],
        out_specs=pl.BlockSpec((tm, d), lambda i: (i, 0)),
        compiler_params=_compiler_params(("parallel",)),
    )(ctx2d, res2d, wo, bo, gamma, beta)


def ffn_add_ln(x2d, w1, b1, w2, b2, gamma, beta):
    m, d = x2d.shape
    d_ff = w1.shape[1]
    tm = _pick_tile(m, FFN_ROW_TILE, 8)
    tk = _pick_tile(d_ff, COL_TILE, 128)
    return pl.pallas_call(
        ffn_add_ln_kernel,
        out_shape=jax.ShapeDtypeStruct((m, d), x2d.dtype),
        grid=(m // tm, d_ff // tk),
        in_specs=[
            pl.BlockSpec((tm, d), lambda i, k: (i, 0)),
            pl.BlockSpec((d, tk), lambda i, k: (0, k)),       # W1 streams over d_ff
            pl.BlockSpec((1, tk), lambda i, k: (0, k)),
            pl.BlockSpec((tk, d), lambda i, k: (k, 0)),       # W2 streams over d_ff
            _resident((1, d)),                                # b2
            _resident((1, d)),                                # gamma
            _resident((1, d)),                                # beta
        ],
        out_specs=pl.BlockSpec((tm, d), lambda i, k: (i, 0)),
        scratch_shapes=[pltpu.VMEM((tm, d), jnp.float32)],
        compiler_params=_compiler_params(("parallel", "arbitrary")),
    )(x2d, w1, b1, w2, b2, gamma, beta)


def attention(q, kv, mask, num_heads):
    b, sq, d_model = q.shape
    sk = kv.shape[1]
    scale = 1.0 / math.sqrt(d_model // num_heads)
    tq = _pick_tile(sq, Q_TILE, 8)
    kern = functools.partial(attention_kernel, num_heads=num_heads, scale=scale)
    return pl.pallas_call(
        kern,
        out_shape=jax.ShapeDtypeStruct((b, sq, d_model), MM_DTYPE),
        grid=(b, sq // tq),
        in_specs=[
            pl.BlockSpec((1, tq, d_model), lambda bi, qi: (bi, qi, 0)),
            pl.BlockSpec((1, sk, 2 * d_model), lambda bi, qi: (bi, 0, 0)),  # k|v, full seq
            pl.BlockSpec((1, tq, sk), lambda bi, qi: (bi, qi, 0)),
        ],
        out_specs=pl.BlockSpec((1, tq, d_model), lambda bi, qi: (bi, qi, 0)),
        compiler_params=_compiler_params(("parallel", "parallel")),
    )(q, kv, mask)


# ------------------------------------------------------------- module logic

def prepare_params(p):
    """Fuse K/V weights, pre-cast matmul weights to bf16, reshape 1-D params to (1, D)."""
    bf = lambda w: w.astype(MM_DTYPE)
    row = lambda v: v.reshape(1, -1).astype(jnp.float32)
    f = {}
    for pre in ("self_", "cross_"):
        f[pre + "Wq"] = bf(p[pre + "Wq"])
        f[pre + "bq"] = row(p[pre + "bq"])
        f[pre + "Wkv"] = bf(jnp.concatenate([p[pre + "Wk"], p[pre + "Wv"]], axis=1))
        f[pre + "bkv"] = row(jnp.concatenate([p[pre + "bk"], p[pre + "bv"]]))
        f[pre + "Wo"] = bf(p[pre + "Wo"])
        f[pre + "bo"] = row(p[pre + "bo"])
    f["ff_W1"] = bf(p["ff_W1"]); f["ff_b1"] = row(p["ff_b1"])
    f["ff_W2"] = bf(p["ff_W2"]); f["ff_b2"] = row(p["ff_b2"])
    for i in (1, 2, 3):
        f[f"ln{i}_g"] = row(p[f"ln{i}_g"])
        f[f"ln{i}_b"] = row(p[f"ln{i}_b"])
    return f


def decoder_layer_forward(x, enc_output, src_mask, tgt_mask, fp, num_heads):
    B, S, D = x.shape
    S_enc = enc_output.shape[1]
    x2d = x.reshape(B * S, D)
    enc2d = enc_output.reshape(B * S_enc, D)

    # ---- self attention + residual + norm1 (dropout == identity in eval) ----
    # TODO(synk): fuse the q / kv projections into the attention kernel when they fit in VMEM.
    q = linear(x2d, fp["self_Wq"], fp["self_bq"], MM_DTYPE)                  # (B*S, D)
    kv = linear(x2d, fp["self_Wkv"], fp["self_bkv"], MM_DTYPE)               # (B*S, 2D)
    ctx = attention(q.reshape(B, S, D), kv.reshape(B, S, 2 * D), tgt_mask, num_heads)
    x2d = out_proj_add_ln(ctx.reshape(B * S, D), x2d,
                          fp["self_Wo"], fp["self_bo"], fp["ln1_g"], fp["ln1_b"])

    # ---- cross attention + residual + norm2 ----
    q = linear(x2d, fp["cross_Wq"], fp["cross_bq"], MM_DTYPE)                # (B*S, D)
    kv = linear(enc2d, fp["cross_Wkv"], fp["cross_bkv"], MM_DTYPE)           # (B*S_enc, 2D)
    ctx = attention(q.reshape(B, S, D), kv.reshape(B, S_enc, 2 * D), src_mask, num_heads)
    x2d = out_proj_add_ln(ctx.reshape(B * S, D), x2d,
                          fp["cross_Wo"], fp["cross_bo"], fp["ln2_g"], fp["ln2_b"])

    # ---- feed forward + residual + norm3 ----
    x2d = ffn_add_ln(x2d, fp["ff_W1"], fp["ff_b1"], fp["ff_W2"], fp["ff_b2"],
                     fp["ln3_g"], fp["ln3_b"])
    return x2d.reshape(B, S, D)


# --------------------------------------------------------------- references

def _mm_ref(a, b, dt):
    return jnp.dot(a.astype(dt), b.astype(dt), preferred_element_type=jnp.float32)


def _ref_mha(x_q, x_kv, mask, p, prefix, num_heads, dt):
    B, Sq, D = x_q.shape
    Sk = x_kv.shape[1]
    dk = D // num_heads
    scale = 1.0 / math.sqrt(dk)
    q = (_mm_ref(x_q, p[prefix + "Wq"], dt) + p[prefix + "bq"]).astype(dt)
    k = (_mm_ref(x_kv, p[prefix + "Wk"], dt) + p[prefix + "bk"]).astype(dt)
    v = (_mm_ref(x_kv, p[prefix + "Wv"], dt) + p[prefix + "bv"]).astype(dt)
    q = q.reshape(B, Sq, num_heads, dk).transpose(0, 2, 1, 3)
    k = k.reshape(B, Sk, num_heads, dk).transpose(0, 2, 1, 3)
    v = v.reshape(B, Sk, num_heads, dk).transpose(0, 2, 1, 3)
    qs = (q.astype(jnp.float32) * scale).astype(dt)
    s = jnp.einsum("bhqd,bhkd->bhqk", qs, k, preferred_element_type=jnp.float32)
    s = jnp.where(mask[:, None, :, :] == 0.0, -1e9, s)
    a = jax.nn.softmax(s, axis=-1)
    o = jnp.einsum("bhqk,bhkd->bhqd", a.astype(dt), v, preferred_element_type=jnp.float32)
    o = o.transpose(0, 2, 1, 3).reshape(B, Sq, D)
    return _mm_ref(o, p[prefix + "Wo"], dt) + p[prefix + "bo"]


def reference_forward(x, enc_output, src_mask, tgt_mask, p, num_heads, dt=jnp.float32):
    a = _ref_mha(x, x, tgt_mask, p, "self_", num_heads, dt)
    x = _layernorm(x + a, p["ln1_g"], p["ln1_b"])
    a = _ref_mha(x, enc_output, src_mask, p, "cross_", num_heads, dt)
    x = _layernorm(x + a, p["ln2_g"], p["ln2_b"])
    h = jnp.maximum(_mm_ref(x, p["ff_W1"], dt) + p["ff_b1"], 0.0)
    ff = _mm_ref(h, p["ff_W2"], dt) + p["ff_b2"]
    return _layernorm(x + ff, p["ln3_g"], p["ln3_b"])


# -------------------------------------------------------------------- main

def init_params(key, d_model, d_ff):
    p = {}
    keys = jax.random.split(key, 16)
    ki = iter(keys)

    def w(k, shape, fan_in):
        return jax.random.normal(k, shape, jnp.float32) / math.sqrt(fan_in)

    for prefix in ("self_", "cross_"):
        for name in ("Wq", "Wk", "Wv", "Wo"):
            p[prefix + name] = w(next(ki), (d_model, d_model), d_model)
        for name in ("bq", "bk", "bv", "bo"):
            p[prefix + name] = jnp.zeros((d_model,), jnp.float32)

    p["ff_W1"] = w(next(ki), (d_model, d_ff), d_model)
    p["ff_b1"] = jnp.zeros((d_ff,), jnp.float32)
    p["ff_W2"] = w(next(ki), (d_ff, d_model), d_ff)
    p["ff_b2"] = jnp.zeros((d_model,), jnp.float32)

    for i in (1, 2, 3):
        p[f"ln{i}_g"] = jnp.ones((d_model,), jnp.float32)
        p[f"ln{i}_b"] = jnp.zeros((d_model,), jnp.float32)
    return p


if __name__ == "__main__":
    B, S_tgt, S_src = 2, 8, 8
    d_model, num_heads, d_ff = 32, 4, 64

    key = jax.random.PRNGKey(0)
    k_x, k_enc, k_p = jax.random.split(key, 3)

    x = jax.random.normal(k_x, (B, S_tgt, d_model), jnp.float32)
    enc_output = jax.random.normal(k_enc, (B, S_src, d_model), jnp.float32)

    # tgt_mask: causal; src_mask: all valid.  Pre-broadcast to (B, S_q, S_k), 1=keep / 0=mask.
    tgt_mask = jnp.broadcast_to(jnp.tril(jnp.ones((S_tgt, S_tgt), jnp.float32)),
                                (B, S_tgt, S_tgt))
    src_mask = jnp.ones((B, S_tgt, S_src), jnp.float32)

    params = init_params(k_p, d_model, d_ff)
    fparams = prepare_params(params)           # fused KV + bf16 weights (done once)

    forward = jax.jit(functools.partial(decoder_layer_forward, num_heads=num_heads))
    try:
        out = jax.block_until_ready(forward(x, enc_output, src_mask, tgt_mask, fparams))
    except Exception:
        # Fallback: some Pallas builds may reject single-buffered (Buffered(1)) resident
        # blocks; retrace with default double-buffering.
        _SINGLE_BUFFER_RESIDENT = False
        forward = jax.jit(functools.partial(decoder_layer_forward, num_heads=num_heads))
        out = jax.block_until_ready(forward(x, enc_output, src_mask, tgt_mask, fparams))

    # Reference at matched (bf16-matmul / f32-accumulate) precision: tight tolerance.
    ref_bf16 = reference_forward(x, enc_output, src_mask, tgt_mask, params, num_heads,
                                 dt=jnp.bfloat16)
    # Pure f32 reference: loose tolerance, sanity check that semantics are preserved.
    ref_f32 = reference_forward(x, enc_output, src_mask, tgt_mask, params, num_heads,
                                dt=jnp.float32)

    assert out.shape == (B, S_tgt, d_model)
    assert jnp.allclose(out, ref_bf16, atol=2e-2, rtol=2e-2), "mismatch vs bf16-matched reference"
    assert jnp.allclose(out, ref_f32, atol=1e-1, rtol=1e-1), "mismatch vs f32 reference"

    print("KERNEL_OK")
</pallas_src>

<mosaic_0001>
module attributes {stable_mosaic.version = 11 : i64} {
  func.func @linear_kernel(%arg0: i32, %arg1: i32, %arg2: memref<16x32xf32, #tpu.memory_space<vmem>>, %arg3: memref<32x32xbf16, #tpu.memory_space<vmem>>, %arg4: memref<1x32xf32, #tpu.memory_space<vmem>>, %arg5: memref<16x32xbf16, #tpu.memory_space<vmem>>) attributes {dimension_semantics = [#tpu.dimension_semantics<parallel>, #tpu.dimension_semantics<parallel>], iteration_bounds = array<i64: 1, 1>, scalar_prefetch = 0 : i64, scratch_operands = 0 : i64, tpu.core_type = #tpu.core_type<tc>, window_params = [{transform_indices = @transform_0, window_bounds = array<i64: 16, 32>}, {transform_indices = @transform_1, window_bounds = array<i64: 32, 32>}, {transform_indices = @transform_2, window_bounds = array<i64: 1, 32>}, {transform_indices = @transform_3, window_bounds = array<i64: 16, 32>}]} {
    %c0 = arith.constant 0 : index
    %c0_0 = arith.constant 0 : index
    %0 = vector.load %arg2[%c0, %c0_0] : memref<16x32xf32, #tpu.memory_space<vmem>>, vector<16x32xf32>
    %1 = arith.truncf %0 : vector<16x32xf32> to vector<16x32xbf16>
    %c0_1 = arith.constant 0 : index
    %c0_2 = arith.constant 0 : index
    %2 = vector.load %arg3[%c0_1, %c0_2] : memref<32x32xbf16, #tpu.memory_space<vmem>>, vector<32x32xbf16>
    %cst = arith.constant dense<0.000000e+00> : vector<16x32xf32>
    %3 = tpu.matmul %1, %2, %cst {dimension_numbers = #tpu.dot_dimension_numbers<[1], [0], [0], [1], [0, 0, 1, 1], [], []>} : vector<16x32xbf16>, vector<32x32xbf16>, vector<16x32xf32> -> vector<16x32xf32>
    %c0_3 = arith.constant 0 : index
    %c0_4 = arith.constant 0 : index
    %4 = vector.load %arg4[%c0_3, %c0_4] : memref<1x32xf32, #tpu.memory_space<vmem>>, vector<1x32xf32>
    %5 = vector.broadcast %4 : vector<1x32xf32> to vector<16x32xf32>
    %6 = arith.addf %3, %5 : vector<16x32xf32>
    %7 = arith.truncf %6 : vector<16x32xf32> to vector<16x32xbf16>
    %c0_5 = arith.constant 0 : index
    %c0_6 = arith.constant 0 : index
    %8 = vector.load %arg5[%c0_5, %c0_6] : memref<16x32xbf16, #tpu.memory_space<vmem>>, vector<16x32xbf16>
    tpu.vector_store %arg5[%c0_5, %c0_6], %7 {strides = array<i32>} : memref<16x32xbf16, #tpu.memory_space<vmem>>, vector<16x32xbf16>,
    return
  }
  func.func @transform_0(%arg0: i32, %arg1: i32) -> (i32, i32) {
    %c0_i32 = arith.constant 0 : i32
    %c0_i32_0 = arith.constant 0 : i32
    return %arg0, %c0_i32 : i32, i32
  }
  func.func @transform_1(%arg0: i32, %arg1: i32) -> (i32, i32) {
    %c0_i32 = arith.constant 0 : i32
    %c0_i32_0 = arith.constant 0 : i32
    return %c0_i32, %arg1 : i32, i32
  }
  func.func @transform_2(%arg0: i32, %arg1: i32) -> (i32, i32) {
    %c0_i32 = arith.constant 0 : i32
    %c0_i32_0 = arith.constant 0 : i32
    return %c0_i32, %arg1 : i32, i32
  }
  func.func @transform_3(%arg0: i32, %arg1: i32) -> (i32, i32) {
    %c0_i32 = arith.constant 0 : i32
    return %arg0, %arg1 : i32, i32
  }
}

module attributes {stable_mosaic.version = 11 : i64} {
  func.func @out_proj_add_ln_kernel(%arg0: i32, %arg1: memref<16x32xbf16, #tpu.memory_space<vmem>>, %arg2: memref<16x32xf32, #tpu.memory_space<vmem>>, %arg3: memref<32x32xbf16, #tpu.memory_space<vmem>>, %arg4: memref<1x32xf32, #tpu.memory_space<vmem>>, %arg5: memref<1x32xf32, #tpu.memory_space<vmem>>, %arg6: memref<1x32xf32, #tpu.memory_space<vmem>>, %arg7: memref<16x32xf32, #tpu.memory_space<vmem>>) attributes {dimension_semantics = [#tpu.dimension_semantics<parallel>], iteration_bounds = array<i64: 1>, scalar_prefetch = 0 : i64, scratch_operands = 0 : i64, tpu.core_type = #tpu.core_type<tc>, window_params = [{transform_indices = @transform_0, window_bounds = array<i64: 16, 32>}, {transform_indices = @transform_1, window_bounds = array<i64: 16, 32>}, {pipeline_mode = #tpu.pipeline_mode<synchronous>, transform_indices = @transform_2, window_bounds = array<i64: 32, 32>}, {pipeline_mode = #tpu.pipeline_mode<synchronous>, transform_indices = @transform_3, window_bounds = array<i64: 1, 32>}, {pipeline_mode = #tpu.pipeline_mode<synchronous>, transform_indices = @transform_4, window_bounds = array<i64: 1, 32>}, {pipeline_mode = #tpu.pipeline_mode<synchronous>, transform_indices = @transform_5, window_bounds = array<i64: 1, 32>}, {transform_indices = @transform_6, window_bounds = array<i64: 16, 32>}]} {
    %c0 = arith.constant 0 : index
    %c0_0 = arith.constant 0 : index
    %0 = vector.load %arg1[%c0, %c0_0] : memref<16x32xbf16, #tpu.memory_space<vmem>>, vector<16x32xbf16>
    %c0_1 = arith.constant 0 : index
    %c0_2 = arith.constant 0 : index
    %1 = vector.load %arg3[%c0_1, %c0_2] : memref<32x32xbf16, #tpu.memory_space<vmem>>, vector<32x32xbf16>
    %cst = arith.constant dense<0.000000e+00> : vector<16x32xf32>
    %2 = tpu.matmul %0, %1, %cst {dimension_numbers = #tpu.dot_dimension_numbers<[1], [0], [0], [1], [0, 0, 1, 1], [], []>} : vector<16x32xbf16>, vector<32x32xbf16>, vector<16x32xf32> -> vector<16x32xf32>
    %c0_3 = arith.constant 0 : index
    %c0_4 = arith.constant 0 : index
    %3 = vector.load %arg4[%c0_3, %c0_4] : memref<1x32xf32, #tpu.memory_space<vmem>>, vector<1x32xf32>
    %4 = vector.broadcast %3 : vector<1x32xf32> to vector<16x32xf32>
    %5 = arith.addf %2, %4 : vector<16x32xf32>
    %c0_5 = arith.constant 0 : index
    %c0_6 = arith.constant 0 : index
    %6 = vector.load %arg2[%c0_5, %c0_6] : memref<16x32xf32, #tpu.memory_space<vmem>>, vector<16x32xf32>
    %7 = arith.addf %6, %5 : vector<16x32xf32>
    %c0_7 = arith.constant 0 : index
    %c0_8 = arith.constant 0 : index
    %8 = vector.load %arg5[%c0_7, %c0_8] : memref<1x32xf32, #tpu.memory_space<vmem>>, vector<1x32xf32>
    %c0_9 = arith.constant 0 : index
    %c0_10 = arith.constant 0 : index
    %9 = vector.load %arg6[%c0_9, %c0_10] : memref<1x32xf32, #tpu.memory_space<vmem>>, vector<1x32xf32>
    %cst_11 = arith.constant dense<0.000000e+00> : vector<16xf32>
    %10 = vector.multi_reduction <add>, %7, %cst_11 [1] : vector<16x32xf32> to vector<16xf32>
    %11 = vector.shape_cast %10 : vector<16xf32> to vector<16x1xf32>
    %cst_12 = arith.constant 3.200000e+01 : f32
    %12 = vector.broadcast %cst_12 : f32 to vector<16x1xf32>
    %13 = arith.divf %11, %12 : vector<16x1xf32>
    %14 = vector.broadcast %13 : vector<16x1xf32> to vector<16x32xf32>
    %15 = arith.subf %7, %14 : vector<16x32xf32>
    %16 = arith.mulf %15, %15 : vector<16x32xf32>
    %cst_13 = arith.constant dense<0.000000e+00> : vector<16xf32>
    %17 = vector.multi_reduction <add>, %16, %cst_13 [1] : vector<16x32xf32> to vector<16xf32>
    %18 = vector.shape_cast %17 : vector<16xf32> to vector<16x1xf32>
    %cst_14 = arith.constant 3.200000e+01 : f32
    %19 = vector.broadcast %cst_14 : f32 to vector<16x1xf32>
    %20 = arith.divf %18, %19 : vector<16x1xf32>
    %21 = vector.broadcast %13 : vector<16x1xf32> to vector<16x32xf32>
    %22 = arith.subf %7, %21 : vector<16x32xf32>
    %cst_15 = arith.constant 9.99999974E-6 : f32
    %23 = vector.broadcast %cst_15 : f32 to vector<16x1xf32>
    %24 = arith.addf %20, %23 : vector<16x1xf32>
    %25 = math.rsqrt %24 : vector<16x1xf32>
    %26 = vector.broadcast %25 : vector<16x1xf32> to vector<16x32xf32>
    %27 = arith.mulf %22, %26 : vector<16x32xf32>
    %28 = vector.broadcast %8 : vector<1x32xf32> to vector<16x32xf32>
    %29 = arith.mulf %27, %28 : vector<16x32xf32>
    %30 = vector.broadcast %9 : vector<1x32xf32> to vector<16x32xf32>
    %31 = arith.addf %29, %30 : vector<16x32xf32>
    %c0_16 = arith.constant 0 : index
    %c0_17 = arith.constant 0 : index
    %32 = vector.load %arg7[%c0_16, %c0_17] : memref<16x32xf32, #tpu.memory_space<vmem>>, vector<16x32xf32>
    tpu.vector_store %arg7[%c0_16, %c0_17], %31 {strides = array<i32>} : memref<16x32xf32, #tpu.memory_space<vmem>>, vector<16x32xf32>,
    return
  }
  func.func @transform_0(%arg0: i32) -> (i32, i32) {
    %c0_i32 = arith.constant 0 : i32
    %c0_i32_0 = arith.constant 0 : i32
    return %arg0, %c0_i32 : i32, i32
  }
  func.func @transform_1(%arg0: i32) -> (i32, i32) {
    %c0_i32 = arith.constant 0 : i32
    %c0_i32_0 = arith.constant 0 : i32
    return %arg0, %c0_i32 : i32, i32
  }
  func.func @transform_2(%arg0: i32) -> (i32, i32) {
    %c0_i32 = arith.constant 0 : i32
    %c0_i32_0 = arith.constant 0 : i32
    %c0_i32_1 = arith.constant 0 : i32
    return %c0_i32, %c0_i32_0 : i32, i32
  }
  func.func @transform_3(%arg0: i32) -> (i32, i32) {
    %c0_i32 = arith.constant 0 : i32
    %c0_i32_0 = arith.constant 0 : i32
    %c0_i32_1 = arith.constant 0 : i32
    return %c0_i32, %c0_i32_0 : i32, i32
  }
  func.func @transform_4(%arg0: i32) -> (i32, i32) {
    %c0_i32 = arith.constant 0 : i32
    %c0_i32_0 = arith.constant 0 : i32
    %c0_i32_1 = arith.constant 0 : i32
    return %c0_i32, %c0_i32_0 : i32, i32
  }
  func.func @transform_5(%arg0: i32) -> (i32, i32) {
    %c0_i32 = arith.constant 0 : i32
    %c0_i32_0 = arith.constant 0 : i32
    %c0_i32_1 = arith.constant 0 : i32
    return %c0_i32, %c0_i32_0 : i32, i32
  }
  func.func @transform_6(%arg0: i32) -> (i32, i32) {
    %c0_i32 = arith.constant 0 : i32
    %c0_i32_0 = arith.constant 0 : i32
    return %arg0, %c0_i32 : i32, i32
  }
}

module attributes {stable_mosaic.version = 11 : i64} {
  func.func @linear_kernel(%arg0: i32, %arg1: i32, %arg2: memref<16x32xf32, #tpu.memory_space<vmem>>, %arg3: memref<32x64xbf16, #tpu.memory_space<vmem>>, %arg4: memref<1x64xf32, #tpu.memory_space<vmem>>, %arg5: memref<16x64xbf16, #tpu.memory_space<vmem>>) attributes {dimension_semantics = [#tpu.dimension_semantics<parallel>, #tpu.dimension_semantics<parallel>], iteration_bounds = array<i64: 1, 1>, scalar_prefetch = 0 : i64, scratch_operands = 0 : i64, tpu.core_type = #tpu.core_type<tc>, window_params = [{transform_indices = @transform_0, window_bounds = array<i64: 16, 32>}, {transform_indices = @transform_1, window_bounds = array<i64: 32, 64>}, {transform_indices = @transform_2, window_bounds = array<i64: 1, 64>}, {transform_indices = @transform_3, window_bounds = array<i64: 16, 64>}]} {
    %c0 = arith.constant 0 : index
    %c0_0 = arith.constant 0 : index
    %0 = vector.load %arg2[%c0, %c0_0] : memref<16x32xf32, #tpu.memory_space<vmem>>, vector<16x32xf32>
    %1 = arith.truncf %0 : vector<16x32xf32> to vector<16x32xbf16>
    %c0_1 = arith.constant 0 : index
    %c0_2 = arith.constant 0 : index
    %2 = vector.load %arg3[%c0_1, %c0_2] : memref<32x64xbf16, #tpu.memory_space<vmem>>, vector<32x64xbf16>
    %cst = arith.constant dense<0.000000e+00> : vector<16x64xf32>
    %3 = tpu.matmul %1, %2, %cst {dimension_numbers = #tpu.dot_dimension_numbers<[1], [0], [0], [1], [0, 0, 1, 1], [], []>} : vector<16x32xbf16>, vector<32x64xbf16>, vector<16x64xf32> -> vector<16x64xf32>
    %c0_3 = arith.constant 0 : index
    %c0_4 = arith.constant 0 : index
    %4 = vector.load %arg4[%c0_3, %c0_4] : memref<1x64xf32, #tpu.memory_space<vmem>>, vector<1x64xf32>
    %5 = vector.broadcast %4 : vector<1x64xf32> to vector<16x64xf32>
    %6 = arith.addf %3, %5 : vector<16x64xf32>
    %7 = arith.truncf %6 : vector<16x64xf32> to vector<16x64xbf16>
    %c0_5 = arith.constant 0 : index
    %c0_6 = arith.constant 0 : index
    %8 = vector.load %arg5[%c0_5, %c0_6] : memref<16x64xbf16, #tpu.memory_space<vmem>>, vector<16x64xbf16>
    tpu.vector_store %arg5[%c0_5, %c0_6], %7 {strides = array<i32>} : memref<16x64xbf16, #tpu.memory_space<vmem>>, vector<16x64xbf16>,
    return
  }
  func.func @transform_0(%arg0: i32, %arg1: i32) -> (i32, i32) {
    %c0_i32 = arith.constant 0 : i32
    %c0_i32_0 = arith.constant 0 : i32
    return %arg0, %c0_i32 : i32, i32
  }
  func.func @transform_1(%arg0: i32, %arg1: i32) -> (i32, i32) {
    %c0_i32 = arith.constant 0 : i32
    %c0_i32_0 = arith.constant 0 : i32
    return %c0_i32, %arg1 : i32, i32
  }
  func.func @transform_2(%arg0: i32, %arg1: i32) -> (i32, i32) {
    %c0_i32 = arith.constant 0 : i32
    %c0_i32_0 = arith.constant 0 : i32
    return %c0_i32, %arg1 : i32, i32
  }
  func.func @transform_3(%arg0: i32, %arg1: i32) -> (i32, i32) {
    %c0_i32 = arith.constant 0 : i32
    return %arg0, %arg1 : i32, i32
  }
}

module attributes {stable_mosaic.version = 11 : i64} {
  func.func @attention_kernel(%arg0: i32, %arg1: i32, %arg2: memref<1x8x32xbf16, #tpu.memory_space<vmem>>, %arg3: memref<1x8x64xbf16, #tpu.memory_space<vmem>>, %arg4: memref<1x8x8xf32, #tpu.memory_space<vmem>>, %arg5: memref<1x8x32xbf16, #tpu.memory_space<vmem>>) attributes {dimension_semantics = [#tpu.dimension_semantics<parallel>, #tpu.dimension_semantics<parallel>], iteration_bounds = array<i64: 2, 1>, scalar_prefetch = 0 : i64, scratch_operands = 0 : i64, tpu.core_type = #tpu.core_type<tc>, window_params = [{transform_indices = @transform_0, window_bounds = array<i64: 1, 8, 32>}, {transform_indices = @transform_1, window_bounds = array<i64: 1, 8, 64>}, {transform_indices = @transform_2, window_bounds = array<i64: 1, 8, 8>}, {transform_indices = @transform_3, window_bounds = array<i64: 1, 8, 32>}]} {
    %c0 = arith.constant 0 : index
    %c0_0 = arith.constant 0 : index
    %c0_1 = arith.constant 0 : index
    %0 = vector.load %arg2[%c0, %c0_0, %c0_1] : memref<1x8x32xbf16, #tpu.memory_space<vmem>>, vector<1x8x32xbf16>
    %1 = vector.shape_cast %0 : vector<1x8x32xbf16> to vector<8x32xbf16>
    %c0_2 = arith.constant 0 : index
    %c0_3 = arith.constant 0 : index
    %c0_4 = arith.constant 0 : index
    %2 = vector.load %arg3[%c0_2, %c0_3, %c0_4] : memref<1x8x64xbf16, #tpu.memory_space<vmem>>, vector<1x8x64xbf16>
    %3 = vector.shape_cast %2 : vector<1x8x64xbf16> to vector<8x64xbf16>
    %c0_5 = arith.constant 0 : index
    %c0_6 = arith.constant 0 : index
    %c0_7 = arith.constant 0 : index
    %4 = vector.load %arg4[%c0_5, %c0_6, %c0_7] : memref<1x8x8xf32, #tpu.memory_space<vmem>>, vector<1x8x8xf32>
    %5 = vector.shape_cast %4 : vector<1x8x8xf32> to vector<8x8xf32>
    %cst = arith.constant 0.000000e+00 : f32
    %6 = vector.broadcast %cst : f32 to vector<8x8xf32>
    %7 = arith.cmpf oeq, %5, %6 : vector<8x8xf32>
    %cst_8 = arith.constant -1.000000e+09 : f32
    %cst_9 = arith.constant 0.000000e+00 : f32
    %8 = vector.broadcast %cst_8 : f32 to vector<8x8xf32>
    %9 = vector.broadcast %cst_9 : f32 to vector<8x8xf32>
    %10 = arith.select %7, %8, %9 : vector<8x8xi1>, vector<8x8xf32>
    %11 = vector.extract_strided_slice %1 {offsets = [0, 0], sizes = [8, 8], strides = [1, 1]} : vector<8x32xbf16> to vector<8x8xbf16>
    %12 = arith.extf %11 : vector<8x8xbf16> to vector<8x8xf32>
    %cst_10 = arith.constant 0.353553385 : f32
    %13 = vector.broadcast %cst_10 : f32 to vector<8x8xf32>
    %14 = arith.mulf %12, %13 : vector<8x8xf32>
    %15 = arith.truncf %14 : vector<8x8xf32> to vector<8x8xbf16>
    %16 = vector.extract_strided_slice %3 {offsets = [0, 0], sizes = [8, 8], strides = [1, 1]} : vector<8x64xbf16> to vector<8x8xbf16>
    %17 = vector.extract_strided_slice %3 {offsets = [0, 32], sizes = [8, 8], strides = [1, 1]} : vector<8x64xbf16> to vector<8x8xbf16>
    %cst_11 = arith.constant dense<0.000000e+00> : vector<8x8xf32>
    %18 = tpu.matmul %15, %16, %cst_11 {dimension_numbers = #tpu.dot_dimension_numbers<[1], [1], [0], [0], [0, 0, 1, 0], [], []>} : vector<8x8xbf16>, vector<8x8xbf16>, vector<8x8xf32> -> vector<8x8xf32>
    %19 = arith.addf %18, %10 : vector<8x8xf32>
    %cst_12 = arith.constant dense<0xFF800000> : vector<8xf32>
    %20 = vector.multi_reduction <maximumf>, %19, %cst_12 [1] : vector<8x8xf32> to vector<8xf32>
    %21 = vector.shape_cast %20 : vector<8xf32> to vector<8x1xf32>
    %22 = vector.broadcast %21 : vector<8x1xf32> to vector<8x8xf32>
    %23 = arith.subf %19, %22 : vector<8x8xf32>
    %24 = math.exp %23 : vector<8x8xf32>
    %cst_13 = arith.constant dense<0.000000e+00> : vector<8xf32>
    %25 = vector.multi_reduction <add>, %24, %cst_13 [1] : vector<8x8xf32> to vector<8xf32>
    %26 = vector.shape_cast %25 : vector<8xf32> to vector<8x1xf32>
    %27 = tpu.reciprocal %26 {approx = true} : vector<8x1xf32> -> vector<8x1xf32>
    %28 = arith.truncf %24 : vector<8x8xf32> to vector<8x8xbf16>
    %cst_14 = arith.constant dense<0.000000e+00> : vector<8x8xf32>
    %29 = tpu.matmul %28, %17, %cst_14 {dimension_numbers = #tpu.dot_dimension_numbers<[1], [0], [0], [1], [0, 0, 1, 1], [], []>} : vector<8x8xbf16>, vector<8x8xbf16>, vector<8x8xf32> -> vector<8x8xf32>
    %30 = vector.broadcast %27 : vector<8x1xf32> to vector<8x8xf32>
    %31 = arith.mulf %29, %30 : vector<8x8xf32>
    %32 = arith.truncf %31 : vector<8x8xf32> to vector<8x8xbf16>
    %c0_15 = arith.constant 0 : index
    %c0_16 = arith.constant 0 : index
    %c0_17 = arith.constant 0 : index
    %33 = vector.load %arg5[%c0_15, %c0_16, %c0_17] : memref<1x8x32xbf16, #tpu.memory_space<vmem>>, vector<1x8x8xbf16>
    %34 = vector.shape_cast %33 : vector<1x8x8xbf16> to vector<8x8xbf16>
    %35 = vector.shape_cast %32 : vector<8x8xbf16> to vector<1x8x8xbf16>
    tpu.vector_store %arg5[%c0_15, %c0_16, %c0_17], %35 {strides = array<i32>} : memref<1x8x32xbf16, #tpu.memory_space<vmem>>, vector<1x8x8xbf16>,
    %36 = vector.extract_strided_slice %1 {offsets = [0, 8], sizes = [8, 8], strides = [1, 1]} : vector<8x32xbf16> to vector<8x8xbf16>
    %37 = arith.extf %36 : vector<8x8xbf16> to vector<8x8xf32>
    %cst_18 = arith.constant 0.353553385 : f32
    %38 = vector.broadcast %cst_18 : f32 to vector<8x8xf32>
    %39 = arith.mulf %37, %38 : vector<8x8xf32>
    %40 = arith.truncf %39 : vector<8x8xf32> to vector<8x8xbf16>
    %41 = vector.extract_strided_slice %3 {offsets = [0, 8], sizes = [8, 8], strides = [1, 1]} : vector<8x64xbf16> to vector<8x8xbf16>
    %42 = vector.extract_strided_slice %3 {offsets = [0, 40], sizes = [8, 8], strides = [1, 1]} : vector<8x64xbf16> to vector<8x8xbf16>
    %cst_19 = arith.constant dense<0.000000e+00> : vector<8x8xf32>
    %43 = tpu.matmul %40, %41, %cst_19 {dimension_numbers = #tpu.dot_dimension_numbers<[1], [1], [0], [0], [0, 0, 1, 0], [], []>} : vector<8x8xbf16>, vector<8x8xbf16>, vector<8x8xf32> -> vector<8x8xf32>
    %44 = arith.addf %43, %10 : vector<8x8xf32>
    %cst_20 = arith.constant dense<0xFF800000> : vector<8xf32>
    %45 = vector.multi_reduction <maximumf>, %44, %cst_20 [1] : vector<8x8xf32> to vector<8xf32>
    %46 = vector.shape_cast %45 : vector<8xf32> to vector<8x1xf32>
    %47 = vector.broadcast %46 : vector<8x1xf32> to vector<8x8xf32>
    %48 = arith.subf %44, %47 : vector<8x8xf32>
    %49 = math.exp %48 : vector<8x8xf32>
    %cst_21 = arith.constant dense<0.000000e+00> : vector<8xf32>
    %50 = vector.multi_reduction <add>, %49, %cst_21 [1] : vector<8x8xf32> to vector<8xf32>
    %51 = vector.shape_cast %50 : vector<8xf32> to vector<8x1xf32>
    %52 = tpu.reciprocal %51 {approx = true} : vector<8x1xf32> -> vector<8x1xf32>
    %53 = arith.truncf %49 : vector<8x8xf32> to vector<8x8xbf16>
    %cst_22 = arith.constant dense<0.000000e+00> : vector<8x8xf32>
    %54 = tpu.matmul %53, %42, %cst_22 {dimension_numbers = #tpu.dot_dimension_numbers<[1], [0], [0], [1], [0, 0, 1, 1], [], []>} : vector<8x8xbf16>, vector<8x8xbf16>, vector<8x8xf32> -> vector<8x8xf32>
    %55 = vector.broadcast %52 : vector<8x1xf32> to vector<8x8xf32>
    %56 = arith.mulf %54, %55 : vector<8x8xf32>
    %57 = arith.truncf %56 : vector<8x8xf32> to vector<8x8xbf16>
    %c0_23 = arith.constant 0 : index
    %c0_24 = arith.constant 0 : index
    %c8 = arith.constant 8 : index
    %58 = vector.load %arg5[%c0_23, %c0_24, %c8] : memref<1x8x32xbf16, #tpu.memory_space<vmem>>, vector<1x8x8xbf16>
    %59 = vector.shape_cast %58 : vector<1x8x8xbf16> to vector<8x8xbf16>
    %60 = vector.shape_cast %57 : vector<8x8xbf16> to vector<1x8x8xbf16>
    tpu.vector_store %arg5[%c0_23, %c0_24, %c8], %60 {strides = array<i32>} : memref<1x8x32xbf16, #tpu.memory_space<vmem>>, vector<1x8x8xbf16>,
    %61 = vector.extract_strided_slice %1 {offsets = [0, 16], sizes = [8, 8], strides = [1, 1]} : vector<8x32xbf16> to vector<8x8xbf16>
    %62 = arith.extf %61 : vector<8x8xbf16> to vector<8x8xf32>
    %cst_25 = arith.constant 0.353553385 : f32
    %63 = vector.broadcast %cst_25 : f32 to vector<8x8xf32>
    %64 = arith.mulf %62, %63 : vector<8x8xf32>
    %65 = arith.truncf %64 : vector<8x8xf32> to vector<8x8xbf16>
    %66 = vector.extract_strided_slice %3 {offsets = [0, 16], sizes = [8, 8], strides = [1, 1]} : vector<8x64xbf16> to vector<8x8xbf16>
    %67 = vector.extract_strided_slice %3 {offsets = [0, 48], sizes = [8, 8], strides = [1, 1]} : vector<8x64xbf16> to vector<8x8xbf16>
    %cst_26 = arith.constant dense<0.000000e+00> : vector<8x8xf32>
    %68 = tpu.matmul %65, %66, %cst_26 {dimension_numbers = #tpu.dot_dimension_numbers<[1], [1], [0], [0], [0, 0, 1, 0], [], []>} : vector<8x8xbf16>, vector<8x8xbf16>, vector<8x8xf32> -> vector<8x8xf32>
    %69 = arith.addf %68, %10 : vector<8x8xf32>
    %cst_27 = arith.constant dense<0xFF800000> : vector<8xf32>
    %70 = vector.multi_reduction <maximumf>, %69, %cst_27 [1] : vector<8x8xf32> to vector<8xf32>
    %71 = vector.shape_cast %70 : vector<8xf32> to vector<8x1xf32>
    %72 = vector.broadcast %71 : vector<8x1xf32> to vector<8x8xf32>
    %73 = arith.subf %69, %72 : vector<8x8xf32>
    %74 = math.exp %73 : vector<8x8xf32>
    %cst_28 = arith.constant dense<0.000000e+00> : vector<8xf32>
    %75 = vector.multi_reduction <add>, %74, %cst_28 [1] : vector<8x8xf32> to vector<8xf32>
    %76 = vector.shape_cast %75 : vector<8xf32> to vector<8x1xf32>
    %77 = tpu.reciprocal %76 {approx = true} : vector<8x1xf32> -> vector<8x1xf32>
    %78 = arith.truncf %74 : vector<8x8xf32> to vector<8x8xbf16>
    %cst_29 = arith.constant dense<0.000000e+00> : vector<8x8xf32>
    %79 = tpu.matmul %78, %67, %cst_29 {dimension_numbers = #tpu.dot_dimension_numbers<[1], [0], [0], [1], [0, 0, 1, 1], [], []>} : vector<8x8xbf16>, vector<8x8xbf16>, vector<8x8xf32> -> vector<8x8xf32>
    %80 = vector.broadcast %77 : vector<8x1xf32> to vector<8x8xf32>
    %81 = arith.mulf %79, %80 : vector<8x8xf32>
    %82 = arith.truncf %81 : vector<8x8xf32> to vector<8x8xbf16>
    %c0_30 = arith.constant 0 : index
    %c0_31 = arith.constant 0 : index
    %c16 = arith.constant 16 : index
    %83 = vector.load %arg5[%c0_30, %c0_31, %c16] : memref<1x8x32xbf16, #tpu.memory_space<vmem>>, vector<1x8x8xbf16>
    %84 = vector.shape_cast %83 : vector<1x8x8xbf16> to vector<8x8xbf16>
    %85 = vector.shape_cast %82 : vector<8x8xbf16> to vector<1x8x8xbf16>
    tpu.vector_store %arg5[%c0_30, %c0_31, %c16], %85 {strides = array<i32>} : memref<1x8x32xbf16, #tpu.memory_space<vmem>>, vector<1x8x8xbf16>,
    %86 = vector.extract_strided_slice %1 {offsets = [0, 24], sizes = [8, 8], strides = [1, 1]} : vector<8x32xbf16> to vector<8x8xbf16>
    %87 = arith.extf %86 : vector<8x8xbf16> to vector<8x8xf32>
    %cst_32 = arith.constant 0.353553385 : f32
    %88 = vector.broadcast %cst_32 : f32 to vector<8x8xf32>
    %89 = arith.mulf %87, %88 : vector<8x8xf32>
    %90 = arith.truncf %89 : vector<8x8xf32> to vector<8x8xbf16>
    %91 = vector.extract_strided_slice %3 {offsets = [0, 24], sizes = [8, 8], strides = [1, 1]} : vector<8x64xbf16> to vector<8x8xbf16>
    %92 = vector.extract_strided_slice %3 {offsets = [0, 56], sizes = [8, 8], strides = [1, 1]} : vector<8x64xbf16> to vector<8x8xbf16>
    %cst_33 = arith.constant dense<0.000000e+00> : vector<8x8xf32>
    %93 = tpu.matmul %90, %91, %cst_33 {dimension_numbers = #tpu.dot_dimension_numbers<[1], [1], [0], [0], [0, 0, 1, 0], [], []>} : vector<8x8xbf16>, vector<8x8xbf16>, vector<8x8xf32> -> vector<8x8xf32>
    %94 = arith.addf %93, %10 : vector<8x8xf32>
    %cst_34 = arith.constant dense<0xFF800000> : vector<8xf32>
    %95 = vector.multi_reduction <maximumf>, %94, %cst_34 [1] : vector<8x8xf32> to vector<8xf32>
    %96 = vector.shape_cast %95 : vector<8xf32> to vector<8x1xf32>
    %97 = vector.broadcast %96 : vector<8x1xf32> to vector<8x8xf32>
    %98 = arith.subf %94, %97 : vector<8x8xf32>
    %99 = math.exp %98 : vector<8x8xf32>
    %cst_35 = arith.constant dense<0.000000e+00> : vector<8xf32>
    %100 = vector.multi_reduction <add>, %99, %cst_35 [1] : vector<8x8xf32> to vector<8xf32>
    %101 = vector.shape_cast %100 : vector<8xf32> to vector<8x1xf32>
    %102 = tpu.reciprocal %101 {approx = true} : vector<8x1xf32> -> vector<8x1xf32>
    %103 = arith.truncf %99 : vector<8x8xf32> to vector<8x8xbf16>
    %cst_36 = arith.constant dense<0.000000e+00> : vector<8x8xf32>
    %104 = tpu.matmul %103, %92, %cst_36 {dimension_numbers = #tpu.dot_dimension_numbers<[1], [0], [0], [1], [0, 0, 1, 1], [], []>} : vector<8x8xbf16>, vector<8x8xbf16>, vector<8x8xf32> -> vector<8x8xf32>
    %105 = vector.broadcast %102 : vector<8x1xf32> to vector<8x8xf32>
    %106 = arith.mulf %104, %105 : vector<8x8xf32>
    %107 = arith.truncf %106 : vector<8x8xf32> to vector<8x8xbf16>
    %c0_37 = arith.constant 0 : index
    %c0_38 = arith.constant 0 : index
    %c24 = arith.constant 24 : index
    %108 = vector.load %arg5[%c0_37, %c0_38, %c24] : memref<1x8x32xbf16, #tpu.memory_space<vmem>>, vector<1x8x8xbf16>
    %109 = vector.shape_cast %108 : vector<1x8x8xbf16> to vector<8x8xbf16>
    %110 = vector.shape_cast %107 : vector<8x8xbf16> to vector<1x8x8xbf16>
    tpu.vector_store %arg5[%c0_37, %c0_38, %c24], %110 {strides = array<i32>} : memref<1x8x32xbf16, #tpu.memory_space<vmem>>, vector<1x8x8xbf16>,
    return
  }
  func.func @transform_0(%arg0: i32, %arg1: i32) -> (i32, i32, i32) {
    %c0_i32 = arith.constant 0 : i32
    %c0_i32_0 = arith.constant 0 : i32
    return %arg0, %arg1, %c0_i32 : i32, i32, i32
  }
  func.func @transform_1(%arg0: i32, %arg1: i32) -> (i32, i32, i32) {
    %c0_i32 = arith.constant 0 : i32
    %c0_i32_0 = arith.constant 0 : i32
    %c0_i32_1 = arith.constant 0 : i32
    return %arg0, %c0_i32, %c0_i32_0 : i32, i32, i32
  }
  func.func @transform_2(%arg0: i32, %arg1: i32) -> (i32, i32, i32) {
    %c0_i32 = arith.constant 0 : i32
    %c0_i32_0 = arith.constant 0 : i32
    return %arg0, %arg1, %c0_i32 : i32, i32, i32
  }
  func.func @transform_3(%arg0: i32, %arg1: i32) -> (i32, i32, i32) {
    %c0_i32 = arith.constant 0 : i32
    %c0_i32_0 = arith.constant 0 : i32
    return %arg0, %arg1, %c0_i32 : i32, i32, i32
  }
}

module attributes {stable_mosaic.version = 11 : i64} {
  func.func @linear_kernel(%arg0: i32, %arg1: i32, %arg2: memref<16x32xf32, #tpu.memory_space<vmem>>, %arg3: memref<32x64xbf16, #tpu.memory_space<vmem>>, %arg4: memref<1x64xf32, #tpu.memory_space<vmem>>, %arg5: memref<16x64xbf16, #tpu.memory_space<vmem>>) attributes {dimension_semantics = [#tpu.dimension_semantics<parallel>, #tpu.dimension_semantics<parallel>], iteration_bounds = array<i64: 1, 1>, scalar_prefetch = 0 : i64, scratch_operands = 0 : i64, tpu.core_type = #tpu.core_type<tc>, window_params = [{transform_indices = @transform_0, window_bounds = array<i64: 16, 32>}, {transform_indices = @transform_1, window_bounds = array<i64: 32, 64>}, {transform_indices = @transform_2, window_bounds = array<i64: 1, 64>}, {transform_indices = @transform_3, window_bounds = array<i64: 16, 64>}]} {
    %c0 = arith.constant 0 : index
    %c0_0 = arith.constant 0 : index
    %0 = vector.load %arg2[%c0, %c0_0] : memref<16x32xf32, #tpu.memory_space<vmem>>, vector<16x32xf32>
    %1 = arith.truncf %0 : vector<16x32xf32> to vector<16x32xbf16>
    %c0_1 = arith.constant 0 : index
    %c0_2 = arith.constant 0 : index
    %2 = vector.load %arg3[%c0_1, %c0_2] : memref<32x64xbf16, #tpu.memory_space<vmem>>, vector<32x64xbf16>
    %cst = arith.constant dense<0.000000e+00> : vector<16x64xf32>
    %3 = tpu.matmul %1, %2, %cst {dimension_numbers = #tpu.dot_dimension_numbers<[1], [0], [0], [1], [0, 0, 1, 1], [], []>} : vector<16x32xbf16>, vector<32x64xbf16>, vector<16x64xf32> -> vector<16x64xf32>
    %c0_3 = arith.constant 0 : index
    %c0_4 = arith.constant 0 : index
    %4 = vector.load %arg4[%c0_3, %c0_4] : memref<1x64xf32, #tpu.memory_space<vmem>>, vector<1x64xf32>
    %5 = vector.broadcast %4 : vector<1x64xf32> to vector<16x64xf32>
    %6 = arith.addf %3, %5 : vector<16x64xf32>
    %7 = arith.truncf %6 : vector<16x64xf32> to vector<16x64xbf16>
    %c0_5 = arith.constant 0 : index
    %c0_6 = arith.constant 0 : index
    %8 = vector.load %arg5[%c0_5, %c0_6] : memref<16x64xbf16, #tpu.memory_space<vmem>>, vector<16x64xbf16>
    tpu.vector_store %arg5[%c0_5, %c0_6], %7 {strides = array<i32>} : memref<16x64xbf16, #tpu.memory_space<vmem>>, vector<16x64xbf16>,
    return
  }
  func.func @transform_0(%arg0: i32, %arg1: i32) -> (i32, i32) {
    %c0_i32 = arith.constant 0 : i32
    %c0_i32_0 = arith.constant 0 : i32
    return %arg0, %c0_i32 : i32, i32
  }
  func.func @transform_1(%arg0: i32, %arg1: i32) -> (i32, i32) {
    %c0_i32 = arith.constant 0 : i32
    %c0_i32_0 = arith.constant 0 : i32
    return %c0_i32, %arg1 : i32, i32
  }
  func.func @transform_2(%arg0: i32, %arg1: i32) -> (i32, i32) {
    %c0_i32 = arith.constant 0 : i32
    %c0_i32_0 = arith.constant 0 : i32
    return %c0_i32, %arg1 : i32, i32
  }
  func.func @transform_3(%arg0: i32, %arg1: i32) -> (i32, i32) {
    %c0_i32 = arith.constant 0 : i32
    return %arg0, %arg1 : i32, i32
  }
}

module attributes {stable_mosaic.version = 11 : i64} {
  func.func @ffn_add_ln_kernel(%arg0: i32, %arg1: i32, %arg2: memref<16x32xf32, #tpu.memory_space<vmem>>, %arg3: memref<32x64xbf16, #tpu.memory_space<vmem>>, %arg4: memref<1x64xf32, #tpu.memory_space<vmem>>, %arg5: memref<64x32xbf16, #tpu.memory_space<vmem>>, %arg6: memref<1x32xf32, #tpu.memory_space<vmem>>, %arg7: memref<1x32xf32, #tpu.memory_space<vmem>>, %arg8: memref<1x32xf32, #tpu.memory_space<vmem>>, %arg9: memref<16x32xf32, #tpu.memory_space<vmem>>, %arg10: memref<16x32xf32, #tpu.memory_space<vmem>>) attributes {dimension_semantics = [#tpu.dimension_semantics<parallel>, #tpu.dimension_semantics<arbitrary>], iteration_bounds = array<i64: 1, 1>, scalar_prefetch = 0 : i64, scratch_operands = 1 : i64, tpu.core_type = #tpu.core_type<tc>, window_params = [{transform_indices = @transform_0, window_bounds = array<i64: 16, 32>}, {transform_indices = @transform_1, window_bounds = array<i64: 32, 64>}, {transform_indices = @transform_2, window_bounds = array<i64: 1, 64>}, {transform_indices = @transform_3, window_bounds = array<i64: 64, 32>}, {pipeline_mode = #tpu.pipeline_mode<synchronous>, transform_indices = @transform_4, window_bounds = array<i64: 1, 32>}, {pipeline_mode = #tpu.pipeline_mode<synchronous>, transform_indices = @transform_5, window_bounds = array<i64: 1, 32>}, {pipeline_mode = #tpu.pipeline_mode<synchronous>, transform_indices = @transform_6, window_bounds = array<i64: 1, 32>}, {transform_indices = @transform_7, window_bounds = array<i64: 16, 32>}]} {
    %c0_i32 = arith.constant 0 : i32
    %0 = arith.cmpi eq, %arg1, %c0_i32 : i32
    %1 = arith.extui %0 : i1 to i32
    %c0_i32_0 = arith.constant 0 : i32
    %2 = arith.cmpi ne, %1, %c0_i32_0 : i32
    scf.if %2 {
      %cst_16 = arith.constant 0.000000e+00 : f32
      %21 = vector.broadcast %cst_16 : f32 to vector<16x32xf32>
      %c0_17 = arith.constant 0 : index
      %c0_18 = arith.constant 0 : index
      %22 = vector.load %arg10[%c0_17, %c0_18] : memref<16x32xf32, #tpu.memory_space<vmem>>, vector<16x32xf32>
      tpu.vector_store %arg10[%c0_17, %c0_18], %21 {strides = array<i32>} : memref<16x32xf32, #tpu.memory_space<vmem>>, vector<16x32xf32>,
    } else {
    }
    %c0 = arith.constant 0 : index
    %c0_1 = arith.constant 0 : index
    %3 = vector.load %arg2[%c0, %c0_1] : memref<16x32xf32, #tpu.memory_space<vmem>>, vector<16x32xf32>
    %4 = arith.truncf %3 : vector<16x32xf32> to vector<16x32xbf16>
    %c0_2 = arith.constant 0 : index
    %c0_3 = arith.constant 0 : index
    %5 = vector.load %arg3[%c0_2, %c0_3] : memref<32x64xbf16, #tpu.memory_space<vmem>>, vector<32x64xbf16>
    %cst = arith.constant dense<0.000000e+00> : vector<16x64xf32>
    %6 = tpu.matmul %4, %5, %cst {dimension_numbers = #tpu.dot_dimension_numbers<[1], [0], [0], [1], [0, 0, 1, 1], [], []>} : vector<16x32xbf16>, vector<32x64xbf16>, vector<16x64xf32> -> vector<16x64xf32>
    %c0_4 = arith.constant 0 : index
    %c0_5 = arith.constant 0 : index
    %7 = vector.load %arg4[%c0_4, %c0_5] : memref<1x64xf32, #tpu.memory_space<vmem>>, vector<1x64xf32>
    %8 = vector.broadcast %7 : vector<1x64xf32> to vector<16x64xf32>
    %9 = arith.addf %6, %8 : vector<16x64xf32>
    %cst_6 = arith.constant 0.000000e+00 : f32
    %10 = vector.broadcast %cst_6 : f32 to vector<16x64xf32>
    %11 = arith.maximumf %9, %10 : vector<16x64xf32>
    %c0_7 = arith.constant 0 : index
    %c0_8 = arith.constant 0 : index
    %12 = vector.load %arg10[%c0_7, %c0_8] : memref<16x32xf32, #tpu.memory_space<vmem>>, vector<16x32xf32>
    %13 = arith.truncf %11 : vector<16x64xf32> to vector<16x64xbf16>
    %c0_9 = arith.constant 0 : index
    %c0_10 = arith.constant 0 : index
    %14 = vector.load %arg5[%c0_9, %c0_10] : memref<64x32xbf16, #tpu.memory_space<vmem>>, vector<64x32xbf16>
    %cst_11 = arith.constant dense<0.000000e+00> : vector<16x32xf32>
    %15 = tpu.matmul %13, %14, %cst_11 {dimension_numbers = #tpu.dot_dimension_numbers<[1], [0], [0], [1], [0, 0, 1, 1], [], []>} : vector<16x64xbf16>, vector<64x32xbf16>, vector<16x32xf32> -> vector<16x32xf32>
    %16 = arith.addf %12, %15 : vector<16x32xf32>
    %c0_12 = arith.constant 0 : index
    %c0_13 = arith.constant 0 : index
    %17 = vector.load %arg10[%c0_12, %c0_13] : memref<16x32xf32, #tpu.memory_space<vmem>>, vector<16x32xf32>
    tpu.vector_store %arg10[%c0_12, %c0_13], %16 {strides = array<i32>} : memref<16x32xf32, #tpu.memory_space<vmem>>, vector<16x32xf32>,
    %c0_i32_14 = arith.constant 0 : i32
    %18 = arith.cmpi eq, %arg1, %c0_i32_14 : i32
    %19 = arith.extui %18 : i1 to i32
    %c0_i32_15 = arith.constant 0 : i32
    %20 = arith.cmpi ne, %19, %c0_i32_15 : i32
    scf.if %20 {
      %c0_16 = arith.constant 0 : index
      %c0_17 = arith.constant 0 : index
      %21 = vector.load %arg2[%c0_16, %c0_17] : memref<16x32xf32, #tpu.memory_space<vmem>>, vector<16x32xf32>
      %c0_18 = arith.constant 0 : index
      %c0_19 = arith.constant 0 : index
      %22 = vector.load %arg10[%c0_18, %c0_19] : memref<16x32xf32, #tpu.memory_space<vmem>>, vector<16x32xf32>
      %23 = arith.addf %21, %22 : vector<16x32xf32>
      %c0_20 = arith.constant 0 : index
      %c0_21 = arith.constant 0 : index
      %24 = vector.load %arg6[%c0_20, %c0_21] : memref<1x32xf32, #tpu.memory_space<vmem>>, vector<1x32xf32>
      %25 = vector.broadcast %24 : vector<1x32xf32> to vector<16x32xf32>
      %26 = arith.addf %23, %25 : vector<16x32xf32>
      %c0_22 = arith.constant 0 : index
      %c0_23 = arith.constant 0 : index
      %27 = vector.load %arg7[%c0_22, %c0_23] : memref<1x32xf32, #tpu.memory_space<vmem>>, vector<1x32xf32>
      %c0_24 = arith.constant 0 : index
      %c0_25 = arith.constant 0 : index
      %28 = vector.load %arg8[%c0_24, %c0_25] : memref<1x32xf32, #tpu.memory_space<vmem>>, vector<1x32xf32>
      %cst_26 = arith.constant dense<0.000000e+00> : vector<16xf32>
      %29 = vector.multi_reduction <add>, %26, %cst_26 [1] : vector<16x32xf32> to vector<16xf32>
      %30 = vector.shape_cast %29 : vector<16xf32> to vector<16x1xf32>
      %cst_27 = arith.constant 3.200000e+01 : f32
      %31 = vector.broadcast %cst_27 : f32 to vector<16x1xf32>
      %32 = arith.divf %30, %31 : vector<16x1xf32>
      %33 = vector.broadcast %32 : vector<16x1xf32> to vector<16x32xf32>
      %34 = arith.subf %26, %33 : vector<16x32xf32>
      %35 = arith.mulf %34, %34 : vector<16x32xf32>
      %cst_28 = arith.constant dense<0.000000e+00> : vector<16xf32>
      %36 = vector.multi_reduction <add>, %35, %cst_28 [1] : vector<16x32xf32> to vector<16xf32>
      %37 = vector.shape_cast %36 : vector<16xf32> to vector<16x1xf32>
      %cst_29 = arith.constant 3.200000e+01 : f32
      %38 = vector.broadcast %cst_29 : f32 to vector<16x1xf32>
      %39 = arith.divf %37, %38 : vector<16x1xf32>
      %40 = vector.broadcast %32 : vector<16x1xf32> to vector<16x32xf32>
      %41 = arith.subf %26, %40 : vector<16x32xf32>
      %cst_30 = arith.constant 9.99999974E-6 : f32
      %42 = vector.broadcast %cst_30 : f32 to vector<16x1xf32>
      %43 = arith.addf %39, %42 : vector<16x1xf32>
      %44 = math.rsqrt %43 : vector<16x1xf32>
      %45 = vector.broadcast %44 : vector<16x1xf32> to vector<16x32xf32>
      %46 = arith.mulf %41, %45 : vector<16x32xf32>
      %47 = vector.broadcast %27 : vector<1x32xf32> to vector<16x32xf32>
      %48 = arith.mulf %46, %47 : vector<16x32xf32>
      %49 = vector.broadcast %28 : vector<1x32xf32> to vector<16x32xf32>
      %50 = arith.addf %48, %49 : vector<16x32xf32>
      %c0_31 = arith.constant 0 : index
      %c0_32 = arith.constant 0 : index
      %51 = vector.load %arg9[%c0_31, %c0_32] : memref<16x32xf32, #tpu.memory_space<vmem>>, vector<16x32xf32>
      tpu.vector_store %arg9[%c0_31, %c0_32], %50 {strides = array<i32>} : memref<16x32xf32, #tpu.memory_space<vmem>>, vector<16x32xf32>,
    } else {
    }
    return
  }
  func.func @transform_0(%arg0: i32, %arg1: i32) -> (i32, i32) {
    %c0_i32 = arith.constant 0 : i32
    %c0_i32_0 = arith.constant 0 : i32
    return %arg0, %c0_i32 : i32, i32
  }
  func.func @transform_1(%arg0: i32, %arg1: i32) -> (i32, i32) {
    %c0_i32 = arith.constant 0 : i32
    %c0_i32_0 = arith.constant 0 : i32
    return %c0_i32, %arg1 : i32, i32
  }
  func.func @transform_2(%arg0: i32, %arg1: i32) -> (i32, i32) {
    %c0_i32 = arith.constant 0 : i32
    %c0_i32_0 = arith.constant 0 : i32
    return %c0_i32, %arg1 : i32, i32
  }
  func.func @transform_3(%arg0: i32, %arg1: i32) -> (i32, i32) {
    %c0_i32 = arith.constant 0 : i32
    %c0_i32_0 = arith.constant 0 : i32
    return %arg1, %c0_i32 : i32, i32
  }
  func.func @transform_4(%arg0: i32, %arg1: i32) -> (i32, i32) {
    %c0_i32 = arith.constant 0 : i32
    %c0_i32_0 = arith.constant 0 : i32
    %c0_i32_1 = arith.constant 0 : i32
    return %c0_i32, %c0_i32_0 : i32, i32
  }
  func.func @transform_5(%arg0: i32, %arg1: i32) -> (i32, i32) {
    %c0_i32 = arith.constant 0 : i32
    %c0_i32_0 = arith.constant 0 : i32
    %c0_i32_1 = arith.constant 0 : i32
    return %c0_i32, %c0_i32_0 : i32, i32
  }
  func.func @transform_6(%arg0: i32, %arg1: i32) -> (i32, i32) {
    %c0_i32 = arith.constant 0 : i32
    %c0_i32_0 = arith.constant 0 : i32
    %c0_i32_1 = arith.constant 0 : i32
    return %c0_i32, %c0_i32_0 : i32, i32
  }
  func.func @transform_7(%arg0: i32, %arg1: i32) -> (i32, i32) {
    %c0_i32 = arith.constant 0 : i32
    %c0_i32_0 = arith.constant 0 : i32
    return %arg0, %c0_i32 : i32, i32
  }
}

module attributes {stable_mosaic.version = 11 : i64} {
  func.func @linear_kernel(%arg0: i32, %arg1: i32, %arg2: memref<16x32xf32, #tpu.memory_space<vmem>>, %arg3: memref<32x32xbf16, #tpu.memory_space<vmem>>, %arg4: memref<1x32xf32, #tpu.memory_space<vmem>>, %arg5: memref<16x32xbf16, #tpu.memory_space<vmem>>) attributes {dimension_semantics = [#tpu.dimension_semantics<parallel>, #tpu.dimension_semantics<parallel>], iteration_bounds = array<i64: 1, 1>, scalar_prefetch = 0 : i64, scratch_operands = 0 : i64, tpu.core_type = #tpu.core_type<tc>, window_params = [{transform_indices = @transform_0, window_bounds = array<i64: 16, 32>}, {transform_indices = @transform_1, window_bounds = array<i64: 32, 32>}, {transform_indices = @transform_2, window_bounds = array<i64: 1, 32>}, {transform_indices = @transform_3, window_bounds = array<i64: 16, 32>}]} {
    %c0 = arith.constant 0 : index
    %c0_0 = arith.constant 0 : index
    %0 = vector.load %arg2[%c0, %c0_0] : memref<16x32xf32, #tpu.memory_space<vmem>>, vector<16x32xf32>
    %1 = arith.truncf %0 : vector<16x32xf32> to vector<16x32xbf16>
    %c0_1 = arith.constant 0 : index
    %c0_2 = arith.constant 0 : index
    %2 = vector.load %arg3[%c0_1, %c0_2] : memref<32x32xbf16, #tpu.memory_space<vmem>>, vector<32x32xbf16>
    %cst = arith.constant dense<0.000000e+00> : vector<16x32xf32>
    %3 = tpu.matmul %1, %2, %cst {dimension_numbers = #tpu.dot_dimension_numbers<[1], [0], [0], [1], [0, 0, 1, 1], [], []>} : vector<16x32xbf16>, vector<32x32xbf16>, vector<16x32xf32> -> vector<16x32xf32>
    %c0_3 = arith.constant 0 : index
    %c0_4 = arith.constant 0 : index
    %4 = vector.load %arg4[%c0_3, %c0_4] : memref<1x32xf32, #tpu.memory_space<vmem>>, vector<1x32xf32>
    %5 = vector.broadcast %4 : vector<1x32xf32> to vector<16x32xf32>
    %6 = arith.addf %3, %5 : vector<16x32xf32>
    %7 = arith.truncf %6 : vector<16x32xf32> to vector<16x32xbf16>
    %c0_5 = arith.constant 0 : index
    %c0_6 = arith.constant 0 : index
    %8 = vector.load %arg5[%c0_5, %c0_6] : memref<16x32xbf16, #tpu.memory_space<vmem>>, vector<16x32xbf16>
    tpu.vector_store %arg5[%c0_5, %c0_6], %7 {strides = array<i32>} : memref<16x32xbf16, #tpu.memory_space<vmem>>, vector<16x32xbf16>,
    return
  }
  func.func @transform_0(%arg0: i32, %arg1: i32) -> (i32, i32) {
    %c0_i32 = arith.constant 0 : i32
    %c0_i32_0 = arith.constant 0 : i32
    return %arg0, %c0_i32 : i32, i32
  }
  func.func @transform_1(%arg0: i32, %arg1: i32) -> (i32, i32) {
    %c0_i32 = arith.constant 0 : i32
    %c0_i32_0 = arith.constant 0 : i32
    return %c0_i32, %arg1 : i32, i32
  }
  func.func @transform_2(%arg0: i32, %arg1: i32) -> (i32, i32) {
    %c0_i32 = arith.constant 0 : i32
    %c0_i32_0 = arith.constant 0 : i32
    return %c0_i32, %arg1 : i32, i32
  }
  func.func @transform_3(%arg0: i32, %arg1: i32) -> (i32, i32) {
    %c0_i32 = arith.constant 0 : i32
    return %arg0, %arg1 : i32, i32
  }
}

module attributes {stable_mosaic.version = 11 : i64} {
  func.func @out_proj_add_ln_kernel(%arg0: i32, %arg1: memref<16x32xbf16, #tpu.memory_space<vmem>>, %arg2: memref<16x32xf32, #tpu.memory_space<vmem>>, %arg3: memref<32x32xbf16, #tpu.memory_space<vmem>>, %arg4: memref<1x32xf32, #tpu.memory_space<vmem>>, %arg5: memref<1x32xf32, #tpu.memory_space<vmem>>, %arg6: memref<1x32xf32, #tpu.memory_space<vmem>>, %arg7: memref<16x32xf32, #tpu.memory_space<vmem>>) attributes {dimension_semantics = [#tpu.dimension_semantics<parallel>], iteration_bounds = array<i64: 1>, scalar_prefetch = 0 : i64, scratch_operands = 0 : i64, tpu.core_type = #tpu.core_type<tc>, window_params = [{transform_indices = @transform_0, window_bounds = array<i64: 16, 32>}, {transform_indices = @transform_1, window_bounds = array<i64: 16, 32>}, {pipeline_mode = #tpu.pipeline_mode<synchronous>, transform_indices = @transform_2, window_bounds = array<i64: 32, 32>}, {pipeline_mode = #tpu.pipeline_mode<synchronous>, transform_indices = @transform_3, window_bounds = array<i64: 1, 32>}, {pipeline_mode = #tpu.pipeline_mode<synchronous>, transform_indices = @transform_4, window_bounds = array<i64: 1, 32>}, {pipeline_mode = #tpu.pipeline_mode<synchronous>, transform_indices = @transform_5, window_bounds = array<i64: 1, 32>}, {transform_indices = @transform_6, window_bounds = array<i64: 16, 32>}]} {
    %c0 = arith.constant 0 : index
    %c0_0 = arith.constant 0 : index
    %0 = vector.load %arg1[%c0, %c0_0] : memref<16x32xbf16, #tpu.memory_space<vmem>>, vector<16x32xbf16>
    %c0_1 = arith.constant 0 : index
    %c0_2 = arith.constant 0 : index
    %1 = vector.load %arg3[%c0_1, %c0_2] : memref<32x32xbf16, #tpu.memory_space<vmem>>, vector<32x32xbf16>
    %cst = arith.constant dense<0.000000e+00> : vector<16x32xf32>
    %2 = tpu.matmul %0, %1, %cst {dimension_numbers = #tpu.dot_dimension_numbers<[1], [0], [0], [1], [0, 0, 1, 1], [], []>} : vector<16x32xbf16>, vector<32x32xbf16>, vector<16x32xf32> -> vector<16x32xf32>
    %c0_3 = arith.constant 0 : index
    %c0_4 = arith.constant 0 : index
    %3 = vector.load %arg4[%c0_3, %c0_4] : memref<1x32xf32, #tpu.memory_space<vmem>>, vector<1x32xf32>
    %4 = vector.broadcast %3 : vector<1x32xf32> to vector<16x32xf32>
    %5 = arith.addf %2, %4 : vector<16x32xf32>
    %c0_5 = arith.constant 0 : index
    %c0_6 = arith.constant 0 : index
    %6 = vector.load %arg2[%c0_5, %c0_6] : memref<16x32xf32, #tpu.memory_space<vmem>>, vector<16x32xf32>
    %7 = arith.addf %6, %5 : vector<16x32xf32>
    %c0_7 = arith.constant 0 : index
    %c0_8 = arith.constant 0 : index
    %8 = vector.load %arg5[%c0_7, %c0_8] : memref<1x32xf32, #tpu.memory_space<vmem>>, vector<1x32xf32>
    %c0_9 = arith.constant 0 : index
    %c0_10 = arith.constant 0 : index
    %9 = vector.load %arg6[%c0_9, %c0_10] : memref<1x32xf32, #tpu.memory_space<vmem>>, vector<1x32xf32>
    %cst_11 = arith.constant dense<0.000000e+00> : vector<16xf32>
    %10 = vector.multi_reduction <add>, %7, %cst_11 [1] : vector<16x32xf32> to vector<16xf32>
    %11 = vector.shape_cast %10 : vector<16xf32> to vector<16x1xf32>
    %cst_12 = arith.constant 3.200000e+01 : f32
    %12 = vector.broadcast %cst_12 : f32 to vector<16x1xf32>
    %13 = arith.divf %11, %12 : vector<16x1xf32>
    %14 = vector.broadcast %13 : vector<16x1xf32> to vector<16x32xf32>
    %15 = arith.subf %7, %14 : vector<16x32xf32>
    %16 = arith.mulf %15, %15 : vector<16x32xf32>
    %cst_13 = arith.constant dense<0.000000e+00> : vector<16xf32>
    %17 = vector.multi_reduction <add>, %16, %cst_13 [1] : vector<16x32xf32> to vector<16xf32>
    %18 = vector.shape_cast %17 : vector<16xf32> to vector<16x1xf32>
    %cst_14 = arith.constant 3.200000e+01 : f32
    %19 = vector.broadcast %cst_14 : f32 to vector<16x1xf32>
    %20 = arith.divf %18, %19 : vector<16x1xf32>
    %21 = vector.broadcast %13 : vector<16x1xf32> to vector<16x32xf32>
    %22 = arith.subf %7, %21 : vector<16x32xf32>
    %cst_15 = arith.constant 9.99999974E-6 : f32
    %23 = vector.broadcast %cst_15 : f32 to vector<16x1xf32>
    %24 = arith.addf %20, %23 : vector<16x1xf32>
    %25 = math.rsqrt %24 : vector<16x1xf32>
    %26 = vector.broadcast %25 : vector<16x1xf32> to vector<16x32xf32>
    %27 = arith.mulf %22, %26 : vector<16x32xf32>
    %28 = vector.broadcast %8 : vector<1x32xf32> to vector<16x32xf32>
    %29 = arith.mulf %27, %28 : vector<16x32xf32>
    %30 = vector.broadcast %9 : vector<1x32xf32> to vector<16x32xf32>
    %31 = arith.addf %29, %30 : vector<16x32xf32>
    %c0_16 = arith.constant 0 : index
    %c0_17 = arith.constant 0 : index
    %32 = vector.load %arg7[%c0_16, %c0_17] : memref<16x32xf32, #tpu.memory_space<vmem>>, vector<16x32xf32>
    tpu.vector_store %arg7[%c0_16, %c0_17], %31 {strides = array<i32>} : memref<16x32xf32, #tpu.memory_space<vmem>>, vector<16x32xf32>,
    return
  }
  func.func @transform_0(%arg0: i32) -> (i32, i32) {
    %c0_i32 = arith.constant 0 : i32
    %c0_i32_0 = arith.constant 0 : i32
    return %arg0, %c0_i32 : i32, i32
  }
  func.func @transform_1(%arg0: i32) -> (i32, i32) {
    %c0_i32 = arith.constant 0 : i32
    %c0_i32_0 = arith.constant 0 : i32
    return %arg0, %c0_i32 : i32, i32
  }
  func.func @transform_2(%arg0: i32) -> (i32, i32) {
    %c0_i32 = arith.constant 0 : i32
    %c0_i32_0 = arith.constant 0 : i32
    %c0_i32_1 = arith.constant 0 : i32
    return %c0_i32, %c0_i32_0 : i32, i32
  }
  func.func @transform_3(%arg0: i32) -> (i32, i32) {
    %c0_i32 = arith.constant 0 : i32
    %c0_i32_0 = arith.constant 0 : i32
    %c0_i32_1 = arith.constant 0 : i32
    return %c0_i32, %c0_i32_0 : i32, i32
  }
  func.func @transform_4(%arg0: i32) -> (i32, i32) {
    %c0_i32 = arith.constant 0 : i32
    %c0_i32_0 = arith.constant 0 : i32
    %c0_i32_1 = arith.constant 0 : i32
    return %c0_i32, %c0_i32_0 : i32, i32
  }
  func.func @transform_5(%arg0: i32) -> (i32, i32) {
    %c0_i32 = arith.constant 0 : i32
    %c0_i32_0 = arith.constant 0 : i32
    %c0_i32_1 = arith.constant 0 : i32
    return %c0_i32, %c0_i32_0 : i32, i32
  }
  func.func @transform_6(%arg0: i32) -> (i32, i32) {
    %c0_i32 = arith.constant 0 : i32
    %c0_i32_0 = arith.constant 0 : i32
    return %arg0, %c0_i32 : i32, i32
  }
}

module attributes {stable_mosaic.version = 11 : i64} {
  func.func @attention_kernel(%arg0: i32, %arg1: i32, %arg2: memref<1x8x32xbf16, #tpu.memory_space<vmem>>, %arg3: memref<1x8x64xbf16, #tpu.memory_space<vmem>>, %arg4: memref<1x8x8xf32, #tpu.memory_space<vmem>>, %arg5: memref<1x8x32xbf16, #tpu.memory_space<vmem>>) attributes {dimension_semantics = [#tpu.dimension_semantics<parallel>, #tpu.dimension_semantics<parallel>], iteration_bounds = array<i64: 2, 1>, scalar_prefetch = 0 : i64, scratch_operands = 0 : i64, tpu.core_type = #tpu.core_type<tc>, window_params = [{transform_indices = @transform_0, window_bounds = array<i64: 1, 8, 32>}, {transform_indices = @transform_1, window_bounds = array<i64: 1, 8, 64>}, {transform_indices = @transform_2, window_bounds = array<i64: 1, 8, 8>}, {transform_indices = @transform_3, window_bounds = array<i64: 1, 8, 32>}]} {
    %c0 = arith.constant 0 : index
    %c0_0 = arith.constant 0 : index
    %c0_1 = arith.constant 0 : index
    %0 = vector.load %arg2[%c0, %c0_0, %c0_1] : memref<1x8x32xbf16, #tpu.memory_space<vmem>>, vector<1x8x32xbf16>
    %1 = vector.shape_cast %0 : vector<1x8x32xbf16> to vector<8x32xbf16>
    %c0_2 = arith.constant 0 : index
    %c0_3 = arith.constant 0 : index
    %c0_4 = arith.constant 0 : index
    %2 = vector.load %arg3[%c0_2, %c0_3, %c0_4] : memref<1x8x64xbf16, #tpu.memory_space<vmem>>, vector<1x8x64xbf16>
    %3 = vector.shape_cast %2 : vector<1x8x64xbf16> to vector<8x64xbf16>
    %c0_5 = arith.constant 0 : index
    %c0_6 = arith.constant 0 : index
    %c0_7 = arith.constant 0 : index
    %4 = vector.load %arg4[%c0_5, %c0_6, %c0_7] : memref<1x8x8xf32, #tpu.memory_space<vmem>>, vector<1x8x8xf32>
    %5 = vector.shape_cast %4 : vector<1x8x8xf32> to vector<8x8xf32>
    %cst = arith.constant 0.000000e+00 : f32
    %6 = vector.broadcast %cst : f32 to vector<8x8xf32>
    %7 = arith.cmpf oeq, %5, %6 : vector<8x8xf32>
    %cst_8 = arith.constant -1.000000e+09 : f32
    %cst_9 = arith.constant 0.000000e+00 : f32
    %8 = vector.broadcast %cst_8 : f32 to vector<8x8xf32>
    %9 = vector.broadcast %cst_9 : f32 to vector<8x8xf32>
    %10 = arith.select %7, %8, %9 : vector<8x8xi1>, vector<8x8xf32>
    %11 = vector.extract_strided_slice %1 {offsets = [0, 0], sizes = [8, 8], strides = [1, 1]} : vector<8x32xbf16> to vector<8x8xbf16>
    %12 = arith.extf %11 : vector<8x8xbf16> to vector<8x8xf32>
    %cst_10 = arith.constant 0.353553385 : f32
    %13 = vector.broadcast %cst_10 : f32 to vector<8x8xf32>
    %14 = arith.mulf %12, %13 : vector<8x8xf32>
    %15 = arith.truncf %14 : vector<8x8xf32> to vector<8x8xbf16>
    %16 = vector.extract_strided_slice %3 {offsets = [0, 0], sizes = [8, 8], strides = [1, 1]} : vector<8x64xbf16> to vector<8x8xbf16>
    %17 = vector.extract_strided_slice %3 {offsets = [0, 32], sizes = [8, 8], strides = [1, 1]} : vector<8x64xbf16> to vector<8x8xbf16>
    %cst_11 = arith.constant dense<0.000000e+00> : vector<8x8xf32>
    %18 = tpu.matmul %15, %16, %cst_11 {dimension_numbers = #tpu.dot_dimension_numbers<[1], [1], [0], [0], [0, 0, 1, 0], [], []>} : vector<8x8xbf16>, vector<8x8xbf16>, vector<8x8xf32> -> vector<8x8xf32>
    %19 = arith.addf %18, %10 : vector<8x8xf32>
    %cst_12 = arith.constant dense<0xFF800000> : vector<8xf32>
    %20 = vector.multi_reduction <maximumf>, %19, %cst_12 [1] : vector<8x8xf32> to vector<8xf32>
    %21 = vector.shape_cast %20 : vector<8xf32> to vector<8x1xf32>
    %22 = vector.broadcast %21 : vector<8x1xf32> to vector<8x8xf32>
    %23 = arith.subf %19, %22 : vector<8x8xf32>
    %24 = math.exp %23 : vector<8x8xf32>
    %cst_13 = arith.constant dense<0.000000e+00> : vector<8xf32>
    %25 = vector.multi_reduction <add>, %24, %cst_13 [1] : vector<8x8xf32> to vector<8xf32>
    %26 = vector.shape_cast %25 : vector<8xf32> to vector<8x1xf32>
    %27 = tpu.reciprocal %26 {approx = true} : vector<8x1xf32> -> vector<8x1xf32>
    %28 = arith.truncf %24 : vector<8x8xf32> to vector<8x8xbf16>
    %cst_14 = arith.constant dense<0.000000e+00> : vector<8x8xf32>
    %29 = tpu.matmul %28, %17, %cst_14 {dimension_numbers = #tpu.dot_dimension_numbers<[1], [0], [0], [1], [0, 0, 1, 1], [], []>} : vector<8x8xbf16>, vector<8x8xbf16>, vector<8x8xf32> -> vector<8x8xf32>
    %30 = vector.broadcast %27 : vector<8x1xf32> to vector<8x8xf32>
    %31 = arith.mulf %29, %30 : vector<8x8xf32>
    %32 = arith.truncf %31 : vector<8x8xf32> to vector<8x8xbf16>
    %c0_15 = arith.constant 0 : index
    %c0_16 = arith.constant 0 : index
    %c0_17 = arith.constant 0 : index
    %33 = vector.load %arg5[%c0_15, %c0_16, %c0_17] : memref<1x8x32xbf16, #tpu.memory_space<vmem>>, vector<1x8x8xbf16>
    %34 = vector.shape_cast %33 : vector<1x8x8xbf16> to vector<8x8xbf16>
    %35 = vector.shape_cast %32 : vector<8x8xbf16> to vector<1x8x8xbf16>
    tpu.vector_store %arg5[%c0_15, %c0_16, %c0_17], %35 {strides = array<i32>} : memref<1x8x32xbf16, #tpu.memory_space<vmem>>, vector<1x8x8xbf16>,
    %36 = vector.extract_strided_slice %1 {offsets = [0, 8], sizes = [8, 8], strides = [1, 1]} : vector<8x32xbf16> to vector<8x8xbf16>
    %37 = arith.extf %36 : vector<8x8xbf16> to vector<8x8xf32>
    %cst_18 = arith.constant 0.353553385 : f32
    %38 = vector.broadcast %cst_18 : f32 to vector<8x8xf32>
    %39 = arith.mulf %37, %38 : vector<8x8xf32>
    %40 = arith.truncf %39 : vector<8x8xf32> to vector<8x8xbf16>
    %41 = vector.extract_strided_slice %3 {offsets = [0, 8], sizes = [8, 8], strides = [1, 1]} : vector<8x64xbf16> to vector<8x8xbf16>
    %42 = vector.extract_strided_slice %3 {offsets = [0, 40], sizes = [8, 8], strides = [1, 1]} : vector<8x64xbf16> to vector<8x8xbf16>
    %cst_19 = arith.constant dense<0.000000e+00> : vector<8x8xf32>
    %43 = tpu.matmul %40, %41, %cst_19 {dimension_numbers = #tpu.dot_dimension_numbers<[1], [1], [0], [0], [0, 0, 1, 0], [], []>} : vector<8x8xbf16>, vector<8x8xbf16>, vector<8x8xf32> -> vector<8x8xf32>
    %44 = arith.addf %43, %10 : vector<8x8xf32>
    %cst_20 = arith.constant dense<0xFF800000> : vector<8xf32>
    %45 = vector.multi_reduction <maximumf>, %44, %cst_20 [1] : vector<8x8xf32> to vector<8xf32>
    %46 = vector.shape_cast %45 : vector<8xf32> to vector<8x1xf32>
    %47 = vector.broadcast %46 : vector<8x1xf32> to vector<8x8xf32>
    %48 = arith.subf %44, %47 : vector<8x8xf32>
    %49 = math.exp %48 : vector<8x8xf32>
    %cst_21 = arith.constant dense<0.000000e+00> : vector<8xf32>
    %50 = vector.multi_reduction <add>, %49, %cst_21 [1] : vector<8x8xf32> to vector<8xf32>
    %51 = vector.shape_cast %50 : vector<8xf32> to vector<8x1xf32>
    %52 = tpu.reciprocal %51 {approx = true} : vector<8x1xf32> -> vector<8x1xf32>
    %53 = arith.truncf %49 : vector<8x8xf32> to vector<8x8xbf16>
    %cst_22 = arith.constant dense<0.000000e+00> : vector<8x8xf32>
    %54 = tpu.matmul %53, %42, %cst_22 {dimension_numbers = #tpu.dot_dimension_numbers<[1], [0], [0], [1], [0, 0, 1, 1], [], []>} : vector<8x8xbf16>, vector<8x8xbf16>, vector<8x8xf32> -> vector<8x8xf32>
    %55 = vector.broadcast %52 : vector<8x1xf32> to vector<8x8xf32>
    %56 = arith.mulf %54, %55 : vector<8x8xf32>
    %57 = arith.truncf %56 : vector<8x8xf32> to vector<8x8xbf16>
    %c0_23 = arith.constant 0 : index
    %c0_24 = arith.constant 0 : index
    %c8 = arith.constant 8 : index
    %58 = vector.load %arg5[%c0_23, %c0_24, %c8] : memref<1x8x32xbf16, #tpu.memory_space<vmem>>, vector<1x8x8xbf16>
    %59 = vector.shape_cast %58 : vector<1x8x8xbf16> to vector<8x8xbf16>
    %60 = vector.shape_cast %57 : vector<8x8xbf16> to vector<1x8x8xbf16>
    tpu.vector_store %arg5[%c0_23, %c0_24, %c8], %60 {strides = array<i32>} : memref<1x8x32xbf16, #tpu.memory_space<vmem>>, vector<1x8x8xbf16>,
    %61 = vector.extract_strided_slice %1 {offsets = [0, 16], sizes = [8, 8], strides = [1, 1]} : vector<8x32xbf16> to vector<8x8xbf16>
    %62 = arith.extf %61 : vector<8x8xbf16> to vector<8x8xf32>
    %cst_25 = arith.constant 0.353553385 : f32
    %63 = vector.broadcast %cst_25 : f32 to vector<8x8xf32>
    %64 = arith.mulf %62, %63 : vector<8x8xf32>
    %65 = arith.truncf %64 : vector<8x8xf32> to vector<8x8xbf16>
    %66 = vector.extract_strided_slice %3 {offsets = [0, 16], sizes = [8, 8], strides = [1, 1]} : vector<8x64xbf16> to vector<8x8xbf16>
    %67 = vector.extract_strided_slice %3 {offsets = [0, 48], sizes = [8, 8], strides = [1, 1]} : vector<8x64xbf16> to vector<8x8xbf16>
    %cst_26 = arith.constant dense<0.000000e+00> : vector<8x8xf32>
    %68 = tpu.matmul %65, %66, %cst_26 {dimension_numbers = #tpu.dot_dimension_numbers<[1], [1], [0], [0], [0, 0, 1, 0], [], []>} : vector<8x8xbf16>, vector<8x8xbf16>, vector<8x8xf32> -> vector<8x8xf32>
    %69 = arith.addf %68, %10 : vector<8x8xf32>
    %cst_27 = arith.constant dense<0xFF800000> : vector<8xf32>
    %70 = vector.multi_reduction <maximumf>, %69, %cst_27 [1] : vector<8x8xf32> to vector<8xf32>
    %71 = vector.shape_cast %70 : vector<8xf32> to vector<8x1xf32>
    %72 = vector.broadcast %71 : vector<8x1xf32> to vector<8x8xf32>
    %73 = arith.subf %69, %72 : vector<8x8xf32>
    %74 = math.exp %73 : vector<8x8xf32>
    %cst_28 = arith.constant dense<0.000000e+00> : vector<8xf32>
    %75 = vector.multi_reduction <add>, %74, %cst_28 [1] : vector<8x8xf32> to vector<8xf32>
    %76 = vector.shape_cast %75 : vector<8xf32> to vector<8x1xf32>
    %77 = tpu.reciprocal %76 {approx = true} : vector<8x1xf32> -> vector<8x1xf32>
    %78 = arith.truncf %74 : vector<8x8xf32> to vector<8x8xbf16>
    %cst_29 = arith.constant dense<0.000000e+00> : vector<8x8xf32>
    %79 = tpu.matmul %78, %67, %cst_29 {dimension_numbers = #tpu.dot_dimension_numbers<[1], [0], [0], [1], [0, 0, 1, 1], [], []>} : vector<8x8xbf16>, vector<8x8xbf16>, vector<8x8xf32> -> vector<8x8xf32>
    %80 = vector.broadcast %77 : vector<8x1xf32> to vector<8x8xf32>
    %81 = arith.mulf %79, %80 : vector<8x8xf32>
    %82 = arith.truncf %81 : vector<8x8xf32> to vector<8x8xbf16>
    %c0_30 = arith.constant 0 : index
    %c0_31 = arith.constant 0 : index
    %c16 = arith.constant 16 : index
    %83 = vector.load %arg5[%c0_30, %c0_31, %c16] : memref<1x8x32xbf16, #tpu.memory_space<vmem>>, vector<1x8x8xbf16>
    %84 = vector.shape_cast %83 : vector<1x8x8xbf16> to vector<8x8xbf16>
    %85 = vector.shape_cast %82 : vector<8x8xbf16> to vector<1x8x8xbf16>
    tpu.vector_store %arg5[%c0_30, %c0_31, %c16], %85 {strides = array<i32>} : memref<1x8x32xbf16, #tpu.memory_space<vmem>>, vector<1x8x8xbf16>,
    %86 = vector.extract_strided_slice %1 {offsets = [0, 24], sizes = [8, 8], strides = [1, 1]} : vector<8x32xbf16> to vector<8x8xbf16>
    %87 = arith.extf %86 : vector<8x8xbf16> to vector<8x8xf32>
    %cst_32 = arith.constant 0.353553385 : f32
    %88 = vector.broadcast %cst_32 : f32 to vector<8x8xf32>
    %89 = arith.mulf %87, %88 : vector<8x8xf32>
    %90 = arith.truncf %89 : vector<8x8xf32> to vector<8x8xbf16>
    %91 = vector.extract_strided_slice %3 {offsets = [0, 24], sizes = [8, 8], strides = [1, 1]} : vector<8x64xbf16> to vector<8x8xbf16>
    %92 = vector.extract_strided_slice %3 {offsets = [0, 56], sizes = [8, 8], strides = [1, 1]} : vector<8x64xbf16> to vector<8x8xbf16>
    %cst_33 = arith.constant dense<0.000000e+00> : vector<8x8xf32>
    %93 = tpu.matmul %90, %91, %cst_33 {dimension_numbers = #tpu.dot_dimension_numbers<[1], [1], [0], [0], [0, 0, 1, 0], [], []>} : vector<8x8xbf16>, vector<8x8xbf16>, vector<8x8xf32> -> vector<8x8xf32>
    %94 = arith.addf %93, %10 : vector<8x8xf32>
    %cst_34 = arith.constant dense<0xFF800000> : vector<8xf32>
    %95 = vector.multi_reduction <maximumf>, %94, %cst_34 [1] : vector<8x8xf32> to vector<8xf32>
    %96 = vector.shape_cast %95 : vector<8xf32> to vector<8x1xf32>
    %97 = vector.broadcast %96 : vector<8x1xf32> to vector<8x8xf32>
    %98 = arith.subf %94, %97 : vector<8x8xf32>
    %99 = math.exp %98 : vector<8x8xf32>
    %cst_35 = arith.constant dense<0.000000e+00> : vector<8xf32>
    %100 = vector.multi_reduction <add>, %99, %cst_35 [1] : vector<8x8xf32> to vector<8xf32>
    %101 = vector.shape_cast %100 : vector<8xf32> to vector<8x1xf32>
    %102 = tpu.reciprocal %101 {approx = true} : vector<8x1xf32> -> vector<8x1xf32>
    %103 = arith.truncf %99 : vector<8x8xf32> to vector<8x8xbf16>
    %cst_36 = arith.constant dense<0.000000e+00> : vector<8x8xf32>
    %104 = tpu.matmul %103, %92, %cst_36 {dimension_numbers = #tpu.dot_dimension_numbers<[1], [0], [0], [1], [0, 0, 1, 1], [], []>} : vector<8x8xbf16>, vector<8x8xbf16>, vector<8x8xf32> -> vector<8x8xf32>
    %105 = vector.broadcast %102 : vector<8x1xf32> to vector<8x8xf32>
    %106 = arith.mulf %104, %105 : vector<8x8xf32>
    %107 = arith.truncf %106 : vector<8x8xf32> to vector<8x8xbf16>
    %c0_37 = arith.constant 0 : index
    %c0_38 = arith.constant 0 : index
    %c24 = arith.constant 24 : index
    %108 = vector.load %arg5[%c0_37, %c0_38, %c24] : memref<1x8x32xbf16, #tpu.memory_space<vmem>>, vector<1x8x8xbf16>
    %109 = vector.shape_cast %108 : vector<1x8x8xbf16> to vector<8x8xbf16>
    %110 = vector.shape_cast %107 : vector<8x8xbf16> to vector<1x8x8xbf16>
    tpu.vector_store %arg5[%c0_37, %c0_38, %c24], %110 {strides = array<i32>} : memref<1x8x32xbf16, #tpu.memory_space<vmem>>, vector<1x8x8xbf16>,
    return
  }
  func.func @transform_0(%arg0: i32, %arg1: i32) -> (i32, i32, i32) {
    %c0_i32 = arith.constant 0 : i32
    %c0_i32_0 = arith.constant 0 : i32
    return %arg0, %arg1, %c0_i32 : i32, i32, i32
  }
  func.func @transform_1(%arg0: i32, %arg1: i32) -> (i32, i32, i32) {
    %c0_i32 = arith.constant 0 : i32
    %c0_i32_0 = arith.constant 0 : i32
    %c0_i32_1 = arith.constant 0 : i32
    return %arg0, %c0_i32, %c0_i32_0 : i32, i32, i32
  }
  func.func @transform_2(%arg0: i32, %arg1: i32) -> (i32, i32, i32) {
    %c0_i32 = arith.constant 0 : i32
    %c0_i32_0 = arith.constant 0 : i32
    return %arg0, %arg1, %c0_i32 : i32, i32, i32
  }
  func.func @transform_3(%arg0: i32, %arg1: i32) -> (i32, i32, i32) {
    %c0_i32 = arith.constant 0 : i32
    %c0_i32_0 = arith.constant 0 : i32
    return %arg0, %arg1, %c0_i32 : i32, i32, i32
  }
}

module attributes {stable_mosaic.version = 11 : i64} {
  func.func @linear_kernel(%arg0: i32, %arg1: i32, %arg2: memref<16x32xf32, #tpu.memory_space<vmem>>, %arg3: memref<32x64xbf16, #tpu.memory_space<vmem>>, %arg4: memref<1x64xf32, #tpu.memory_space<vmem>>, %arg5: memref<16x64xbf16, #tpu.memory_space<vmem>>) attributes {dimension_semantics = [#tpu.dimension_semantics<parallel>, #tpu.dimension_semantics<parallel>], iteration_bounds = array<i64: 1, 1>, scalar_prefetch = 0 : i64, scratch_operands = 0 : i64, tpu.core_type = #tpu.core_type<tc>, window_params = [{transform_indices = @transform_0, window_bounds = array<i64: 16, 32>}, {transform_indices = @transform_1, window_bounds = array<i64: 32, 64>}, {transform_indices = @transform_2, window_bounds = array<i64: 1, 64>}, {transform_indices = @transform_3, window_bounds = array<i64: 16, 64>}]} {
    %c0 = arith.constant 0 : index
    %c0_0 = arith.constant 0 : index
    %0 = vector.load %arg2[%c0, %c0_0] : memref<16x32xf32, #tpu.memory_space<vmem>>, vector<16x32xf32>
    %1 = arith.truncf %0 : vector<16x32xf32> to vector<16x32xbf16>
    %c0_1 = arith.constant 0 : index
    %c0_2 = arith.constant 0 : index
    %2 = vector.load %arg3[%c0_1, %c0_2] : memref<32x64xbf16, #tpu.memory_space<vmem>>, vector<32x64xbf16>
    %cst = arith.constant dense<0.000000e+00> : vector<16x64xf32>
    %3 = tpu.matmul %1, %2, %cst {dimension_numbers = #tpu.dot_dimension_numbers<[1], [0], [0], [1], [0, 0, 1, 1], [], []>} : vector<16x32xbf16>, vector<32x64xbf16>, vector<16x64xf32> -> vector<16x64xf32>
    %c0_3 = arith.constant 0 : index
    %c0_4 = arith.constant 0 : index
    %4 = vector.load %arg4[%c0_3, %c0_4] : memref<1x64xf32, #tpu.memory_space<vmem>>, vector<1x64xf32>
    %5 = vector.broadcast %4 : vector<1x64xf32> to vector<16x64xf32>
    %6 = arith.addf %3, %5 : vector<16x64xf32>
    %7 = arith.truncf %6 : vector<16x64xf32> to vector<16x64xbf16>
    %c0_5 = arith.constant 0 : index
    %c0_6 = arith.constant 0 : index
    %8 = vector.load %arg5[%c0_5, %c0_6] : memref<16x64xbf16, #tpu.memory_space<vmem>>, vector<16x64xbf16>
    tpu.vector_store %arg5[%c0_5, %c0_6], %7 {strides = array<i32>} : memref<16x64xbf16, #tpu.memory_space<vmem>>, vector<16x64xbf16>,
    return
  }
  func.func @transform_0(%arg0: i32, %arg1: i32) -> (i32, i32) {
    %c0_i32 = arith.constant 0 : i32
    %c0_i32_0 = arith.constant 0 : i32
    return %arg0, %c0_i32 : i32, i32
  }
  func.func @transform_1(%arg0: i32, %arg1: i32) -> (i32, i32) {
    %c0_i32 = arith.constant 0 : i32
    %c0_i32_0 = arith.constant 0 : i32
    return %c0_i32, %arg1 : i32, i32
  }
  func.func @transform_2(%arg0: i32, %arg1: i32) -> (i32, i32) {
    %c0_i32 = arith.constant 0 : i32
    %c0_i32_0 = arith.constant 0 : i32
    return %c0_i32, %arg1 : i32, i32
  }
  func.func @transform_3(%arg0: i32, %arg1: i32) -> (i32, i32) {
    %c0_i32 = arith.constant 0 : i32
    return %arg0, %arg1 : i32, i32
  }
}

module attributes {stable_mosaic.version = 11 : i64} {
  func.func @linear_kernel(%arg0: i32, %arg1: i32, %arg2: memref<16x32xf32, #tpu.memory_space<vmem>>, %arg3: memref<32x64xbf16, #tpu.memory_space<vmem>>, %arg4: memref<1x64xf32, #tpu.memory_space<vmem>>, %arg5: memref<16x64xbf16, #tpu.memory_space<vmem>>) attributes {dimension_semantics = [#tpu.dimension_semantics<parallel>, #tpu.dimension_semantics<parallel>], iteration_bounds = array<i64: 1, 1>, scalar_prefetch = 0 : i64, scratch_operands = 0 : i64, tpu.core_type = #tpu.core_type<tc>, window_params = [{transform_indices = @transform_0, window_bounds = array<i64: 16, 32>}, {transform_indices = @transform_1, window_bounds = array<i64: 32, 64>}, {transform_indices = @transform_2, window_bounds = array<i64: 1, 64>}, {transform_indices = @transform_3, window_bounds = array<i64: 16, 64>}]} {
    %c0 = arith.constant 0 : index
    %c0_0 = arith.constant 0 : index
    %0 = vector.load %arg2[%c0, %c0_0] : memref<16x32xf32, #tpu.memory_space<vmem>>, vector<16x32xf32>
    %1 = arith.truncf %0 : vector<16x32xf32> to vector<16x32xbf16>
    %c0_1 = arith.constant 0 : index
    %c0_2 = arith.constant 0 : index
    %2 = vector.load %arg3[%c0_1, %c0_2] : memref<32x64xbf16, #tpu.memory_space<vmem>>, vector<32x64xbf16>
    %cst = arith.constant dense<0.000000e+00> : vector<16x64xf32>
    %3 = tpu.matmul %1, %2, %cst {dimension_numbers = #tpu.dot_dimension_numbers<[1], [0], [0], [1], [0, 0, 1, 1], [], []>} : vector<16x32xbf16>, vector<32x64xbf16>, vector<16x64xf32> -> vector<16x64xf32>
    %c0_3 = arith.constant 0 : index
    %c0_4 = arith.constant 0 : index
    %4 = vector.load %arg4[%c0_3, %c0_4] : memref<1x64xf32, #tpu.memory_space<vmem>>, vector<1x64xf32>
    %5 = vector.broadcast %4 : vector<1x64xf32> to vector<16x64xf32>
    %6 = arith.addf %3, %5 : vector<16x64xf32>
    %7 = arith.truncf %6 : vector<16x64xf32> to vector<16x64xbf16>
    %c0_5 = arith.constant 0 : index
    %c0_6 = arith.constant 0 : index
    %8 = vector.load %arg5[%c0_5, %c0_6] : memref<16x64xbf16, #tpu.memory_space<vmem>>, vector<16x64xbf16>
    tpu.vector_store %arg5[%c0_5, %c0_6], %7 {strides = array<i32>} : memref<16x64xbf16, #tpu.memory_space<vmem>>, vector<16x64xbf16>,
    return
  }
  func.func @transform_0(%arg0: i32, %arg1: i32) -> (i32, i32) {
    %c0_i32 = arith.constant 0 : i32
    %c0_i32_0 = arith.constant 0 : i32
    return %arg0, %c0_i32 : i32, i32
  }
  func.func @transform_1(%arg0: i32, %arg1: i32) -> (i32, i32) {
    %c0_i32 = arith.constant 0 : i32
    %c0_i32_0 = arith.constant 0 : i32
    return %c0_i32, %arg1 : i32, i32
  }
  func.func @transform_2(%arg0: i32, %arg1: i32) -> (i32, i32) {
    %c0_i32 = arith.constant 0 : i32
    %c0_i32_0 = arith.constant 0 : i32
    return %c0_i32, %arg1 : i32, i32
  }
  func.func @transform_3(%arg0: i32, %arg1: i32) -> (i32, i32) {
    %c0_i32 = arith.constant 0 : i32
    return %arg0, %arg1 : i32, i32
  }
}

module attributes {stable_mosaic.version = 11 : i64} {
  func.func @ffn_add_ln_kernel(%arg0: i32, %arg1: i32, %arg2: memref<16x32xf32, #tpu.memory_space<vmem>>, %arg3: memref<32x64xbf16, #tpu.memory_space<vmem>>, %arg4: memref<1x64xf32, #tpu.memory_space<vmem>>, %arg5: memref<64x32xbf16, #tpu.memory_space<vmem>>, %arg6: memref<1x32xf32, #tpu.memory_space<vmem>>, %arg7: memref<1x32xf32, #tpu.memory_space<vmem>>, %arg8: memref<1x32xf32, #tpu.memory_space<vmem>>, %arg9: memref<16x32xf32, #tpu.memory_space<vmem>>, %arg10: memref<16x32xf32, #tpu.memory_space<vmem>>) attributes {dimension_semantics = [#tpu.dimension_semantics<parallel>, #tpu.dimension_semantics<arbitrary>], iteration_bounds = array<i64: 1, 1>, scalar_prefetch = 0 : i64, scratch_operands = 1 : i64, tpu.core_type = #tpu.core_type<tc>, window_params = [{transform_indices = @transform_0, window_bounds = array<i64: 16, 32>}, {transform_indices = @transform_1, window_bounds = array<i64: 32, 64>}, {transform_indices = @transform_2, window_bounds = array<i64: 1, 64>}, {transform_indices = @transform_3, window_bounds = array<i64: 64, 32>}, {pipeline_mode = #tpu.pipeline_mode<synchronous>, transform_indices = @transform_4, window_bounds = array<i64: 1, 32>}, {pipeline_mode = #tpu.pipeline_mode<synchronous>, transform_indices = @transform_5, window_bounds = array<i64: 1, 32>}, {pipeline_mode = #tpu.pipeline_mode<synchronous>, transform_indices = @transform_6, window_bounds = array<i64: 1, 32>}, {transform_indices = @transform_7, window_bounds = array<i64: 16, 32>}]} {
    %c0_i32 = arith.constant 0 : i32
    %0 = arith.cmpi eq, %arg1, %c0_i32 : i32
    %1 = arith.extui %0 : i1 to i32
    %c0_i32_0 = arith.constant 0 : i32
    %2 = arith.cmpi ne, %1, %c0_i32_0 : i32
    scf.if %2 {
      %cst_16 = arith.constant 0.000000e+00 : f32
      %21 = vector.broadcast %cst_16 : f32 to vector<16x32xf32>
      %c0_17 = arith.constant 0 : index
      %c0_18 = arith.constant 0 : index
      %22 = vector.load %arg10[%c0_17, %c0_18] : memref<16x32xf32, #tpu.memory_space<vmem>>, vector<16x32xf32>
      tpu.vector_store %arg10[%c0_17, %c0_18], %21 {strides = array<i32>} : memref<16x32xf32, #tpu.memory_space<vmem>>, vector<16x32xf32>,
    } else {
    }
    %c0 = arith.constant 0 : index
    %c0_1 = arith.constant 0 : index
    %3 = vector.load %arg2[%c0, %c0_1] : memref<16x32xf32, #tpu.memory_space<vmem>>, vector<16x32xf32>
    %4 = arith.truncf %3 : vector<16x32xf32> to vector<16x32xbf16>
    %c0_2 = arith.constant 0 : index
    %c0_3 = arith.constant 0 : index
    %5 = vector.load %arg3[%c0_2, %c0_3] : memref<32x64xbf16, #tpu.memory_space<vmem>>, vector<32x64xbf16>
    %cst = arith.constant dense<0.000000e+00> : vector<16x64xf32>
    %6 = tpu.matmul %4, %5, %cst {dimension_numbers = #tpu.dot_dimension_numbers<[1], [0], [0], [1], [0, 0, 1, 1], [], []>} : vector<16x32xbf16>, vector<32x64xbf16>, vector<16x64xf32> -> vector<16x64xf32>
    %c0_4 = arith.constant 0 : index
    %c0_5 = arith.constant 0 : index
    %7 = vector.load %arg4[%c0_4, %c0_5] : memref<1x64xf32, #tpu.memory_space<vmem>>, vector<1x64xf32>
    %8 = vector.broadcast %7 : vector<1x64xf32> to vector<16x64xf32>
    %9 = arith.addf %6, %8 : vector<16x64xf32>
    %cst_6 = arith.constant 0.000000e+00 : f32
    %10 = vector.broadcast %cst_6 : f32 to vector<16x64xf32>
    %11 = arith.maximumf %9, %10 : vector<16x64xf32>
    %c0_7 = arith.constant 0 : index
    %c0_8 = arith.constant 0 : index
    %12 = vector.load %arg10[%c0_7, %c0_8] : memref<16x32xf32, #tpu.memory_space<vmem>>, vector<16x32xf32>
    %13 = arith.truncf %11 : vector<16x64xf32> to vector<16x64xbf16>
    %c0_9 = arith.constant 0 : index
    %c0_10 = arith.constant 0 : index
    %14 = vector.load %arg5[%c0_9, %c0_10] : memref<64x32xbf16, #tpu.memory_space<vmem>>, vector<64x32xbf16>
    %cst_11 = arith.constant dense<0.000000e+00> : vector<16x32xf32>
    %15 = tpu.matmul %13, %14, %cst_11 {dimension_numbers = #tpu.dot_dimension_numbers<[1], [0], [0], [1], [0, 0, 1, 1], [], []>} : vector<16x64xbf16>, vector<64x32xbf16>, vector<16x32xf32> -> vector<16x32xf32>
    %16 = arith.addf %12, %15 : vector<16x32xf32>
    %c0_12 = arith.constant 0 : index
    %c0_13 = arith.constant 0 : index
    %17 = vector.load %arg10[%c0_12, %c0_13] : memref<16x32xf32, #tpu.memory_space<vmem>>, vector<16x32xf32>
    tpu.vector_store %arg10[%c0_12, %c0_13], %16 {strides = array<i32>} : memref<16x32xf32, #tpu.memory_space<vmem>>, vector<16x32xf32>,
    %c0_i32_14 = arith.constant 0 : i32
    %18 = arith.cmpi eq, %arg1, %c0_i32_14 : i32
    %19 = arith.extui %18 : i1 to i32
    %c0_i32_15 = arith.constant 0 : i32
    %20 = arith.cmpi ne, %19, %c0_i32_15 : i32
    scf.if %20 {
      %c0_16 = arith.constant 0 : index
      %c0_17 = arith.constant 0 : index
      %21 = vector.load %arg2[%c0_16, %c0_17] : memref<16x32xf32, #tpu.memory_space<vmem>>, vector<16x32xf32>
      %c0_18 = arith.constant 0 : index
      %c0_19 = arith.constant 0 : index
      %22 = vector.load %arg10[%c0_18, %c0_19] : memref<16x32xf32, #tpu.memory_space<vmem>>, vector<16x32xf32>
      %23 = arith.addf %21, %22 : vector<16x32xf32>
      %c0_20 = arith.constant 0 : index
      %c0_21 = arith.constant 0 : index
      %24 = vector.load %arg6[%c0_20, %c0_21] : memref<1x32xf32, #tpu.memory_space<vmem>>, vector<1x32xf32>
      %25 = vector.broadcast %24 : vector<1x32xf32> to vector<16x32xf32>
      %26 = arith.addf %23, %25 : vector<16x32xf32>
      %c0_22 = arith.constant 0 : index
      %c0_23 = arith.constant 0 : index
      %27 = vector.load %arg7[%c0_22, %c0_23] : memref<1x32xf32, #tpu.memory_space<vmem>>, vector<1x32xf32>
      %c0_24 = arith.constant 0 : index
      %c0_25 = arith.constant 0 : index
      %28 = vector.load %arg8[%c0_24, %c0_25] : memref<1x32xf32, #tpu.memory_space<vmem>>, vector<1x32xf32>
      %cst_26 = arith.constant dense<0.000000e+00> : vector<16xf32>
      %29 = vector.multi_reduction <add>, %26, %cst_26 [1] : vector<16x32xf32> to vector<16xf32>
      %30 = vector.shape_cast %29 : vector<16xf32> to vector<16x1xf32>
      %cst_27 = arith.constant 3.200000e+01 : f32
      %31 = vector.broadcast %cst_27 : f32 to vector<16x1xf32>
      %32 = arith.divf %30, %31 : vector<16x1xf32>
      %33 = vector.broadcast %32 : vector<16x1xf32> to vector<16x32xf32>
      %34 = arith.subf %26, %33 : vector<16x32xf32>
      %35 = arith.mulf %34, %34 : vector<16x32xf32>
      %cst_28 = arith.constant dense<0.000000e+00> : vector<16xf32>
      %36 = vector.multi_reduction <add>, %35, %cst_28 [1] : vector<16x32xf32> to vector<16xf32>
      %37 = vector.shape_cast %36 : vector<16xf32> to vector<16x1xf32>
      %cst_29 = arith.constant 3.200000e+01 : f32
      %38 = vector.broadcast %cst_29 : f32 to vector<16x1xf32>
      %39 = arith.divf %37, %38 : vector<16x1xf32>
      %40 = vector.broadcast %32 : vector<16x1xf32> to vector<16x32xf32>
      %41 = arith.subf %26, %40 : vector<16x32xf32>
      %cst_30 = arith.constant 9.99999974E-6 : f32
      %42 = vector.broadcast %cst_30 : f32 to vector<16x1xf32>
      %43 = arith.addf %39, %42 : vector<16x1xf32>
      %44 = math.rsqrt %43 : vector<16x1xf32>
      %45 = vector.broadcast %44 : vector<16x1xf32> to vector<16x32xf32>
      %46 = arith.mulf %41, %45 : vector<16x32xf32>
      %47 = vector.broadcast %27 : vector<1x32xf32> to vector<16x32xf32>
      %48 = arith.mulf %46, %47 : vector<16x32xf32>
      %49 = vector.broadcast %28 : vector<1x32xf32> to vector<16x32xf32>
      %50 = arith.addf %48, %49 : vector<16x32xf32>
      %c0_31 = arith.constant 0 : index
      %c0_32 = arith.constant 0 : index
      %51 = vector.load %arg9[%c0_31, %c0_32] : memref<16x32xf32, #tpu.memory_space<vmem>>, vector<16x32xf32>
      tpu.vector_store %arg9[%c0_31, %c0_32], %50 {strides = array<i32>} : memref<16x32xf32, #tpu.memory_space<vmem>>, vector<16x32xf32>,
    } else {
    }
    return
  }
  func.func @transform_0(%arg0: i32, %arg1: i32) -> (i32, i32) {
    %c0_i32 = arith.constant 0 : i32
    %c0_i32_0 = arith.constant 0 : i32
    return %arg0, %c0_i32 : i32, i32
  }
  func.func @transform_1(%arg0: i32, %arg1: i32) -> (i32, i32) {
    %c0_i32 = arith.constant 0 : i32
    %c0_i32_0 = arith.constant 0 : i32
    return %c0_i32, %arg1 : i32, i32
  }
  func.func @transform_2(%arg0: i32, %arg1: i32) -> (i32, i32) {
    %c0_i32 = arith.constant 0 : i32
    %c0_i32_0 = arith.constant 0 : i32
    return %c0_i32, %arg1 : i32, i32
  }
  func.func @transform_3(%arg0: i32, %arg1: i32) -> (i32, i32) {
    %c0_i32 = arith.constant 0 : i32
    %c0_i32_0 = arith.constant 0 : i32
    return %arg1, %c0_i32 : i32, i32
  }
  func.func @transform_4(%arg0: i32, %arg1: i32) -> (i32, i32) {
    %c0_i32 = arith.constant 0 : i32
    %c0_i32_0 = arith.constant 0 : i32
    %c0_i32_1 = arith.constant 0 : i32
    return %c0_i32, %c0_i32_0 : i32, i32
  }
  func.func @transform_5(%arg0: i32, %arg1: i32) -> (i32, i32) {
    %c0_i32 = arith.constant 0 : i32
    %c0_i32_0 = arith.constant 0 : i32
    %c0_i32_1 = arith.constant 0 : i32
    return %c0_i32, %c0_i32_0 : i32, i32
  }
  func.func @transform_6(%arg0: i32, %arg1: i32) -> (i32, i32) {
    %c0_i32 = arith.constant 0 : i32
    %c0_i32_0 = arith.constant 0 : i32
    %c0_i32_1 = arith.constant 0 : i32
    return %c0_i32, %c0_i32_0 : i32, i32
  }
  func.func @transform_7(%arg0: i32, %arg1: i32) -> (i32, i32) {
    %c0_i32 = arith.constant 0 : i32
    %c0_i32_0 = arith.constant 0 : i32
    return %arg0, %c0_i32 : i32, i32
  }
}

</mosaic_0001>

<llo_original>
// kernel: decoder_layer_forward.9
$region0: #{decoder_layer_forward.9}
  #allocation0 [shape = 'u32[]', space=smem, size = 0x4, offset = 0x4, fixed_abs, tag = 'smem constant byte address 0x4 - core index']
  #allocation1 [shape = 'u32[144,128]{1,0:T(1,128)}', space=vmem, size = 0x12000, scoped, tag = 'internal scratch']
  %s0 = inlined_call_operand.vmem [shape: f32[16,32], index: 0, kind: input, shape index: {}]
  %s1 = inlined_call_operand.vmem [shape: bf16[32,32], index: 1, kind: input, shape index: {}]
  %s2 = inlined_call_operand.vmem [shape: f32[1,32], index: 2, kind: input, shape index: {}]
  %s3 = inlined_call_operand.vmem [shape: bf16[16,32], index: 3, kind: output, shape index: {}]
  %s4 = sld [smem:[#allocation0]]
  $region22: #{decoder_layer_forward.9} parent=0
    _
  %s6 = ssub.s32 1, %s4
  %s7 = scalar_select 0, %s6, %s4
  // Predicated region
  $region2: #{decoder_layer_forward.9} parent=0 // pred_check
    _
  $region3: #{decoder_layer_forward.9} parent=0 // pred_check_branch
    %9 = sbr.rel (0) target = $region5
  $region4: #{decoder_layer_forward.9} parent=0 // pred_region
    _
  $region5: #{decoder_layer_forward.9} parent=0 // pred_fallthru
    _
  // Predicated region
  $region6: #{decoder_layer_forward.9} parent=0 // pred_check
    _
  $region7: #{decoder_layer_forward.9} parent=0 // pred_check_branch
    %11 = sbr.rel (0) target = $region9
  $region8: #{decoder_layer_forward.9} parent=0 // pred_region
    _
  $region9: #{decoder_layer_forward.9} parent=0 // pred_fallthru
    _
  // Predicated region
  $region10: #{decoder_layer_forward.9} parent=0 // pred_check
    _
  $region11: #{decoder_layer_forward.9} parent=0 // pred_check_branch
    %13 = sbr.rel (0) target = $region13
  $region12: #{decoder_layer_forward.9} parent=0 // pred_region
    _
  $region13: #{decoder_layer_forward.9} parent=0 // pred_fallthru
    _
  %v15 = vld [vmem:[%s0] sm:$0xff]
  %v16 = vld [vmem:[%s0 + $0x8] sm:$0xff]
  %v17 = vpack.c.bf16 %v16, %v15
  %v18 = vld [vmem:[%s1] sm:$0xf]
  %v19 = vld [vmem:[%s1 + $0x4] sm:$0xf]
  %v20 = vld [vmem:[%s1 + $0x8] sm:$0xf]
  %v21 = vld [vmem:[%s1 + $0xc] sm:$0xf]
  %v22 = vld [vmem:[%s2] sm:$0x1]
  %v24 = vlaneseq
  %v25 = vshrl.u32 %v24, 7
  %v26 = vsub.s32 0, %v25
  %v27 = vrot.slane %v22, %v26
  %v33 = vunpack.c.l.b16 %v18
  %v34 = vunpack.c.l.b16 %v19
  %v35 = vunpack.c.l.b16 %v20
  %v36 = vunpack.c.l.b16 %v21
  %v37 = vpack.c.b16 %v34, %v33
  %v38 = vpack.c.b16 %v36, %v35
  %vm41 = vcmask 261120
  %v43 = vsel %vm41, %v17, 0
  %45 = vmatprep.subr.bf16.mxu0 0
  %46 = vmatpush1.bf16.msra.mxu0 %v37
  %47 = vmatprep.subr.bf16.mxu0 0
  %48 = vmatpush1.bf16.msra.mxu0 %v38
  %49 = vmatprep.subr.bf16.mxu0 0
  %50 = vmatpush1.bf16.msra.mxu0 0
  %51 = vmatprep.subr.bf16.mxu0 0
  %52 = vmatpush1.bf16.msra.mxu0 0
  %53 = vmatprep.subr.bf16.mxu0 0
  %54 = vmatpush1.bf16.msra.mxu0 0
  %55 = vmatprep.subr.bf16.mxu0 0
  %56 = vmatpush1.bf16.msra.mxu0 0
  %57 = vmatprep.subr.bf16.mxu0 0
  %58 = vmatpush1.bf16.msra.mxu0 0
  %59 = vmatprep.subr.bf16.mxu0 0
  %60 = vmatpush1.bf16.msra.mxu0 0
  %61 = vmatprep.subr.bf16.mxu0 0
  %62 = vmatpush1.bf16.msra.mxu0 0
  %63 = vmatprep.subr.bf16.mxu0 0
  %64 = vmatpush1.bf16.msra.mxu0 0
  %65 = vmatprep.subr.bf16.mxu0 0
  %66 = vmatpush1.bf16.msra.mxu0 0
  %67 = vmatprep.subr.bf16.mxu0 0
  %68 = vmatpush1.bf16.msra.mxu0 0
  %69 = vmatprep.subr.bf16.mxu0 0
  %70 = vmatpush1.bf16.msra.mxu0 0
  %71 = vmatprep.subr.bf16.mxu0 0
  %72 = vmatpush1.bf16.msra.mxu0 0
  %73 = vmatprep.subr.bf16.mxu0 0
  %74 = vmatpush1.bf16.msra.mxu0 0
  %75 = vmatprep.subr.bf16.mxu0 0
  %76 = vmatpush1.bf16.msra.mxu0 0
  %77 = vmatprep.mubr.bf16.mxu0 0
  %78 = vmatmul.mubr.bf16.gmra.mrb[0].mxu0 %v43
  %v79 = vpop.f32.mrb[0].mxu0
  %v80 = vadd.f32 %v27, %v79
  %v81 = vpop.f32.mrb[0].mxu0
  %v82 = vpop.f32.mrb[0].mxu0
  %v83 = vadd.f32 %v27, %v82
  %v84 = vpop.f32.mrb[0].mxu0
  %85 = vdwg.mxu0
  %v86 = vpack.c.bf16 %v83, %v80
  %v88 = vunpack.c.l.b16 %v86
  %v89 = vunpack.c.h.b16 %v86
  %v90 = vpack.c.b16 %v88, %v88
  %v91 = vpack.c.b16 %v89, %v89
  %vm94 = vcmask 257024
  %95 = vst.msk [vmem:[%s3] sm:$0xf] %vm94, %v90
  %96 = vst.msk [vmem:[%s3 + $0x4] sm:$0xf] %vm94, %v91
  // Predicated region
  $region14: #{decoder_layer_forward.9} parent=0 // pred_check
    _
  $region15: #{decoder_layer_forward.9} parent=0 // pred_check_branch
    %98 = sbr.rel (0) target = $region17
  $region16: #{decoder_layer_forward.9} parent=0 // pred_region
    _
  $region17: #{decoder_layer_forward.9} parent=0 // pred_fallthru
    _
  // Predicated region
  $region18: #{decoder_layer_forward.9} parent=0 // pred_check
    _
  $region19: #{decoder_layer_forward.9} parent=0 // pred_check_branch
    %100 = sbr.rel (0) target = $region21
  $region20: #{decoder_layer_forward.9} parent=0 // pred_region
    _
  $region21: #{decoder_layer_forward.9} parent=0 // pred_fallthru
    _

// kernel: decoder_layer_forward.12
$region0: #{decoder_layer_forward.12}
  #allocation0 [shape = 'u32[]', space=smem, size = 0x4, offset = 0x4, fixed_abs, tag = 'smem constant byte address 0x4 - core index']
  #allocation1 [shape = 'u32[144,128]{1,0:T(1,128)}', space=vmem, size = 0x12000, scoped, tag = 'internal scratch']
  %s0 = inlined_call_operand.vmem [shape: bf16[16,32], index: 0, kind: input, shape index: {}]
  %s1 = inlined_call_operand.vmem [shape: f32[16,32], index: 1, kind: input, shape index: {}]
  %s2 = inlined_call_operand.vmem [shape: bf16[32,32], index: 2, kind: input, shape index: {}]
  %s3 = inlined_call_operand.vmem [shape: f32[1,32], index: 3, kind: input, shape index: {}]
  %s4 = inlined_call_operand.vmem [shape: f32[1,32], index: 4, kind: input, shape index: {}]
  %s5 = inlined_call_operand.vmem [shape: f32[1,32], index: 5, kind: input, shape index: {}]
  %s6 = inlined_call_operand.vmem [shape: f32[16,32], index: 6, kind: output, shape index: {}]
  %s7 = sld [smem:[#allocation0]]
  $region34: #{decoder_layer_forward.12} parent=0
    _
  %s9 = ssub.s32 1, %s7
  %s10 = scalar_select 0, %s9, %s7
  // Predicated region
  $region2: #{decoder_layer_forward.12} parent=0 // pred_check
    _
  $region3: #{decoder_layer_forward.12} parent=0 // pred_check_branch
    %12 = sbr.rel (0) target = $region5
  $region4: #{decoder_layer_forward.12} parent=0 // pred_region
    _
  $region5: #{decoder_layer_forward.12} parent=0 // pred_fallthru
    _
  // Predicated region
  $region6: #{decoder_layer_forward.12} parent=0 // pred_check
    _
  $region7: #{decoder_layer_forward.12} parent=0 // pred_check_branch
    %14 = sbr.rel (0) target = $region9
  $region8: #{decoder_layer_forward.12} parent=0 // pred_region
    _
  $region9: #{decoder_layer_forward.12} parent=0 // pred_fallthru
    _
  // Predicated region
  $region10: #{decoder_layer_forward.12} parent=0 // pred_check
    _
  $region11: #{decoder_layer_forward.12} parent=0 // pred_check_branch
    %16 = sbr.rel (0) target = $region13
  $region12: #{decoder_layer_forward.12} parent=0 // pred_region
    _
  $region13: #{decoder_layer_forward.12} parent=0 // pred_fallthru
    _
  // Predicated region
  $region14: #{decoder_layer_forward.12} parent=0 // pred_check
    _
  $region15: #{decoder_layer_forward.12} parent=0 // pred_check_branch
    %18 = sbr.rel (0) target = $region17
  $region16: #{decoder_layer_forward.12} parent=0 // pred_region
    _
  $region17: #{decoder_layer_forward.12} parent=0 // pred_fallthru
    _
  // Predicated region
  $region18: #{decoder_layer_forward.12} parent=0 // pred_check
    _
  $region19: #{decoder_layer_forward.12} parent=0 // pred_check_branch
    %20 = sbr.rel (0) target = $region21
  $region20: #{decoder_layer_forward.12} parent=0 // pred_region
    _
  $region21: #{decoder_layer_forward.12} parent=0 // pred_fallthru
    _
  // Predicated region
  $region22: #{decoder_layer_forward.12} parent=0 // pred_check
    _
  $region23: #{decoder_layer_forward.12} parent=0 // pred_check_branch
    %22 = sbr.rel (0) target = $region25
  $region24: #{decoder_layer_forward.12} parent=0 // pred_region
    _
  $region25: #{decoder_layer_forward.12} parent=0 // pred_fallthru
    _
  %v24 = vld [vmem:[%s0] sm:$0xf]
  %v25 = vld [vmem:[%s0 + $0x4] sm:$0xf]
  %v26 = vld [vmem:[%s2] sm:$0xf]
  %v27 = vld [vmem:[%s2 + $0x4] sm:$0xf]
  %v28 = vld [vmem:[%s2 + $0x8] sm:$0xf]
  %v29 = vld [vmem:[%s2 + $0xc] sm:$0xf]
  %v30 = vld [vmem:[%s3] sm:$0x1]
  %v32 = vlaneseq
  %v33 = vshrl.u32 %v32, 7
  %v34 = vsub.s32 0, %v33
  %v35 = vrot.slane %v30, %v34
  %v39 = vunpack.c.l.b16 %v24
  %v40 = vunpack.c.l.b16 %v25
  %v41 = vpack.c.b16 %v40, %v39
  %v46 = vunpack.c.l.b16 %v26
  %v47 = vunpack.c.l.b16 %v27
  %v48 = vunpack.c.l.b16 %v28
  %v49 = vunpack.c.l.b16 %v29
  %v50 = vpack.c.b16 %v47, %v46
  %v51 = vpack.c.b16 %v49, %v48
  %vm54 = vcmask 261120
  %v56 = vsel %vm54, %v41, 0
  %58 = vmatprep.subr.bf16.mxu0 0
  %59 = vmatpush1.bf16.msra.mxu0 %v50
  %60 = vmatprep.subr.bf16.mxu0 0
  %61 = vmatpush1.bf16.msra.mxu0 %v51
  %62 = vmatprep.subr.bf16.mxu0 0
  %63 = vmatpush1.bf16.msra.mxu0 0
  %64 = vmatprep.subr.bf16.mxu0 0
  %65 = vmatpush1.bf16.msra.mxu0 0
  %66 = vmatprep.subr.bf16.mxu0 0
  %67 = vmatpush1.bf16.msra.mxu0 0
  %68 = vmatprep.subr.bf16.mxu0 0
  %69 = vmatpush1.bf16.msra.mxu0 0
  %70 = vmatprep.subr.bf16.mxu0 0
  %71 = vmatpush1.bf16.msra.mxu0 0
  %72 = vmatprep.subr.bf16.mxu0 0
  %73 = vmatpush1.bf16.msra.mxu0 0
  %74 = vmatprep.subr.bf16.mxu0 0
  %75 = vmatpush1.bf16.msra.mxu0 0
  %76 = vmatprep.subr.bf16.mxu0 0
  %77 = vmatpush1.bf16.msra.mxu0 0
  %78 = vmatprep.subr.bf16.mxu0 0
  %79 = vmatpush1.bf16.msra.mxu0 0
  %80 = vmatprep.subr.bf16.mxu0 0
  %81 = vmatpush1.bf16.msra.mxu0 0
  %82 = vmatprep.subr.bf16.mxu0 0
  %83 = vmatpush1.bf16.msra.mxu0 0
  %84 = vmatprep.subr.bf16.mxu0 0
  %85 = vmatpush1.bf16.msra.mxu0 0
  %86 = vmatprep.subr.bf16.mxu0 0
  %87 = vmatpush1.bf16.msra.mxu0 0
  %88 = vmatprep.subr.bf16.mxu0 0
  %89 = vmatpush1.bf16.msra.mxu0 0
  %90 = vmatprep.mubr.bf16.mxu0 0
  %91 = vmatmul.mubr.bf16.gmra.mrb[0].mxu0 %v56
  %v92 = vpop.f32.mrb[0].mxu0
  %v93 = vadd.f32 %v35, %v92
  %v94 = vpop.f32.mrb[0].mxu0
  %v95 = vpop.f32.mrb[0].mxu0
  %v96 = vadd.f32 %v35, %v95
  %v97 = vpop.f32.mrb[0].mxu0
  %98 = vdwg.mxu0
  %v99 = vld [vmem:[%s1] sm:$0xff]
  %v100 = vld [vmem:[%s1 + $0x8] sm:$0xff]
  %v101 = vadd.f32 %v99, %v93
  %v102 = vadd.f32 %v100, %v96
  %v103 = vld [vmem:[%s4] sm:$0x1]
  %v104 = vld [vmem:[%s5] sm:$0x1]
  %v105 = vsel %vm54, %v101, 0.0
  %106 = vadd.xlane.f32.xlu0 %v105
  %v107 = vpop.xlane.xlu0 %106
  %v108 = vsel %vm54, %v102, 0.0
  %109 = vadd.xlane.f32.xlu0 %v108
  %v110 = vpop.xlane.xlu0 %109
  %v111 = vrcp.pop 32.0
  %v112 = vmul.f32 %v107, %v111
  %v113 = vmul.f32 %v110, %v111
  %v114 = vsub.f32 %v101, %v112
  %v115 = vsub.f32 %v102, %v113
  %v116 = vmul.f32 %v114, %v114
  %v117 = vmul.f32 %v115, %v115
  %v118 = vsel %vm54, %v116, 0.0
  %119 = vadd.xlane.f32.xlu0 %v118
  %v120 = vpop.xlane.xlu0 %119
  %v121 = vsel %vm54, %v117, 0.0
  %122 = vadd.xlane.f32.xlu0 %v121
  %v123 = vpop.xlane.xlu0 %122
  %v124 = vmul.f32 %v120, %v111
  %v125 = vmul.f32 %v123, %v111
  %v126 = vadd.f32 %v124, 1e-05
  %v127 = vadd.f32 %v125, 1e-05
  %v128 = vrsqrt.pop %v126
  %v129 = vrsqrt.pop %v127
  %v130 = vmul.f32 %v114, %v128
  %v131 = vmul.f32 %v115, %v129
  %v133 = vlaneseq
  %v134 = vshrl.u32 %v133, 7
  %v135 = vsub.s32 0, %v134
  %v136 = vrot.slane %v103, %v135
  %v138 = vmul.f32 %v130, %v136
  %v139 = vmul.f32 %v131, %v136
  %v141 = vlaneseq
  %v142 = vshrl.u32 %v141, 7
  %v143 = vsub.s32 0, %v142
  %v144 = vrot.slane %v104, %v143
  %v146 = vadd.f32 %v138, %v144
  %v147 = vadd.f32 %v139, %v144
  %148 = vst.msk [vmem:[%s6] sm:$0xff] %vm54, %v146
  %149 = vst.msk [vmem:[%s6 + $0x8] sm:$0xff] %vm54, %v147
  // Predicated region
  $region26: #{decoder_layer_forward.12} parent=0 // pred_check
    _
  $region27: #{decoder_layer_forward.12} parent=0 // pred_check_branch
    %151 = sbr.rel (0) target = $region29
  $region28: #{decoder_layer_forward.12} parent=0 // pred_region
    _
  $region29: #{decoder_layer_forward.12} parent=0 // pred_fallthru
    _
  // Predicated region
  $region30: #{decoder_layer_forward.12} parent=0 // pred_check
    _
  $region31: #{decoder_layer_forward.12} parent=0 // pred_check_branch
    %153 = sbr.rel (0) target = $region33
  $region32: #{decoder_layer_forward.12} parent=0 // pred_region
    _
  $region33: #{decoder_layer_forward.12} parent=0 // pred_fallthru
    _

// kernel: decoder_layer_forward.10
$region0: #{decoder_layer_forward.10}
  #allocation0 [shape = 'u32[]', space=smem, size = 0x4, offset = 0x4, fixed_abs, tag = 'smem constant byte address 0x4 - core index']
  #allocation1 [shape = 'u32[144,128]{1,0:T(1,128)}', space=vmem, size = 0x12000, scoped, tag = 'internal scratch']
  %s0 = inlined_call_operand.hbm [shape: f32[16,32], index: 0, kind: input, shape index: {}]
  %s1 = inlined_call_operand.vmem [shape: bf16[32,64], index: 1, kind: input, shape index: {}]
  %s2 = inlined_call_operand.vmem [shape: f32[1,64], index: 2, kind: input, shape index: {}]
  %s3 = inlined_call_operand.vmem [shape: bf16[16,64], index: 3, kind: output, shape index: {}]
  %s4 = sld [smem:[#allocation0]]
  $region26: #{decoder_layer_forward.10} parent=0
    _
  %s6 = ssub.s32 1, %s4
  %s7 = scalar_select 0, %s6, %s4
  $region1: #{decoder_layer_forward.10} parent=0
    #allocation2 [shape = 'u8[8192]{0}', space=vmem, size = 0x2000, scoped, tag = 'input window, operand 0, single buffered']
    #allocation3 [shape = 's32[1]{0}', space=sflag, size = 0x4, scoped, tag = 'scoped memory for decoder_layer_forward.10']
    %8 = vsyncpa [#allocation3], 0
    // Predicated region
    $region2: #{decoder_layer_forward.10} parent=1 // pred_check
      _
    $region3: #{decoder_layer_forward.10} parent=1 // pred_check_branch
      %10 = sbr.rel (0) target = $region5
    $region4: #{decoder_layer_forward.10} parent=1 // pred_region
      %s12 = ssub.s32 256, 256
      %13 = vsyncadd [#allocation3], %s12
      %s14 = sshll.u32 [#allocation2], 4
      %s15 = int_to_ptr.vmem [resolvable:$true] %s14
      %20 = dma.hbm_to_vmem [thread:$0]  %s0, 256, %s15, [#allocation3], 128, 128, 8
    $region5: #{decoder_layer_forward.10} parent=1 // pred_fallthru
      _
    // Predicated region
    $region6: #{decoder_layer_forward.10} parent=1 // pred_check
      _
    $region7: #{decoder_layer_forward.10} parent=1 // pred_check_branch
      %22 = sbr.rel (0) target = $region9
    $region8: #{decoder_layer_forward.10} parent=1 // pred_region
      _
    $region9: #{decoder_layer_forward.10} parent=1 // pred_fallthru
      _
    // Predicated region
    $region10: #{decoder_layer_forward.10} parent=1 // pred_check
      _
    $region11: #{decoder_layer_forward.10} parent=1 // pred_check_branch
      %24 = sbr.rel (0) target = $region13
    $region12: #{decoder_layer_forward.10} parent=1 // pred_region
      _
    $region13: #{decoder_layer_forward.10} parent=1 // pred_fallthru
      _
    // Predicated region
    $region14: #{decoder_layer_forward.10} parent=1 // pred_check
      _
    $region15: #{decoder_layer_forward.10} parent=1 // pred_check_branch
      %26 = sbr.rel (0) target = $region17
    $region16: #{decoder_layer_forward.10} parent=1 // pred_region
      %27 = dma.done [#allocation3], 256
    $region17: #{decoder_layer_forward.10} parent=1 // pred_fallthru
      _
    %v29 = vld [vmem:[#allocation2] sm:$0xff]
    %v30 = vld [vmem:[#allocation2 + $0x8] sm:$0xff]
    %v31 = vpack.c.bf16 %v30, %v29
    %v32 = vld [vmem:[%s1] sm:$0xf]
    %v33 = vld [vmem:[%s1 + $0x4] sm:$0xf]
    %v34 = vld [vmem:[%s1 + $0x8] sm:$0xf]
    %v35 = vld [vmem:[%s1 + $0xc] sm:$0xf]
    %v36 = vld [vmem:[%s2] sm:$0x1]
    %v38 = vlaneseq
    %v39 = vshrl.u32 %v38, 7
    %v40 = vsub.s32 0, %v39
    %v41 = vrot.slane %v36, %v40
    %v47 = vunpack.c.l.b16 %v32
    %v48 = vunpack.c.l.b16 %v33
    %v49 = vunpack.c.l.b16 %v34
    %v50 = vunpack.c.l.b16 %v35
    %v51 = vpack.c.b16 %v48, %v47
    %v52 = vpack.c.b16 %v50, %v49
    %vm55 = vcmask 261120
    %v57 = vsel %vm55, %v31, 0
    %59 = vmatprep.subr.bf16.mxu0 0
    %60 = vmatpush1.bf16.msra.mxu0 %v51
    %61 = vmatprep.subr.bf16.mxu0 0
    %62 = vmatpush1.bf16.msra.mxu0 %v52
    %63 = vmatprep.subr.bf16.mxu0 0
    %64 = vmatpush1.bf16.msra.mxu0 0
    %65 = vmatprep.subr.bf16.mxu0 0
    %66 = vmatpush1.bf16.msra.mxu0 0
    %67 = vmatprep.subr.bf16.mxu0 0
    %68 = vmatpush1.bf16.msra.mxu0 0
    %69 = vmatprep.subr.bf16.mxu0 0
    %70 = vmatpush1.bf16.msra.mxu0 0
    %71 = vmatprep.subr.bf16.mxu0 0
    %72 = vmatpush1.bf16.msra.mxu0 0
    %73 = vmatprep.subr.bf16.mxu0 0
    %74 = vmatpush1.bf16.msra.mxu0 0
    %75 = vmatprep.subr.bf16.mxu0 0
    %76 = vmatpush1.bf16.msra.mxu0 0
    %77 = vmatprep.subr.bf16.mxu0 0
    %78 = vmatpush1.bf16.msra.mxu0 0
    %79 = vmatprep.subr.bf16.mxu0 0
    %80 = vmatpush1.bf16.msra.mxu0 0
    %81 = vmatprep.subr.bf16.mxu0 0
    %82 = vmatpush1.bf16.msra.mxu0 0
    %83 = vmatprep.subr.bf16.mxu0 0
    %84 = vmatpush1.bf16.msra.mxu0 0
    %85 = vmatprep.subr.bf16.mxu0 0
    %86 = vmatpush1.bf16.msra.mxu0 0
    %87 = vmatprep.subr.bf16.mxu0 0
    %88 = vmatpush1.bf16.msra.mxu0 0
    %89 = vmatprep.subr.bf16.mxu0 0
    %90 = vmatpush1.bf16.msra.mxu0 0
    %91 = vmatprep.mubr.bf16.mxu0 0
    %92 = vmatmul.mubr.bf16.gmra.mrb[0].mxu0 %v57
    %v93 = vpop.f32.mrb[0].mxu0
    %v94 = vadd.f32 %v41, %v93
    %v95 = vpop.f32.mrb[0].mxu0
    %v96 = vpop.f32.mrb[0].mxu0
    %v97 = vadd.f32 %v41, %v96
    %v98 = vpop.f32.mrb[0].mxu0
    %99 = vdwg.mxu0
    %v100 = vpack.c.bf16 %v97, %v94
    %v102 = vunpack.c.l.b16 %v100
    %v103 = vunpack.c.h.b16 %v100
    %v104 = vpack.c.b16 %v102, %v102
    %v105 = vpack.c.b16 %v103, %v103
    %vm108 = vcmask 519168
    %109 = vst.msk [vmem:[%s3] sm:$0xf] %vm108, %v104
    %110 = vst.msk [vmem:[%s3 + $0x4] sm:$0xf] %vm108, %v105
    // Predicated region
    $region18: #{decoder_layer_forward.10} parent=1 // pred_check
      _
    $region19: #{decoder_layer_forward.10} parent=1 // pred_check_branch
      %112 = sbr.rel (0) target = $region21
    $region20: #{decoder_layer_forward.10} parent=1 // pred_region
      _
    $region21: #{decoder_layer_forward.10} parent=1 // pred_fallthru
      _
    // Predicated region
    $region22: #{decoder_layer_forward.10} parent=1 // pred_check
      _
    $region23: #{decoder_layer_forward.10} parent=1 // pred_check_branch
      %114 = sbr.rel (0) target = $region25
    $region24: #{decoder_layer_forward.10} parent=1 // pred_region
      _
    $region25: #{decoder_layer_forward.10} parent=1 // pred_fallthru
      _
    %115 = vsyncpa [#allocation3], 1

// kernel: decoder_layer_forward.11
$region0: #{decoder_layer_forward.11}
  #allocation0 [shape = 'u32[]', space=smem, size = 0x4, offset = 0x4, fixed_abs, tag = 'smem constant byte address 0x4 - core index']
  #allocation1 [shape = 'u32[144,128]{1,0:T(1,128)}', space=vmem, size = 0x12000, scoped, tag = 'internal scratch']
  %s0 = inlined_call_operand.vmem [shape: bf16[2,8,32], index: 0, kind: input, shape index: {}]
  %s1 = inlined_call_operand.vmem [shape: bf16[2,8,64], index: 1, kind: input, shape index: {}]
  %s2 = inlined_call_operand.vmem [shape: f32[2,8,8], index: 2, kind: input, shape index: {}]
  %s3 = inlined_call_operand.vmem [shape: bf16[2,8,32], index: 3, kind: output, shape index: {}]
  %s4 = sld [smem:[#allocation0]]
  $region45: #{decoder_layer_forward.11} parent=0
    _
  %s6 = ssub.s32 1, %s4
  %s7 = scalar_select 0, %s6, %s4
  loop: start=0, step=1, limit=4
  $region2: #{decoder_layer_forward.11} parent=0 // loop_pre_header
    _
  $region3: #{decoder_layer_forward.11} parent=0 // loop_header
    %s9 = sphi 0, %s13
    %p10 = scmp.ge.s32.totalorder %s9, 4
    %s16 = sphi 0, %s28
    %s17 = sphi 0, %s24
    %s18 = sphi 0, %s16
    %s19 = sphi 0, %s17
    %s20 = sphi 0, %s18
    %s21 = sphi 0, %s19
    %s33 = sphi 0, %s35
    %s36 = sphi 0, %s33
    %s37 = sphi 0, %s36
    %s53 = sphi 0, %s37
    %s59 = sphi 0, %s61
    %s62 = sphi 0, %s59
    %s63 = sphi 0, %s62
    %s79 = sphi 0, %s63
    %s87 = sphi 0, %s89
    %s90 = sphi 0, %s87
    %s91 = sphi 0, %s90
    %s107 = sphi 0, %s91
    %s115 = sphi 0, %s117
    %s118 = sphi 0, %s115
    %s119 = sphi 0, %s118
    %s135 = sphi 0, %s119
  $region4: #{decoder_layer_forward.11} parent=0 // loop_header_branch
    %12 = sbr.rel (%p10) target = $region8
  $region5: #{decoder_layer_forward.11} parent=0 // loop_body
    %s14 = ssub.s32 %s9, 1
    %s15 = ssub.s32 %s9, 2
    %s22 = sadd.s32 1, %s17
    %p23 = scmp.ge.s32.totalorder %s22, 1
    %s24 = scalar_select %p23, 0, %s22
    %s25 = sadd.s32 1, %s16
    %s26 = scalar_select %p23, %s25, %s16
    %p27 = scmp.ge.s32.totalorder %s26, 2
    %s28 = scalar_select %p27, 0, %s26
    %s29 = ssub.s32 %s16, %s28
    %s30 = ssub.s32 %s17, %s24
    %s31 = sor.u32 %s29, %s30
    %p32 = scmp.eq.s32.totalorder %s31, 0
    %s34 = sadd.s32 %s33, 1
    %s35 = scalar_select %p32, %s33, %s34
    %p38 = pneg %p32
    %p39 = scmp.eq.s32.totalorder %s9, 1
    %p40 = por %p38, %p39
    %p41 = scmp.ne.s32.totalorder %s33, %s36
    %p42 = scmp.eq.s32.totalorder %s9, 0
    %p43 = por %p41, %p42
    %p44 = scmp.ne.s32.totalorder %s33, %s36
    %p45 = scmp.eq.s32.totalorder %s14, 1
    %p46 = por %p44, %p45
    %p47 = scmp.ne.s32.totalorder %s36, %s37
    %p48 = scmp.eq.s32.totalorder %s14, 0
    %p49 = por %p47, %p48
    %p50 = scmp.ne.s32.totalorder %s36, %s37
    %p51 = scmp.eq.s32.totalorder %s15, 1
    %p52 = por %p50, %p51
    %p54 = scmp.ne.s32.totalorder %s37, %s53
    %p55 = scmp.eq.s32.totalorder %s15, 0
    %p56 = por %p54, %p55
    %s57 = ssub.s32 %s16, %s28
    %p58 = scmp.eq.s32.totalorder %s57, 0
    %s60 = sadd.s32 %s59, 1
    %s61 = scalar_select %p58, %s59, %s60
    %p64 = pneg %p58
    %p65 = scmp.eq.s32.totalorder %s9, 1
    %p66 = por %p64, %p65
    %p67 = scmp.ne.s32.totalorder %s59, %s62
    %p68 = scmp.eq.s32.totalorder %s9, 0
    %p69 = por %p67, %p68
    %p70 = scmp.ne.s32.totalorder %s59, %s62
    %p71 = scmp.eq.s32.totalorder %s14, 1
    %p72 = por %p70, %p71
    %p73 = scmp.ne.s32.totalorder %s62, %s63
    %p74 = scmp.eq.s32.totalorder %s14, 0
    %p75 = por %p73, %p74
    %p76 = scmp.ne.s32.totalorder %s62, %s63
    %p77 = scmp.eq.s32.totalorder %s15, 1
    %p78 = por %p76, %p77
    %p80 = scmp.ne.s32.totalorder %s63, %s79
    %p81 = scmp.eq.s32.totalorder %s15, 0
    %p82 = por %p80, %p81
    %s83 = ssub.s32 %s16, %s28
    %s84 = ssub.s32 %s17, %s24
    %s85 = sor.u32 %s83, %s84
    %p86 = scmp.eq.s32.totalorder %s85, 0
    %s88 = sadd.s32 %s87, 1
    %s89 = scalar_select %p86, %s87, %s88
    %p92 = pneg %p86
    %p93 = scmp.eq.s32.totalorder %s9, 1
    %p94 = por %p92, %p93
    %p95 = scmp.ne.s32.totalorder %s87, %s90
    %p96 = scmp.eq.s32.totalorder %s9, 0
    %p97 = por %p95, %p96
    %p98 = scmp.ne.s32.totalorder %s87, %s90
    %p99 = scmp.eq.s32.totalorder %s14, 1
    %p100 = por %p98, %p99
    %p101 = scmp.ne.s32.totalorder %s90, %s91
    %p102 = scmp.eq.s32.totalorder %s14, 0
    %p103 = por %p101, %p102
    %p104 = scmp.ne.s32.totalorder %s90, %s91
    %p105 = scmp.eq.s32.totalorder %s15, 1
    %p106 = por %p104, %p105
    %p108 = scmp.ne.s32.totalorder %s91, %s107
    %p109 = scmp.eq.s32.totalorder %s15, 0
    %p110 = por %p108, %p109
    %s111 = ssub.s32 %s16, %s28
    %s112 = ssub.s32 %s17, %s24
    %s113 = sor.u32 %s111, %s112
    %p114 = scmp.eq.s32.totalorder %s113, 0
    %s116 = sadd.s32 %s115, 1
    %s117 = scalar_select %p114, %s115, %s116
    %p120 = pneg %p114
    %p121 = scmp.eq.s32.totalorder %s9, 1
    %p122 = por %p120, %p121
    %p123 = scmp.ne.s32.totalorder %s115, %s118
    %p124 = scmp.eq.s32.totalorder %s9, 0
    %p125 = por %p123, %p124
    %p126 = scmp.ne.s32.totalorder %s115, %s118
    %p127 = scmp.eq.s32.totalorder %s14, 1
    %p128 = por %p126, %p127
    %p129 = scmp.ne.s32.totalorder %s118, %s119
    %p130 = scmp.eq.s32.totalorder %s14, 0
    %p131 = por %p129, %p130
    %p132 = scmp.ne.s32.totalorder %s118, %s119
    %p133 = scmp.eq.s32.totalorder %s15, 1
    %p134 = por %p132, %p133
    %p136 = scmp.ne.s32.totalorder %s119, %s135
    %p137 = scmp.eq.s32.totalorder %s15, 0
    %p138 = por %p136, %p137
    %p139 = scmp.le.s32.totalorder 1, %s9
    %p140 = scmp.lt.s32.totalorder %s9, 3
    %p141 = pnand %p139, %p140
    %p142 = pneg %p141
    // Predicated region
    $region9: #{decoder_layer_forward.11} parent=5 // pred_check
      _
    $region10: #{decoder_layer_forward.11} parent=5 // pred_check_branch
      %144 = sbr.rel (%p141) target = $region12
    $region11: #{decoder_layer_forward.11} parent=5 // pred_region
      %s145 = ssub.s32 %s9, 1
    $region12: #{decoder_layer_forward.11} parent=5 // pred_fallthru
      _
    %p146 = scmp.lt.s32.totalorder %s9, 2
    // Predicated region
    $region13: #{decoder_layer_forward.11} parent=5 // pred_check
      %p147 = pneg %p146
    $region14: #{decoder_layer_forward.11} parent=5 // pred_check_branch
      %149 = sbr.rel (%p147) target = $region16
    $region15: #{decoder_layer_forward.11} parent=5 // pred_region
      // Predicated region
      $region17: #{decoder_layer_forward.11} parent=15 // pred_check
        %p150 = pneg %p43
      $region18: #{decoder_layer_forward.11} parent=15 // pred_check_branch
        %152 = sbr.rel (%p150) target = $region20
      $region19: #{decoder_layer_forward.11} parent=15 // pred_region
        %p153 = scmp.lt.s32.totalorder %s16, 1
        %s154 = scalar_select %p153, %s16, 1
        %p155 = scmp.lt.s32.totalorder %s17, 0
        %s156 = scalar_select %p155, %s17, 0
        %s157 = sadd.s32 %s156, %s154
        %s158 = smul.addr %s157, 4
        %s159 = scalar_lea.vmem %s0, %s158
      $region20: #{decoder_layer_forward.11} parent=15 // pred_fallthru
        _
      // Predicated region
      $region21: #{decoder_layer_forward.11} parent=15 // pred_check
        %p160 = pneg %p69
      $region22: #{decoder_layer_forward.11} parent=15 // pred_check_branch
        %162 = sbr.rel (%p160) target = $region24
      $region23: #{decoder_layer_forward.11} parent=15 // pred_region
        %p163 = scmp.lt.s32.totalorder %s16, 1
        %s164 = scalar_select %p163, %s16, 1
        %s165 = smul.addr %s164, 4
        %s166 = scalar_lea.vmem %s1, %s165
      $region24: #{decoder_layer_forward.11} parent=15 // pred_fallthru
        _
      // Predicated region
      $region25: #{decoder_layer_forward.11} parent=15 // pred_check
        %p167 = pneg %p97
      $region26: #{decoder_layer_forward.11} parent=15 // pred_check_branch
        %169 = sbr.rel (%p167) target = $region28
      $region27: #{decoder_layer_forward.11} parent=15 // pred_region
        %p170 = scmp.lt.s32.totalorder %s16, 1
        %s171 = scalar_select %p170, %s16, 1
        %p172 = scmp.lt.s32.totalorder %s17, 0
        %s173 = scalar_select %p172, %s17, 0
        %s174 = sadd.s32 %s173, %s171
        %s175 = smul.addr %s174, 8
        %s176 = scalar_lea.vmem %s2, %s175
      $region28: #{decoder_layer_forward.11} parent=15 // pred_fallthru
        _
    $region16: #{decoder_layer_forward.11} parent=5 // pred_fallthru
      _
    %p177 = scmp.le.s32.totalorder 1, %s9
    %p178 = scmp.lt.s32.totalorder %s9, 3
    %p179 = pnand %p177, %p178
    %p180 = pneg %p179
    // Predicated region
    $region29: #{decoder_layer_forward.11} parent=5 // pred_check
      _
    $region30: #{decoder_layer_forward.11} parent=5 // pred_check_branch
      %182 = sbr.rel (%p179) target = $region32
    $region31: #{decoder_layer_forward.11} parent=5 // pred_region
      %s183 = ssub.s32 %s9, 1
      %p184 = scmp.lt.s32.totalorder %s18, 1
      %s185 = scalar_select %p184, %s18, 1
      %p186 = scmp.lt.s32.totalorder %s19, 0
      %s187 = scalar_select %p186, %s19, 0
      %s188 = sadd.s32 %s187, %s185
      %s189 = smul.addr %s188, 4
      %s190 = scalar_lea.vmem %s0, %s189
      %p191 = pneg %p49
      %p192 = pneg %p46
      %p193 = scmp.lt.s32.totalorder %s18, 1
      %s194 = scalar_select %p193, %s18, 1
      %s195 = smul.addr %s194, 4
      %s196 = scalar_lea.vmem %s1, %s195
      %p197 = pneg %p75
      %p198 = pneg %p72
      %p199 = scmp.lt.s32.totalorder %s18, 1
      %s200 = scalar_select %p199, %s18, 1
      %p201 = scmp.lt.s32.totalorder %s19, 0
      %s202 = scalar_select %p201, %s19, 0
      %s203 = sadd.s32 %s202, %s200
      %s204 = smul.addr %s203, 8
      %s205 = scalar_lea.vmem %s2, %s204
      %p206 = pneg %p103
      %p207 = pneg %p100
      %p208 = pneg %p131
      %p209 = pneg %p128
      %p210 = scmp.lt.s32.totalorder %s18, 1
      %s211 = scalar_select %p210, %s18, 1
      %p212 = scmp.lt.s32.totalorder %s19, 0
      %s213 = scalar_select %p212, %s19, 0
      %s214 = sadd.s32 %s213, %s211
      %s215 = smul.addr %s214, 4
      %s216 = scalar_lea.vmem %s3, %s215
      %p217 = scmp.lt.s32.totalorder %s18, 1
      %s218 = scalar_select %p217, %s18, 1
      %p219 = scmp.lt.s32.totalorder %s19, 0
      %s220 = scalar_select %p219, %s19, 0
      %s221 = sadd.s32 %s220, %s218
      %s222 = smul.addr %s221, 4
      %s223 = scalar_lea.vmem %s0, %s222
      %p224 = scmp.lt.s32.totalorder %s18, 1
      %s225 = scalar_select %p224, %s18, 1
      %s226 = smul.addr %s225, 4
      %s227 = scalar_lea.vmem %s1, %s226
      %p228 = scmp.lt.s32.totalorder %s18, 1
      %s229 = scalar_select %p228, %s18, 1
      %p230 = scmp.lt.s32.totalorder %s19, 0
      %s231 = scalar_select %p230, %s19, 0
      %s232 = sadd.s32 %s231, %s229
      %s233 = smul.addr %s232, 8
      %s234 = scalar_lea.vmem %s2, %s233
      %p235 = scmp.lt.s32.totalorder %s18, 1
      %s236 = scalar_select %p235, %s18, 1
      %p237 = scmp.lt.s32.totalorder %s19, 0
      %s238 = scalar_select %p237, %s19, 0
      %s239 = sadd.s32 %s238, %s236
      %s240 = smul.addr %s239, 4
      %s241 = scalar_lea.vmem %s3, %s240
      %v243 = vld [vmem:[%s223] sm:$0xf]
      %v244 = vld [vmem:[%s227] sm:$0xf]
      %v245 = vld [vmem:[%s234] sm:$0xff]
      %vm246 = vcmp.eq.f32.partialorder %v245, 0.0
      %v247 = vsel %vm246, -1e+09, 0.0
      %v248 = vunpack.c.l.bf16 %v243
      %v249 = vmul.f32 %v248, 0.35355338
      %v250 = vpack.c.bf16 %v249, %v249
      %vm251 = vcmask 64512
      %v253 = vsel %vm251, %v250, 0
      %v256 = vsel %vm251, %v244, 0
      %258 = vmatprep.subr.bf16.mxu0 0
      %259 = vmatpush1.bf16.xpose.msra.mxu0 %v256
      %260 = vmatprep.subr.bf16.mxu0 0
      %261 = vmatpush1.bf16.xpose.msra.mxu0 0
      %262 = vmatprep.subr.bf16.mxu0 0
      %263 = vmatpush1.bf16.xpose.msra.mxu0 0
      %264 = vmatprep.subr.bf16.mxu0 0
      %265 = vmatpush1.bf16.xpose.msra.mxu0 0
      %266 = vmatprep.subr.bf16.mxu0 0
      %267 = vmatpush1.bf16.xpose.msra.mxu0 0
      %268 = vmatprep.subr.bf16.mxu0 0
      %269 = vmatpush1.bf16.xpose.msra.mxu0 0
      %270 = vmatprep.subr.bf16.mxu0 0
      %271 = vmatpush1.bf16.xpose.msra.mxu0 0
      %272 = vmatprep.subr.bf16.mxu0 0
      %273 = vmatpush1.bf16.xpose.msra.mxu0 0
      %274 = vmatprep.subr.bf16.mxu0 0
      %275 = vmatpush1.bf16.xpose.msra.mxu0 0
      %276 = vmatprep.subr.bf16.mxu0 0
      %277 = vmatpush1.bf16.xpose.msra.mxu0 0
      %278 = vmatprep.subr.bf16.mxu0 0
      %279 = vmatpush1.bf16.xpose.msra.mxu0 0
      %280 = vmatprep.subr.bf16.mxu0 0
      %281 = vmatpush1.bf16.xpose.msra.mxu0 0
      %282 = vmatprep.subr.bf16.mxu0 0
      %283 = vmatpush1.bf16.xpose.msra.mxu0 0
      %284 = vmatprep.subr.bf16.mxu0 0
      %285 = vmatpush1.bf16.xpose.msra.mxu0 0
      %286 = vmatprep.subr.bf16.mxu0 0
      %287 = vmatpush1.bf16.xpose.msra.mxu0 0
      %288 = vmatprep.subr.bf16.mxu0 0
      %289 = vmatpush1.bf16.xpose.msra.mxu0 0
      %290 = vmatprep.mubr.bf16.mxu0 0
      %291 = vmatmul.mubr.bf16.gmra.mrb[0].mxu0 %v253
      %v292 = vpop.f32.mrb[0].mxu0
      %v293 = vadd.f32 %v247, %v292
      %v294 = vpop.f32.mrb[0].mxu0
      %v295 = vpop.f32.mrb[0].mxu0
      %v296 = vpop.f32.mrb[0].mxu0
      %297 = vdwg.mxu0
      %v298 = vsel %vm251, %v293, -inf
      %299 = vmax.xlane.f32.xlu0 %v298
      %v300 = vpop.xlane.xlu0 %299
      %v301 = vsub.f32 %v293, %v300
      %v302 = vmul.f32 %v301, 1.442695
      %v303 = vpow.pop %v302
      %v304 = vsel %vm251, %v303, 0.0
      %305 = vadd.xlane.f32.xlu0 %v304
      %v306 = vpop.xlane.xlu0 %305
      %v307 = vrcp.pop %v306
      %v308 = vpack.c.bf16 %v303, %v303
      %v310 = vunpack.c.l.b16 %v244
      %v311 = vpack.c.b16 %v310, %v310
      %312 = vrot.lane.b32.xlu0 %v311, 96
      %v313 = vpop.permute.xlu0 %312
      %v315 = vsel %vm251, %v308, 0
      %vm317 = vcmask 1043456
      %v319 = vsel %vm317, %v313, 0
      %321 = vmatprep.subr.bf16.mxu0 0
      %322 = vmatpush1.bf16.msra.mxu0 %v319
      %323 = vmatprep.subr.bf16.mxu0 0
      %324 = vmatpush1.bf16.msra.mxu0 0
      %325 = vmatprep.subr.bf16.mxu0 0
      %326 = vmatpush1.bf16.msra.mxu0 0
      %327 = vmatprep.subr.bf16.mxu0 0
      %328 = vmatpush1.bf16.msra.mxu0 0
      %329 = vmatprep.subr.bf16.mxu0 0
      %330 = vmatpush1.bf16.msra.mxu0 0
      %331 = vmatprep.subr.bf16.mxu0 0
      %332 = vmatpush1.bf16.msra.mxu0 0
      %333 = vmatprep.subr.bf16.mxu0 0
      %334 = vmatpush1.bf16.msra.mxu0 0
      %335 = vmatprep.subr.bf16.mxu0 0
      %336 = vmatpush1.bf16.msra.mxu0 0
      %337 = vmatprep.subr.bf16.mxu0 0
      %338 = vmatpush1.bf16.msra.mxu0 0
      %339 = vmatprep.subr.bf16.mxu0 0
      %340 = vmatpush1.bf16.msra.mxu0 0
      %341 = vmatprep.subr.bf16.mxu0 0
      %342 = vmatpush1.bf16.msra.mxu0 0
      %343 = vmatprep.subr.bf16.mxu0 0
      %344 = vmatpush1.bf16.msra.mxu0 0
      %345 = vmatprep.subr.bf16.mxu0 0
      %346 = vmatpush1.bf16.msra.mxu0 0
      %347 = vmatprep.subr.bf16.mxu0 0
      %348 = vmatpush1.bf16.msra.mxu0 0
      %349 = vmatprep.subr.bf16.mxu0 0
      %350 = vmatpush1.bf16.msra.mxu0 0
      %351 = vmatprep.subr.bf16.mxu0 0
      %352 = vmatpush1.bf16.msra.mxu0 0
      %353 = vmatprep.mubr.bf16.mxu0 0
      %354 = vmatmul.mubr.bf16.gmra.mrb[0].mxu0 %v315
      %v355 = vpop.f32.mrb[0].mxu0
      %v356 = vadd.f32 0.0, %v355
      %v357 = vpop.f32.mrb[0].mxu0
      %v358 = vpop.f32.mrb[0].mxu0
      %v359 = vpop.f32.mrb[0].mxu0
      %360 = vdwg.mxu0
      %v361 = vmul.f32 %v356, %v307
      %v362 = vpack.c.bf16 %v361, %v361
      %vm363 = vcmask 60416
      %364 = vst.msk [vmem:[%s241] sm:$0xf] %vm363, %v362
      %366 = vrot.lane.b32.xlu0 %v250, 120
      %v367 = vpop.permute.xlu0 %366
      %368 = vrot.lane.b32.xlu0 %v311, 120
      %v369 = vpop.permute.xlu0 %368
      %v371 = vsel %vm251, %v367, 0
      %v374 = vsel %vm251, %v369, 0
      %376 = vmatprep.subr.bf16.mxu0 0
      %377 = vmatpush1.bf16.xpose.msra.mxu0 %v374
      %378 = vmatprep.subr.bf16.mxu0 0
      %379 = vmatpush1.bf16.xpose.msra.mxu0 0
      %380 = vmatprep.subr.bf16.mxu0 0
      %381 = vmatpush1.bf16.xpose.msra.mxu0 0
      %382 = vmatprep.subr.bf16.mxu0 0
      %383 = vmatpush1.bf16.xpose.msra.mxu0 0
      %384 = vmatprep.subr.bf16.mxu0 0
      %385 = vmatpush1.bf16.xpose.msra.mxu0 0
      %386 = vmatprep.subr.bf16.mxu0 0
      %387 = vmatpush1.bf16.xpose.msra.mxu0 0
      %388 = vmatprep.subr.bf16.mxu0 0
      %389 = vmatpush1.bf16.xpose.msra.mxu0 0
      %390 = vmatprep.subr.bf16.mxu0 0
      %391 = vmatpush1.bf16.xpose.msra.mxu0 0
      %392 = vmatprep.subr.bf16.mxu0 0
      %393 = vmatpush1.bf16.xpose.msra.mxu0 0
      %394 = vmatprep.subr.bf16.mxu0 0
      %395 = vmatpush1.bf16.xpose.msra.mxu0 0
      %396 = vmatprep.subr.bf16.mxu0 0
      %397 = vmatpush1.bf16.xpose.msra.mxu0 0
      %398 = vmatprep.subr.bf16.mxu0 0
      %399 = vmatpush1.bf16.xpose.msra.mxu0 0
      %400 = vmatprep.subr.bf16.mxu0 0
      %401 = vmatpush1.bf16.xpose.msra.mxu0 0
      %402 = vmatprep.subr.bf16.mxu0 0
      %403 = vmatpush1.bf16.xpose.msra.mxu0 0
      %404 = vmatprep.subr.bf16.mxu0 0
      %405 = vmatpush1.bf16.xpose.msra.mxu0 0
      %406 = vmatprep.subr.bf16.mxu0 0
      %407 = vmatpush1.bf16.xpose.msra.mxu0 0
      %408 = vmatprep.mubr.bf16.mxu0 0
      %409 = vmatmul.mubr.bf16.gmra.mrb[0].mxu0 %v371
      %v410 = vpop.f32.mrb[0].mxu0
      %v411 = vadd.f32 %v247, %v410
      %v412 = vpop.f32.mrb[0].mxu0
      %v413 = vpop.f32.mrb[0].mxu0
      %v414 = vpop.f32.mrb[0].mxu0
      %415 = vdwg.mxu0
      %v416 = vsel %vm251, %v411, -inf
      %417 = vmax.xlane.f32.xlu0 %v416
      %v418 = vpop.xlane.xlu0 %417
      %v419 = vsub.f32 %v411, %v418
      %v420 = vmul.f32 %v419, 1.442695
      %v421 = vpow.pop %v420
      %v422 = vsel %vm251, %v421, 0.0
      %423 = vadd.xlane.f32.xlu0 %v422
      %v424 = vpop.xlane.xlu0 %423
      %v425 = vrcp.pop %v424
      %v426 = vpack.c.bf16 %v421, %v421
      %427 = vrot.lane.b32.xlu0 %v311, 88
      %v428 = vpop.permute.xlu0 %427
      %v430 = vsel %vm251, %v426, 0
      %v433 = vsel %vm317, %v428, 0
      %435 = vmatprep.subr.bf16.mxu0 0
      %436 = vmatpush1.bf16.msra.mxu0 %v433
      %437 = vmatprep.subr.bf16.mxu0 0
      %438 = vmatpush1.bf16.msra.mxu0 0
      %439 = vmatprep.subr.bf16.mxu0 0
      %440 = vmatpush1.bf16.msra.mxu0 0
      %441 = vmatprep.subr.bf16.mxu0 0
      %442 = vmatpush1.bf16.msra.mxu0 0
      %443 = vmatprep.subr.bf16.mxu0 0
      %444 = vmatpush1.bf16.msra.mxu0 0
      %445 = vmatprep.subr.bf16.mxu0 0
      %446 = vmatpush1.bf16.msra.mxu0 0
      %447 = vmatprep.subr.bf16.mxu0 0
      %448 = vmatpush1.bf16.msra.mxu0 0
      %449 = vmatprep.subr.bf16.mxu0 0
      %450 = vmatpush1.bf16.msra.mxu0 0
      %451 = vmatprep.subr.bf16.mxu0 0
      %452 = vmatpush1.bf16.msra.mxu0 0
      %453 = vmatprep.subr.bf16.mxu0 0
      %454 = vmatpush1.bf16.msra.mxu0 0
      %455 = vmatprep.subr.bf16.mxu0 0
      %456 = vmatpush1.bf16.msra.mxu0 0
      %457 = vmatprep.subr.bf16.mxu0 0
      %458 = vmatpush1.bf16.msra.mxu0 0
      %459 = vmatprep.subr.bf16.mxu0 0
      %460 = vmatpush1.bf16.msra.mxu0 0
      %461 = vmatprep.subr.bf16.mxu0 0
      %462 = vmatpush1.bf16.msra.mxu0 0
      %463 = vmatprep.subr.bf16.mxu0 0
      %464 = vmatpush1.bf16.msra.mxu0 0
      %465 = vmatprep.subr.bf16.mxu0 0
      %466 = vmatpush1.bf16.msra.mxu0 0
      %467 = vmatprep.mubr.bf16.mxu0 0
      %468 = vmatmul.mubr.bf16.gmra.mrb[0].mxu0 %v430
      %v469 = vpop.f32.mrb[0].mxu0
      %v470 = vadd.f32 0.0, %v469
      %v471 = vpop.f32.mrb[0].mxu0
      %v472 = vpop.f32.mrb[0].mxu0
      %v473 = vpop.f32.mrb[0].mxu0
      %474 = vdwg.mxu0
      %v475 = vmul.f32 %v470, %v425
      %v476 = vpack.c.bf16 %v475, %v475
      %v478 = vunpack.c.l.b16 %v476
      %v479 = vpack.c.b16 %v478, %v478
      %480 = vrot.lane.b32.xlu0 %v479, 8
      %v481 = vpop.permute.xlu0 %480
      %vm483 = vcmask 126016
      %484 = vst.msk [vmem:[%s241] sm:$0xf] %vm483, %v481
      %485 = vrot.lane.b32.xlu0 %v250, 112
      %v486 = vpop.permute.xlu0 %485
      %487 = vrot.lane.b32.xlu0 %v311, 112
      %v488 = vpop.permute.xlu0 %487
      %v490 = vsel %vm251, %v486, 0
      %v493 = vsel %vm251, %v488, 0
      %495 = vmatprep.subr.bf16.mxu0 0
      %496 = vmatpush1.bf16.xpose.msra.mxu0 %v493
      %497 = vmatprep.subr.bf16.mxu0 0
      %498 = vmatpush1.bf16.xpose.msra.mxu0 0
      %499 = vmatprep.subr.bf16.mxu0 0
      %500 = vmatpush1.bf16.xpose.msra.mxu0 0
      %501 = vmatprep.subr.bf16.mxu0 0
      %502 = vmatpush1.bf16.xpose.msra.mxu0 0
      %503 = vmatprep.subr.bf16.mxu0 0
      %504 = vmatpush1.bf16.xpose.msra.mxu0 0
      %505 = vmatprep.subr.bf16.mxu0 0
      %506 = vmatpush1.bf16.xpose.msra.mxu0 0
      %507 = vmatprep.subr.bf16.mxu0 0
      %508 = vmatpush1.bf16.xpose.msra.mxu0 0
      %509 = vmatprep.subr.bf16.mxu0 0
      %510 = vmatpush1.bf16.xpose.msra.mxu0 0
      %511 = vmatprep.subr.bf16.mxu0 0
      %512 = vmatpush1.bf16.xpose.msra.mxu0 0
      %513 = vmatprep.subr.bf16.mxu0 0
      %514 = vmatpush1.bf16.xpose.msra.mxu0 0
      %515 = vmatprep.subr.bf16.mxu0 0
      %516 = vmatpush1.bf16.xpose.msra.mxu0 0
      %517 = vmatprep.subr.bf16.mxu0 0
      %518 = vmatpush1.bf16.xpose.msra.mxu0 0
      %519 = vmatprep.subr.bf16.mxu0 0
      %520 = vmatpush1.bf16.xpose.msra.mxu0 0
      %521 = vmatprep.subr.bf16.mxu0 0
      %522 = vmatpush1.bf16.xpose.msra.mxu0 0
      %523 = vmatprep.subr.bf16.mxu0 0
      %524 = vmatpush1.bf16.xpose.msra.mxu0 0
      %525 = vmatprep.subr.bf16.mxu0 0
      %526 = vmatpush1.bf16.xpose.msra.mxu0 0
      %527 = vmatprep.mubr.bf16.mxu0 0
      %528 = vmatmul.mubr.bf16.gmra.mrb[0].mxu0 %v490
      %v529 = vpop.f32.mrb[0].mxu0
      %v530 = vadd.f32 %v247, %v529
      %v531 = vpop.f32.mrb[0].mxu0
      %v532 = vpop.f32.mrb[0].mxu0
      %v533 = vpop.f32.mrb[0].mxu0
      %534 = vdwg.mxu0
      %v535 = vsel %vm251, %v530, -inf
      %536 = vmax.xlane.f32.xlu0 %v535
      %v537 = vpop.xlane.xlu0 %536
      %v538 = vsub.f32 %v530, %v537
      %v539 = vmul.f32 %v538, 1.442695
      %v540 = vpow.pop %v539
      %v541 = vsel %vm251, %v540, 0.0
      %542 = vadd.xlane.f32.xlu0 %v541
      %v543 = vpop.xlane.xlu0 %542
      %v544 = vrcp.pop %v543
      %v545 = vpack.c.bf16 %v540, %v540
      %546 = vrot.lane.b32.xlu0 %v311, 80
      %v547 = vpop.permute.xlu0 %546
      %v549 = vsel %vm251, %v545, 0
      %v552 = vsel %vm317, %v547, 0
      %554 = vmatprep.subr.bf16.mxu0 0
      %555 = vmatpush1.bf16.msra.mxu0 %v552
      %556 = vmatprep.subr.bf16.mxu0 0
      %557 = vmatpush1.bf16.msra.mxu0 0
      %558 = vmatprep.subr.bf16.mxu0 0
      %559 = vmatpush1.bf16.msra.mxu0 0
      %560 = vmatprep.subr.bf16.mxu0 0
      %561 = vmatpush1.bf16.msra.mxu0 0
      %562 = vmatprep.subr.bf16.mxu0 0
      %563 = vmatpush1.bf16.msra.mxu0 0
      %564 = vmatprep.subr.bf16.mxu0 0
      %565 = vmatpush1.bf16.msra.mxu0 0
      %566 = vmatprep.subr.bf16.mxu0 0
      %567 = vmatpush1.bf16.msra.mxu0 0
      %568 = vmatprep.subr.bf16.mxu0 0
      %569 = vmatpush1.bf16.msra.mxu0 0
      %570 = vmatprep.subr.bf16.mxu0 0
      %571 = vmatpush1.bf16.msra.mxu0 0
      %572 = vmatprep.subr.bf16.mxu0 0
      %573 = vmatpush1.bf16.msra.mxu0 0
      %574 = vmatprep.subr.bf16.mxu0 0
      %575 = vmatpush1.bf16.msra.mxu0 0
      %576 = vmatprep.subr.bf16.mxu0 0
      %577 = vmatpush1.bf16.msra.mxu0 0
      %578 = vmatprep.subr.bf16.mxu0 0
      %579 = vmatpush1.bf16.msra.mxu0 0
      %580 = vmatprep.subr.bf16.mxu0 0
      %581 = vmatpush1.bf16.msra.mxu0 0
      %582 = vmatprep.subr.bf16.mxu0 0
      %583 = vmatpush1.bf16.msra.mxu0 0
      %584 = vmatprep.subr.bf16.mxu0 0
      %585 = vmatpush1.bf16.msra.mxu0 0
      %586 = vmatprep.mubr.bf16.mxu0 0
      %587 = vmatmul.mubr.bf16.gmra.mrb[0].mxu0 %v549
      %v588 = vpop.f32.mrb[0].mxu0
      %v589 = vadd.f32 0.0, %v588
      %v590 = vpop.f32.mrb[0].mxu0
      %v591 = vpop.f32.mrb[0].mxu0
      %v592 = vpop.f32.mrb[0].mxu0
      %593 = vdwg.mxu0
      %v594 = vmul.f32 %v589, %v544
      %v595 = vpack.c.bf16 %v594, %v594
      %v597 = vunpack.c.l.b16 %v595
      %v598 = vpack.c.b16 %v597, %v597
      %599 = vrot.lane.b32.xlu0 %v598, 16
      %v600 = vpop.permute.xlu0 %599
      %vm602 = vcmask 191616
      %603 = vst.msk [vmem:[%s241] sm:$0xf] %vm602, %v600
      %604 = vrot.lane.b32.xlu0 %v250, 104
      %v605 = vpop.permute.xlu0 %604
      %606 = vrot.lane.b32.xlu0 %v311, 104
      %v607 = vpop.permute.xlu0 %606
      %v609 = vsel %vm251, %v605, 0
      %v612 = vsel %vm251, %v607, 0
      %614 = vmatprep.subr.bf16.mxu0 0
      %615 = vmatpush1.bf16.xpose.msra.mxu0 %v612
      %616 = vmatprep.subr.bf16.mxu0 0
      %617 = vmatpush1.bf16.xpose.msra.mxu0 0
      %618 = vmatprep.subr.bf16.mxu0 0
      %619 = vmatpush1.bf16.xpose.msra.mxu0 0
      %620 = vmatprep.subr.bf16.mxu0 0
      %621 = vmatpush1.bf16.xpose.msra.mxu0 0
      %622 = vmatprep.subr.bf16.mxu0 0
      %623 = vmatpush1.bf16.xpose.msra.mxu0 0
      %624 = vmatprep.subr.bf16.mxu0 0
      %625 = vmatpush1.bf16.xpose.msra.mxu0 0
      %626 = vmatprep.subr.bf16.mxu0 0
      %627 = vmatpush1.bf16.xpose.msra.mxu0 0
      %628 = vmatprep.subr.bf16.mxu0 0
      %629 = vmatpush1.bf16.xpose.msra.mxu0 0
      %630 = vmatprep.subr.bf16.mxu0 0
      %631 = vmatpush1.bf16.xpose.msra.mxu0 0
      %632 = vmatprep.subr.bf16.mxu0 0
      %633 = vmatpush1.bf16.xpose.msra.mxu0 0
      %634 = vmatprep.subr.bf16.mxu0 0
      %635 = vmatpush1.bf16.xpose.msra.mxu0 0
      %636 = vmatprep.subr.bf16.mxu0 0
      %637 = vmatpush1.bf16.xpose.msra.mxu0 0
      %638 = vmatprep.subr.bf16.mxu0 0
      %639 = vmatpush1.bf16.xpose.msra.mxu0 0
      %640 = vmatprep.subr.bf16.mxu0 0
      %641 = vmatpush1.bf16.xpose.msra.mxu0 0
      %642 = vmatprep.subr.bf16.mxu0 0
      %643 = vmatpush1.bf16.xpose.msra.mxu0 0
      %644 = vmatprep.subr.bf16.mxu0 0
      %645 = vmatpush1.bf16.xpose.msra.mxu0 0
      %646 = vmatprep.mubr.bf16.mxu0 0
      %647 = vmatmul.mubr.bf16.gmra.mrb[0].mxu0 %v609
      %v648 = vpop.f32.mrb[0].mxu0
      %v649 = vadd.f32 %v247, %v648
      %v650 = vpop.f32.mrb[0].mxu0
      %v651 = vpop.f32.mrb[0].mxu0
      %v652 = vpop.f32.mrb[0].mxu0
      %653 = vdwg.mxu0
      %v654 = vsel %vm251, %v649, -inf
      %655 = vmax.xlane.f32.xlu0 %v654
      %v656 = vpop.xlane.xlu0 %655
      %v657 = vsub.f32 %v649, %v656
      %v658 = vmul.f32 %v657, 1.442695
      %v659 = vpow.pop %v658
      %v660 = vsel %vm251, %v659, 0.0
      %661 = vadd.xlane.f32.xlu0 %v660
      %v662 = vpop.xlane.xlu0 %661
      %v663 = vrcp.pop %v662
      %v664 = vpack.c.bf16 %v659, %v659
      %665 = vrot.lane.b32.xlu0 %v311, 72
      %v666 = vpop.permute.xlu0 %665
      %v668 = vsel %vm251, %v664, 0
      %v671 = vsel %vm317, %v666, 0
      %673 = vmatprep.subr.bf16.mxu0 0
      %674 = vmatpush1.bf16.msra.mxu0 %v671
      %675 = vmatprep.subr.bf16.mxu0 0
      %676 = vmatpush1.bf16.msra.mxu0 0
      %677 = vmatprep.subr.bf16.mxu0 0
      %678 = vmatpush1.bf16.msra.mxu0 0
      %679 = vmatprep.subr.bf16.mxu0 0
      %680 = vmatpush1.bf16.msra.mxu0 0
      %681 = vmatprep.subr.bf16.mxu0 0
      %682 = vmatpush1.bf16.msra.mxu0 0
      %683 = vmatprep.subr.bf16.mxu0 0
      %684 = vmatpush1.bf16.msra.mxu0 0
      %685 = vmatprep.subr.bf16.mxu0 0
      %686 = vmatpush1.bf16.msra.mxu0 0
      %687 = vmatprep.subr.bf16.mxu0 0
      %688 = vmatpush1.bf16.msra.mxu0 0
      %689 = vmatprep.subr.bf16.mxu0 0
      %690 = vmatpush1.bf16.msra.mxu0 0
      %691 = vmatprep.subr.bf16.mxu0 0
      %692 = vmatpush1.bf16.msra.mxu0 0
      %693 = vmatprep.subr.bf16.mxu0 0
      %694 = vmatpush1.bf16.msra.mxu0 0
      %695 = vmatprep.subr.bf16.mxu0 0
      %696 = vmatpush1.bf16.msra.mxu0 0
      %697 = vmatprep.subr.bf16.mxu0 0
      %698 = vmatpush1.bf16.msra.mxu0 0
      %699 = vmatprep.subr.bf16.mxu0 0
      %700 = vmatpush1.bf16.msra.mxu0 0
      %701 = vmatprep.subr.bf16.mxu0 0
      %702 = vmatpush1.bf16.msra.mxu0 0
      %703 = vmatprep.subr.bf16.mxu0 0
      %704 = vmatpush1.bf16.msra.mxu0 0
      %705 = vmatprep.mubr.bf16.mxu0 0
      %706 = vmatmul.mubr.bf16.gmra.mrb[0].mxu0 %v668
      %v707 = vpop.f32.mrb[0].mxu0
      %v708 = vadd.f32 0.0, %v707
      %v709 = vpop.f32.mrb[0].mxu0
      %v710 = vpop.f32.mrb[0].mxu0
      %v711 = vpop.f32.mrb[0].mxu0
      %712 = vdwg.mxu0
      %v713 = vmul.f32 %v708, %v663
      %v714 = vpack.c.bf16 %v713, %v713
      %v716 = vunpack.c.l.b16 %v714
      %v717 = vpack.c.b16 %v716, %v716
      %718 = vrot.lane.b32.xlu0 %v717, 24
      %v719 = vpop.permute.xlu0 %718
      %vm721 = vcmask 257216
      %722 = vst.msk [vmem:[%s241] sm:$0xf] %vm721, %v719
      %p723 = scmp.lt.s32.totalorder %s18, 1
      %s724 = scalar_select %p723, %s18, 1
      %p725 = scmp.lt.s32.totalorder %s19, 0
      %s726 = scalar_select %p725, %s19, 0
      %s727 = sadd.s32 %s726, %s724
      %s728 = smul.addr %s727, 4
      %s729 = scalar_lea.vmem %s3, %s728
      // Predicated region
      $region33: #{decoder_layer_forward.11} parent=31 // pred_check
        %p730 = pneg %p128
      $region34: #{decoder_layer_forward.11} parent=31 // pred_check_branch
        %732 = sbr.rel (%p730) target = $region36
      $region35: #{decoder_layer_forward.11} parent=31 // pred_region
        _
      $region36: #{decoder_layer_forward.11} parent=31 // pred_fallthru
        _
    $region32: #{decoder_layer_forward.11} parent=5 // pred_fallthru
      _
    %p733 = scmp.le.s32.totalorder 2, %s9
    // Predicated region
    $region37: #{decoder_layer_forward.11} parent=5 // pred_check
      %p734 = pneg %p733
    $region38: #{decoder_layer_forward.11} parent=5 // pred_check_branch
      %736 = sbr.rel (%p734) target = $region40
    $region39: #{decoder_layer_forward.11} parent=5 // pred_region
      %s737 = ssub.s32 %s9, 2
      // Predicated region
      $region41: #{decoder_layer_forward.11} parent=39 // pred_check
        %p738 = pneg %p134
      $region42: #{decoder_layer_forward.11} parent=39 // pred_check_branch
        %740 = sbr.rel (%p738) target = $region44
      $region43: #{decoder_layer_forward.11} parent=39 // pred_region
        %p741 = scmp.lt.s32.totalorder %s20, 1
        %s742 = scalar_select %p741, %s20, 1
        %p743 = scmp.lt.s32.totalorder %s21, 0
        %s744 = scalar_select %p743, %s21, 0
        %s745 = sadd.s32 %s744, %s742
        %s746 = smul.addr %s745, 4
        %s747 = scalar_lea.vmem %s3, %s746
      $region44: #{decoder_layer_forward.11} parent=39 // pred_fallthru
        _
    $region40: #{decoder_layer_forward.11} parent=5 // pred_fallthru
      _
  $region6: #{decoder_layer_forward.11} parent=0 // loop_footer
    %s13 = sadd.s32 1, %s9
  $region7: #{decoder_layer_forward.11} parent=0 // loop_footer_branch
    %8 = sbr.rel target = $region3
  $region8: #{decoder_layer_forward.11} parent=0 // loop_exit
    _

// kernel: decoder_layer_forward.14
$region0: #{decoder_layer_forward.14}
  #allocation0 [shape = 'u32[]', space=smem, size = 0x4, offset = 0x4, fixed_abs, tag = 'smem constant byte address 0x4 - core index']
  #allocation1 [shape = 'u32[144,128]{1,0:T(1,128)}', space=vmem, size = 0x12000, scoped, tag = 'internal scratch']
  %s0 = inlined_call_operand.vmem [shape: f32[16,32], index: 0, kind: input, shape index: {}]
  %s1 = inlined_call_operand.vmem [shape: bf16[32,64], index: 1, kind: input, shape index: {}]
  %s2 = inlined_call_operand.vmem [shape: f32[1,64], index: 2, kind: input, shape index: {}]
  %s3 = inlined_call_operand.vmem [shape: bf16[16,64], index: 3, kind: output, shape index: {}]
  %s4 = sld [smem:[#allocation0]]
  $region22: #{decoder_layer_forward.14} parent=0
    _
  %s6 = ssub.s32 1, %s4
  %s7 = scalar_select 0, %s6, %s4
  // Predicated region
  $region2: #{decoder_layer_forward.14} parent=0 // pred_check
    _
  $region3: #{decoder_layer_forward.14} parent=0 // pred_check_branch
    %9 = sbr.rel (0) target = $region5
  $region4: #{decoder_layer_forward.14} parent=0 // pred_region
    _
  $region5: #{decoder_layer_forward.14} parent=0 // pred_fallthru
    _
  // Predicated region
  $region6: #{decoder_layer_forward.14} parent=0 // pred_check
    _
  $region7: #{decoder_layer_forward.14} parent=0 // pred_check_branch
    %11 = sbr.rel (0) target = $region9
  $region8: #{decoder_layer_forward.14} parent=0 // pred_region
    _
  $region9: #{decoder_layer_forward.14} parent=0 // pred_fallthru
    _
  // Predicated region
  $region10: #{decoder_layer_forward.14} parent=0 // pred_check
    _
  $region11: #{decoder_layer_forward.14} parent=0 // pred_check_branch
    %13 = sbr.rel (0) target = $region13
  $region12: #{decoder_layer_forward.14} parent=0 // pred_region
    _
  $region13: #{decoder_layer_forward.14} parent=0 // pred_fallthru
    _
  %v15 = vld [vmem:[%s0] sm:$0xff]
  %v16 = vld [vmem:[%s0 + $0x8] sm:$0xff]
  %v17 = vpack.c.bf16 %v16, %v15
  %v18 = vld [vmem:[%s1] sm:$0xf]
  %v19 = vld [vmem:[%s1 + $0x4] sm:$0xf]
  %v20 = vld [vmem:[%s1 + $0x8] sm:$0xf]
  %v21 = vld [vmem:[%s1 + $0xc] sm:$0xf]
  %v22 = vld [vmem:[%s2] sm:$0x1]
  %v24 = vlaneseq
  %v25 = vshrl.u32 %v24, 7
  %v26 = vsub.s32 0, %v25
  %v27 = vrot.slane %v22, %v26
  %v33 = vunpack.c.l.b16 %v18
  %v34 = vunpack.c.l.b16 %v19
  %v35 = vunpack.c.l.b16 %v20
  %v36 = vunpack.c.l.b16 %v21
  %v37 = vpack.c.b16 %v34, %v33
  %v38 = vpack.c.b16 %v36, %v35
  %vm41 = vcmask 261120
  %v43 = vsel %vm41, %v17, 0
  %45 = vmatprep.subr.bf16.mxu0 0
  %46 = vmatpush1.bf16.msra.mxu0 %v37
  %47 = vmatprep.subr.bf16.mxu0 0
  %48 = vmatpush1.bf16.msra.mxu0 %v38
  %49 = vmatprep.subr.bf16.mxu0 0
  %50 = vmatpush1.bf16.msra.mxu0 0
  %51 = vmatprep.subr.bf16.mxu0 0
  %52 = vmatpush1.bf16.msra.mxu0 0
  %53 = vmatprep.subr.bf16.mxu0 0
  %54 = vmatpush1.bf16.msra.mxu0 0
  %55 = vmatprep.subr.bf16.mxu0 0
  %56 = vmatpush1.bf16.msra.mxu0 0
  %57 = vmatprep.subr.bf16.mxu0 0
  %58 = vmatpush1.bf16.msra.mxu0 0
  %59 = vmatprep.subr.bf16.mxu0 0
  %60 = vmatpush1.bf16.msra.mxu0 0
  %61 = vmatprep.subr.bf16.mxu0 0
  %62 = vmatpush1.bf16.msra.mxu0 0
  %63 = vmatprep.subr.bf16.mxu0 0
  %64 = vmatpush1.bf16.msra.mxu0 0
  %65 = vmatprep.subr.bf16.mxu0 0
  %66 = vmatpush1.bf16.msra.mxu0 0
  %67 = vmatprep.subr.bf16.mxu0 0
  %68 = vmatpush1.bf16.msra.mxu0 0
  %69 = vmatprep.subr.bf16.mxu0 0
  %70 = vmatpush1.bf16.msra.mxu0 0
  %71 = vmatprep.subr.bf16.mxu0 0
  %72 = vmatpush1.bf16.msra.mxu0 0
  %73 = vmatprep.subr.bf16.mxu0 0
  %74 = vmatpush1.bf16.msra.mxu0 0
  %75 = vmatprep.subr.bf16.mxu0 0
  %76 = vmatpush1.bf16.msra.mxu0 0
  %77 = vmatprep.mubr.bf16.mxu0 0
  %78 = vmatmul.mubr.bf16.gmra.mrb[0].mxu0 %v43
  %v79 = vpop.f32.mrb[0].mxu0
  %v80 = vadd.f32 %v27, %v79
  %v81 = vpop.f32.mrb[0].mxu0
  %v82 = vpop.f32.mrb[0].mxu0
  %v83 = vadd.f32 %v27, %v82
  %v84 = vpop.f32.mrb[0].mxu0
  %85 = vdwg.mxu0
  %v86 = vpack.c.bf16 %v83, %v80
  %v88 = vunpack.c.l.b16 %v86
  %v89 = vunpack.c.h.b16 %v86
  %v90 = vpack.c.b16 %v88, %v88
  %v91 = vpack.c.b16 %v89, %v89
  %vm94 = vcmask 519168
  %95 = vst.msk [vmem:[%s3] sm:$0xf] %vm94, %v90
  %96 = vst.msk [vmem:[%s3 + $0x4] sm:$0xf] %vm94, %v91
  // Predicated region
  $region14: #{decoder_layer_forward.14} parent=0 // pred_check
    _
  $region15: #{decoder_layer_forward.14} parent=0 // pred_check_branch
    %98 = sbr.rel (0) target = $region17
  $region16: #{decoder_layer_forward.14} parent=0 // pred_region
    _
  $region17: #{decoder_layer_forward.14} parent=0 // pred_fallthru
    _
  // Predicated region
  $region18: #{decoder_layer_forward.14} parent=0 // pred_check
    _
  $region19: #{decoder_layer_forward.14} parent=0 // pred_check_branch
    %100 = sbr.rel (0) target = $region21
  $region20: #{decoder_layer_forward.14} parent=0 // pred_region
    _
  $region21: #{decoder_layer_forward.14} parent=0 // pred_fallthru
    _

// kernel: decoder_layer_forward.17
$region0: #{decoder_layer_forward.17}
  #allocation0 [shape = 'u32[]', space=smem, size = 0x4, offset = 0x4, fixed_abs, tag = 'smem constant byte address 0x4 - core index']
  #allocation1 [shape = 'u32[144,128]{1,0:T(1,128)}', space=vmem, size = 0x12000, scoped, tag = 'internal scratch']
  #allocation2 [shape = 'f32[16,32]{1,0:T(8,128)}', space=vmem, size = 0x2000, scoped, tag = 'scratch operand']
  %s0 = inlined_call_operand.vmem [shape: f32[16,32], index: 0, kind: input, shape index: {}]
  %s1 = inlined_call_operand.vmem [shape: bf16[32,64], index: 1, kind: input, shape index: {}]
  %s2 = inlined_call_operand.vmem [shape: f32[1,64], index: 2, kind: input, shape index: {}]
  %s3 = inlined_call_operand.vmem [shape: bf16[64,32], index: 3, kind: input, shape index: {}]
  %s4 = inlined_call_operand.vmem [shape: f32[1,32], index: 4, kind: input, shape index: {}]
  %s5 = inlined_call_operand.vmem [shape: f32[1,32], index: 5, kind: input, shape index: {}]
  %s6 = inlined_call_operand.vmem [shape: f32[1,32], index: 6, kind: input, shape index: {}]
  %s7 = inlined_call_operand.hbm [shape: f32[16,32], index: 7, kind: output, shape index: {}]
  %s8 = sld [smem:[#allocation0]]
  $region46: #{decoder_layer_forward.17} parent=0
    _
  %s10 = ssub.s32 1, %s8
  %s11 = scalar_select 0, %s10, %s8
  $region1: #{decoder_layer_forward.17} parent=0
    #allocation3 [shape = 'u8[8192]{0}', space=vmem, size = 0x2000, scoped, tag = 'output window, operand 0, single buffered']
    #allocation4 [shape = 's32[1]{0}', space=sflag, size = 0x4, scoped, tag = 'scoped memory for decoder_layer_forward.17']
    %12 = vsyncpa [#allocation4], 0
    // Predicated region
    $region2: #{decoder_layer_forward.17} parent=1 // pred_check
      _
    $region3: #{decoder_layer_forward.17} parent=1 // pred_check_branch
      %14 = sbr.rel (0) target = $region5
    $region4: #{decoder_layer_forward.17} parent=1 // pred_region
      _
    $region5: #{decoder_layer_forward.17} parent=1 // pred_fallthru
      _
    // Predicated region
    $region6: #{decoder_layer_forward.17} parent=1 // pred_check
      _
    $region7: #{decoder_layer_forward.17} parent=1 // pred_check_branch
      %16 = sbr.rel (0) target = $region9
    $region8: #{decoder_layer_forward.17} parent=1 // pred_region
      _
    $region9: #{decoder_layer_forward.17} parent=1 // pred_fallthru
      _
    // Predicated region
    $region10: #{decoder_layer_forward.17} parent=1 // pred_check
      _
    $region11: #{decoder_layer_forward.17} parent=1 // pred_check_branch
      %18 = sbr.rel (0) target = $region13
    $region12: #{decoder_layer_forward.17} parent=1 // pred_region
      _
    $region13: #{decoder_layer_forward.17} parent=1 // pred_fallthru
      _
    // Predicated region
    $region14: #{decoder_layer_forward.17} parent=1 // pred_check
      _
    $region15: #{decoder_layer_forward.17} parent=1 // pred_check_branch
      %20 = sbr.rel (0) target = $region17
    $region16: #{decoder_layer_forward.17} parent=1 // pred_region
      _
    $region17: #{decoder_layer_forward.17} parent=1 // pred_fallthru
      _
    // Predicated region
    $region18: #{decoder_layer_forward.17} parent=1 // pred_check
      _
    $region19: #{decoder_layer_forward.17} parent=1 // pred_check_branch
      %22 = sbr.rel (0) target = $region21
    $region20: #{decoder_layer_forward.17} parent=1 // pred_region
      _
    $region21: #{decoder_layer_forward.17} parent=1 // pred_fallthru
      _
    // Predicated region
    $region22: #{decoder_layer_forward.17} parent=1 // pred_check
      _
    $region23: #{decoder_layer_forward.17} parent=1 // pred_check_branch
      %24 = sbr.rel (0) target = $region25
    $region24: #{decoder_layer_forward.17} parent=1 // pred_region
      _
    $region25: #{decoder_layer_forward.17} parent=1 // pred_fallthru
      _
    // Predicated region
    $region26: #{decoder_layer_forward.17} parent=1 // pred_check
      _
    $region27: #{decoder_layer_forward.17} parent=1 // pred_check_branch
      %26 = sbr.rel (0) target = $region29
    $region28: #{decoder_layer_forward.17} parent=1 // pred_region
      _
    $region29: #{decoder_layer_forward.17} parent=1 // pred_fallthru
      _
    %p28 = scmp.eq.s32.totalorder 0, 0
    // Predicated region
    $region30: #{decoder_layer_forward.17} parent=1 // pred_check
      %p29 = pneg %p28
    $region31: #{decoder_layer_forward.17} parent=1 // pred_check_branch
      %31 = sbr.rel (%p29) target = $region33
    $region32: #{decoder_layer_forward.17} parent=1 // pred_region
      %vm32 = vcmask 261120
      %33 = vst.msk [vmem:[#allocation2] sm:$0xff] %vm32, 0.0
      %34 = vst.msk [vmem:[#allocation2 + $0x8] sm:$0xff] %vm32, 0.0
    $region33: #{decoder_layer_forward.17} parent=1 // pred_fallthru
      _
    %v35 = vld [vmem:[%s0] sm:$0xff]
    %v36 = vld [vmem:[%s0 + $0x8] sm:$0xff]
    %v37 = vpack.c.bf16 %v36, %v35
    %v38 = vld [vmem:[%s1] sm:$0xf]
    %v39 = vld [vmem:[%s1 + $0x4] sm:$0xf]
    %v40 = vld [vmem:[%s1 + $0x8] sm:$0xf]
    %v41 = vld [vmem:[%s1 + $0xc] sm:$0xf]
    %v42 = vld [vmem:[%s2] sm:$0x1]
    %v44 = vlaneseq
    %v45 = vshrl.u32 %v44, 7
    %v46 = vsub.s32 0, %v45
    %v47 = vrot.slane %v42, %v46
    %v53 = vunpack.c.l.b16 %v38
    %v54 = vunpack.c.l.b16 %v39
    %v55 = vunpack.c.l.b16 %v40
    %v56 = vunpack.c.l.b16 %v41
    %v57 = vpack.c.b16 %v54, %v53
    %v58 = vpack.c.b16 %v56, %v55
    %vm61 = vcmask 261120
    %v63 = vsel %vm61, %v37, 0
    %65 = vmatprep.subr.bf16.mxu0 0
    %66 = vmatpush1.bf16.msra.mxu0 %v57
    %67 = vmatprep.subr.bf16.mxu0 0
    %68 = vmatpush1.bf16.msra.mxu0 %v58
    %69 = vmatprep.subr.bf16.mxu0 0
    %70 = vmatpush1.bf16.msra.mxu0 0
    %71 = vmatprep.subr.bf16.mxu0 0
    %72 = vmatpush1.bf16.msra.mxu0 0
    %73 = vmatprep.subr.bf16.mxu0 0
    %74 = vmatpush1.bf16.msra.mxu0 0
    %75 = vmatprep.subr.bf16.mxu0 0
    %76 = vmatpush1.bf16.msra.mxu0 0
    %77 = vmatprep.subr.bf16.mxu0 0
    %78 = vmatpush1.bf16.msra.mxu0 0
    %79 = vmatprep.subr.bf16.mxu0 0
    %80 = vmatpush1.bf16.msra.mxu0 0
    %81 = vmatprep.subr.bf16.mxu0 0
    %82 = vmatpush1.bf16.msra.mxu0 0
    %83 = vmatprep.subr.bf16.mxu0 0
    %84 = vmatpush1.bf16.msra.mxu0 0
    %85 = vmatprep.subr.bf16.mxu0 0
    %86 = vmatpush1.bf16.msra.mxu0 0
    %87 = vmatprep.subr.bf16.mxu0 0
    %88 = vmatpush1.bf16.msra.mxu0 0
    %89 = vmatprep.subr.bf16.mxu0 0
    %90 = vmatpush1.bf16.msra.mxu0 0
    %91 = vmatprep.subr.bf16.mxu0 0
    %92 = vmatpush1.bf16.msra.mxu0 0
    %93 = vmatprep.subr.bf16.mxu0 0
    %94 = vmatpush1.bf16.msra.mxu0 0
    %95 = vmatprep.subr.bf16.mxu0 0
    %96 = vmatpush1.bf16.msra.mxu0 0
    %97 = vmatprep.mubr.bf16.mxu0 0
    %98 = vmatmul.mubr.bf16.gmra.mrb[0].mxu0 %v63
    %v99 = vpop.f32.mrb[0].mxu0
    %v100 = vadd.f32 %v47, %v99
    %v101 = vpop.f32.mrb[0].mxu0
    %v102 = vpop.f32.mrb[0].mxu0
    %v103 = vadd.f32 %v47, %v102
    %v104 = vpop.f32.mrb[0].mxu0
    %105 = vdwg.mxu0
    %v106 = vmax.f32 %v100, 0.0
    %v107 = vmax.f32 %v103, 0.0
    %v108 = vld [vmem:[#allocation2] sm:$0xff]
    %v109 = vld [vmem:[#allocation2 + $0x8] sm:$0xff]
    %v110 = vpack.c.bf16 %v107, %v106
    %v111 = vld [vmem:[%s3] sm:$0xf]
    %v112 = vld [vmem:[%s3 + $0x4] sm:$0xf]
    %v113 = vld [vmem:[%s3 + $0x8] sm:$0xf]
    %v114 = vld [vmem:[%s3 + $0xc] sm:$0xf]
    %v115 = vld [vmem:[%s3 + $0x10] sm:$0xf]
    %v116 = vld [vmem:[%s3 + $0x14] sm:$0xf]
    %v117 = vld [vmem:[%s3 + $0x18] sm:$0xf]
    %v118 = vld [vmem:[%s3 + $0x1c] sm:$0xf]
    %v127 = vunpack.c.l.b16 %v111
    %v128 = vunpack.c.l.b16 %v112
    %v129 = vunpack.c.l.b16 %v113
    %v130 = vunpack.c.l.b16 %v114
    %v131 = vunpack.c.l.b16 %v115
    %v132 = vunpack.c.l.b16 %v116
    %v133 = vunpack.c.l.b16 %v117
    %v134 = vunpack.c.l.b16 %v118
    %v135 = vpack.c.b16 %v128, %v127
    %v136 = vpack.c.b16 %v130, %v129
    %v137 = vpack.c.b16 %v132, %v131
    %v138 = vpack.c.b16 %v134, %v133
    %vm143 = vcmask 523264
    %v145 = vsel %vm143, %v110, 0
    %147 = vmatprep.subr.bf16.mxu0 0
    %148 = vmatpush1.bf16.msra.mxu0 %v135
    %149 = vmatprep.subr.bf16.mxu0 0
    %150 = vmatpush1.bf16.msra.mxu0 %v136
    %151 = vmatprep.subr.bf16.mxu0 0
    %152 = vmatpush1.bf16.msra.mxu0 %v137
    %153 = vmatprep.subr.bf16.mxu0 0
    %154 = vmatpush1.bf16.msra.mxu0 %v138
    %155 = vmatprep.subr.bf16.mxu0 0
    %156 = vmatpush1.bf16.msra.mxu0 0
    %157 = vmatprep.subr.bf16.mxu0 0
    %158 = vmatpush1.bf16.msra.mxu0 0
    %159 = vmatprep.subr.bf16.mxu0 0
    %160 = vmatpush1.bf16.msra.mxu0 0
    %161 = vmatprep.subr.bf16.mxu0 0
    %162 = vmatpush1.bf16.msra.mxu0 0
    %163 = vmatprep.subr.bf16.mxu0 0
    %164 = vmatpush1.bf16.msra.mxu0 0
    %165 = vmatprep.subr.bf16.mxu0 0
    %166 = vmatpush1.bf16.msra.mxu0 0
    %167 = vmatprep.subr.bf16.mxu0 0
    %168 = vmatpush1.bf16.msra.mxu0 0
    %169 = vmatprep.subr.bf16.mxu0 0
    %170 = vmatpush1.bf16.msra.mxu0 0
    %171 = vmatprep.subr.bf16.mxu0 0
    %172 = vmatpush1.bf16.msra.mxu0 0
    %173 = vmatprep.subr.bf16.mxu0 0
    %174 = vmatpush1.bf16.msra.mxu0 0
    %175 = vmatprep.subr.bf16.mxu0 0
    %176 = vmatpush1.bf16.msra.mxu0 0
    %177 = vmatprep.subr.bf16.mxu0 0
    %178 = vmatpush1.bf16.msra.mxu0 0
    %179 = vmatprep.mubr.bf16.mxu0 0
    %180 = vmatmul.mubr.bf16.gmra.mrb[0].mxu0 %v145
    %v181 = vpop.f32.mrb[0].mxu0
    %v182 = vadd.f32 0.0, %v181
    %v183 = vpop.f32.mrb[0].mxu0
    %v184 = vpop.f32.mrb[0].mxu0
    %v185 = vadd.f32 0.0, %v184
    %v186 = vpop.f32.mrb[0].mxu0
    %187 = vdwg.mxu0
    %v188 = vadd.f32 %v108, %v182
    %v189 = vadd.f32 %v109, %v185
    %190 = vst.msk [vmem:[#allocation2] sm:$0xff] %vm61, %v188
    %191 = vst.msk [vmem:[#allocation2 + $0x8] sm:$0xff] %vm61, %v189
    // Predicated region
    $region34: #{decoder_layer_forward.17} parent=1 // pred_check
      %p192 = pneg %p28
    $region35: #{decoder_layer_forward.17} parent=1 // pred_check_branch
      %194 = sbr.rel (%p192) target = $region37
    $region36: #{decoder_layer_forward.17} parent=1 // pred_region
      %v195 = vld [vmem:[%s0] sm:$0xff]
      %v196 = vld [vmem:[%s0 + $0x8] sm:$0xff]
      %v197 = vld [vmem:[#allocation2] sm:$0xff]
      %v198 = vld [vmem:[#allocation2 + $0x8] sm:$0xff]
      %v199 = vadd.f32 %v195, %v197
      %v200 = vadd.f32 %v196, %v198
      %v201 = vld [vmem:[%s4] sm:$0x1]
      %v203 = vlaneseq
      %v204 = vshrl.u32 %v203, 7
      %v205 = vsub.s32 0, %v204
      %v206 = vrot.slane %v201, %v205
      %v208 = vadd.f32 %v199, %v206
      %v209 = vadd.f32 %v200, %v206
      %v210 = vld [vmem:[%s5] sm:$0x1]
      %v211 = vld [vmem:[%s6] sm:$0x1]
      %v212 = vsel %vm61, %v208, 0.0
      %213 = vadd.xlane.f32.xlu0 %v212
      %v214 = vpop.xlane.xlu0 %213
      %v215 = vsel %vm61, %v209, 0.0
      %216 = vadd.xlane.f32.xlu0 %v215
      %v217 = vpop.xlane.xlu0 %216
      %v218 = vrcp.pop 32.0
      %v219 = vmul.f32 %v214, %v218
      %v220 = vmul.f32 %v217, %v218
      %v221 = vsub.f32 %v208, %v219
      %v222 = vsub.f32 %v209, %v220
      %v223 = vmul.f32 %v221, %v221
      %v224 = vmul.f32 %v222, %v222
      %v225 = vsel %vm61, %v223, 0.0
      %226 = vadd.xlane.f32.xlu0 %v225
      %v227 = vpop.xlane.xlu0 %226
      %v228 = vsel %vm61, %v224, 0.0
      %229 = vadd.xlane.f32.xlu0 %v228
      %v230 = vpop.xlane.xlu0 %229
      %v231 = vmul.f32 %v227, %v218
      %v232 = vmul.f32 %v230, %v218
      %v233 = vadd.f32 %v231, 1e-05
      %v234 = vadd.f32 %v232, 1e-05
      %v235 = vrsqrt.pop %v233
      %v236 = vrsqrt.pop %v234
      %v237 = vmul.f32 %v221, %v235
      %v238 = vmul.f32 %v222, %v236
      %v240 = vlaneseq
      %v241 = vshrl.u32 %v240, 7
      %v242 = vsub.s32 0, %v241
      %v243 = vrot.slane %v210, %v242
      %v245 = vmul.f32 %v237, %v243
      %v246 = vmul.f32 %v238, %v243
      %v248 = vlaneseq
      %v249 = vshrl.u32 %v248, 7
      %v250 = vsub.s32 0, %v249
      %v251 = vrot.slane %v211, %v250
      %v253 = vadd.f32 %v245, %v251
      %v254 = vadd.f32 %v246, %v251
      %255 = vst.msk [vmem:[#allocation3] sm:$0xff] %vm61, %v253
      %256 = vst.msk [vmem:[#allocation3 + $0x8] sm:$0xff] %vm61, %v254
    $region37: #{decoder_layer_forward.17} parent=1 // pred_fallthru
      _
    // Predicated region
    $region38: #{decoder_layer_forward.17} parent=1 // pred_check
      _
    $region39: #{decoder_layer_forward.17} parent=1 // pred_check_branch
      %258 = sbr.rel (0) target = $region41
    $region40: #{decoder_layer_forward.17} parent=1 // pred_region
      %s260 = ssub.s32 256, 256
      %261 = vsyncadd [#allocation4], %s260
      %s262 = sshll.u32 [#allocation3], 4
      %s263 = int_to_ptr.vmem [resolvable:$true] %s262
      %268 = dma.vmem_to_hbm [thread:$0]  %s263, 256, %s7, [#allocation4], 128, 128, 8
    $region41: #{decoder_layer_forward.17} parent=1 // pred_fallthru
      _
    // Predicated region
    $region42: #{decoder_layer_forward.17} parent=1 // pred_check
      _
    $region43: #{decoder_layer_forward.17} parent=1 // pred_check_branch
      %270 = sbr.rel (0) target = $region45
    $region44: #{decoder_layer_forward.17} parent=1 // pred_region
      %271 = dma.done [#allocation4], 256
    $region45: #{decoder_layer_forward.17} parent=1 // pred_fallthru
      _
    %272 = vsyncpa [#allocation4], 1

// kernel: decoder_layer_forward.12
$region0: #{decoder_layer_forward.12}
  #allocation0 [shape = 'u32[]', space=smem, size = 0x4, offset = 0x4, fixed_abs, tag = 'smem constant byte address 0x4 - core index']
  #allocation1 [shape = 'u32[144,128]{1,0:T(1,128)}', space=vmem, size = 0x12000, scoped, tag = 'internal scratch']
  %s0 = inlined_call_operand.vmem [shape: bf16[16,32], index: 0, kind: input, shape index: {}]
  %s1 = inlined_call_operand.vmem [shape: f32[16,32], index: 1, kind: input, shape index: {}]
  %s2 = inlined_call_operand.vmem [shape: bf16[32,32], index: 2, kind: input, shape index: {}]
  %s3 = inlined_call_operand.vmem [shape: f32[1,32], index: 3, kind: input, shape index: {}]
  %s4 = inlined_call_operand.vmem [shape: f32[1,32], index: 4, kind: input, shape index: {}]
  %s5 = inlined_call_operand.vmem [shape: f32[1,32], index: 5, kind: input, shape index: {}]
  %s6 = inlined_call_operand.vmem [shape: f32[16,32], index: 6, kind: output, shape index: {}]
  %s7 = sld [smem:[#allocation0]]
  $region34: #{decoder_layer_forward.12} parent=0
    _
  %s9 = ssub.s32 1, %s7
  %s10 = scalar_select 0, %s9, %s7
  // Predicated region
  $region2: #{decoder_layer_forward.12} parent=0 // pred_check
    _
  $region3: #{decoder_layer_forward.12} parent=0 // pred_check_branch
    %12 = sbr.rel (0) target = $region5
  $region4: #{decoder_layer_forward.12} parent=0 // pred_region
    _
  $region5: #{decoder_layer_forward.12} parent=0 // pred_fallthru
    _
  // Predicated region
  $region6: #{decoder_layer_forward.12} parent=0 // pred_check
    _
  $region7: #{decoder_layer_forward.12} parent=0 // pred_check_branch
    %14 = sbr.rel (0) target = $region9
  $region8: #{decoder_layer_forward.12} parent=0 // pred_region
    _
  $region9: #{decoder_layer_forward.12} parent=0 // pred_fallthru
    _
  // Predicated region
  $region10: #{decoder_layer_forward.12} parent=0 // pred_check
    _
  $region11: #{decoder_layer_forward.12} parent=0 // pred_check_branch
    %16 = sbr.rel (0) target = $region13
  $region12: #{decoder_layer_forward.12} parent=0 // pred_region
    _
  $region13: #{decoder_layer_forward.12} parent=0 // pred_fallthru
    _
  // Predicated region
  $region14: #{decoder_layer_forward.12} parent=0 // pred_check
    _
  $region15: #{decoder_layer_forward.12} parent=0 // pred_check_branch
    %18 = sbr.rel (0) target = $region17
  $region16: #{decoder_layer_forward.12} parent=0 // pred_region
    _
  $region17: #{decoder_layer_forward.12} parent=0 // pred_fallthru
    _
  // Predicated region
  $region18: #{decoder_layer_forward.12} parent=0 // pred_check
    _
  $region19: #{decoder_layer_forward.12} parent=0 // pred_check_branch
    %20 = sbr.rel (0) target = $region21
  $region20: #{decoder_layer_forward.12} parent=0 // pred_region
    _
  $region21: #{decoder_layer_forward.12} parent=0 // pred_fallthru
    _
  // Predicated region
  $region22: #{decoder_layer_forward.12} parent=0 // pred_check
    _
  $region23: #{decoder_layer_forward.12} parent=0 // pred_check_branch
    %22 = sbr.rel (0) target = $region25
  $region24: #{decoder_layer_forward.12} parent=0 // pred_region
    _
  $region25: #{decoder_layer_forward.12} parent=0 // pred_fallthru
    _
  %v24 = vld [vmem:[%s0] sm:$0xf]
  %v25 = vld [vmem:[%s0 + $0x4] sm:$0xf]
  %v26 = vld [vmem:[%s2] sm:$0xf]
  %v27 = vld [vmem:[%s2 + $0x4] sm:$0xf]
  %v28 = vld [vmem:[%s2 + $0x8] sm:$0xf]
  %v29 = vld [vmem:[%s2 + $0xc] sm:$0xf]
  %v30 = vld [vmem:[%s3] sm:$0x1]
  %v32 = vlaneseq
  %v33 = vshrl.u32 %v32, 7
  %v34 = vsub.s32 0, %v33
  %v35 = vrot.slane %v30, %v34
  %v39 = vunpack.c.l.b16 %v24
  %v40 = vunpack.c.l.b16 %v25
  %v41 = vpack.c.b16 %v40, %v39
  %v46 = vunpack.c.l.b16 %v26
  %v47 = vunpack.c.l.b16 %v27
  %v48 = vunpack.c.l.b16 %v28
  %v49 = vunpack.c.l.b16 %v29
  %v50 = vpack.c.b16 %v47, %v46
  %v51 = vpack.c.b16 %v49, %v48
  %vm54 = vcmask 261120
  %v56 = vsel %vm54, %v41, 0
  %58 = vmatprep.subr.bf16.mxu0 0
  %59 = vmatpush1.bf16.msra.mxu0 %v50
  %60 = vmatprep.subr.bf16.mxu0 0
  %61 = vmatpush1.bf16.msra.mxu0 %v51
  %62 = vmatprep.subr.bf16.mxu0 0
  %63 = vmatpush1.bf16.msra.mxu0 0
  %64 = vmatprep.subr.bf16.mxu0 0
  %65 = vmatpush1.bf16.msra.mxu0 0
  %66 = vmatprep.subr.bf16.mxu0 0
  %67 = vmatpush1.bf16.msra.mxu0 0
  %68 = vmatprep.subr.bf16.mxu0 0
  %69 = vmatpush1.bf16.msra.mxu0 0
  %70 = vmatprep.subr.bf16.mxu0 0
  %71 = vmatpush1.bf16.msra.mxu0 0
  %72 = vmatprep.subr.bf16.mxu0 0
  %73 = vmatpush1.bf16.msra.mxu0 0
  %74 = vmatprep.subr.bf16.mxu0 0
  %75 = vmatpush1.bf16.msra.mxu0 0
  %76 = vmatprep.subr.bf16.mxu0 0
  %77 = vmatpush1.bf16.msra.mxu0 0
  %78 = vmatprep.subr.bf16.mxu0 0
  %79 = vmatpush1.bf16.msra.mxu0 0
  %80 = vmatprep.subr.bf16.mxu0 0
  %81 = vmatpush1.bf16.msra.mxu0 0
  %82 = vmatprep.subr.bf16.mxu0 0
  %83 = vmatpush1.bf16.msra.mxu0 0
  %84 = vmatprep.subr.bf16.mxu0 0
  %85 = vmatpush1.bf16.msra.mxu0 0
  %86 = vmatprep.subr.bf16.mxu0 0
  %87 = vmatpush1.bf16.msra.mxu0 0
  %88 = vmatprep.subr.bf16.mxu0 0
  %89 = vmatpush1.bf16.msra.mxu0 0
  %90 = vmatprep.mubr.bf16.mxu0 0
  %91 = vmatmul.mubr.bf16.gmra.mrb[0].mxu0 %v56
  %v92 = vpop.f32.mrb[0].mxu0
  %v93 = vadd.f32 %v35, %v92
  %v94 = vpop.f32.mrb[0].mxu0
  %v95 = vpop.f32.mrb[0].mxu0
  %v96 = vadd.f32 %v35, %v95
  %v97 = vpop.f32.mrb[0].mxu0
  %98 = vdwg.mxu0
  %v99 = vld [vmem:[%s1] sm:$0xff]
  %v100 = vld [vmem:[%s1 + $0x8] sm:$0xff]
  %v101 = vadd.f32 %v99, %v93
  %v102 = vadd.f32 %v100, %v96
  %v103 = vld [vmem:[%s4] sm:$0x1]
  %v104 = vld [vmem:[%s5] sm:$0x1]
  %v105 = vsel %vm54, %v101, 0.0
  %106 = vadd.xlane.f32.xlu0 %v105
  %v107 = vpop.xlane.xlu0 %106
  %v108 = vsel %vm54, %v102, 0.0
  %109 = vadd.xlane.f32.xlu0 %v108
  %v110 = vpop.xlane.xlu0 %109
  %v111 = vrcp.pop 32.0
  %v112 = vmul.f32 %v107, %v111
  %v113 = vmul.f32 %v110, %v111
  %v114 = vsub.f32 %v101, %v112
  %v115 = vsub.f32 %v102, %v113
  %v116 = vmul.f32 %v114, %v114
  %v117 = vmul.f32 %v115, %v115
  %v118 = vsel %vm54, %v116, 0.0
  %119 = vadd.xlane.f32.xlu0 %v118
  %v120 = vpop.xlane.xlu0 %119
  %v121 = vsel %vm54, %v117, 0.0
  %122 = vadd.xlane.f32.xlu0 %v121
  %v123 = vpop.xlane.xlu0 %122
  %v124 = vmul.f32 %v120, %v111
  %v125 = vmul.f32 %v123, %v111
  %v126 = vadd.f32 %v124, 1e-05
  %v127 = vadd.f32 %v125, 1e-05
  %v128 = vrsqrt.pop %v126
  %v129 = vrsqrt.pop %v127
  %v130 = vmul.f32 %v114, %v128
  %v131 = vmul.f32 %v115, %v129
  %v133 = vlaneseq
  %v134 = vshrl.u32 %v133, 7
  %v135 = vsub.s32 0, %v134
  %v136 = vrot.slane %v103, %v135
  %v138 = vmul.f32 %v130, %v136
  %v139 = vmul.f32 %v131, %v136
  %v141 = vlaneseq
  %v142 = vshrl.u32 %v141, 7
  %v143 = vsub.s32 0, %v142
  %v144 = vrot.slane %v104, %v143
  %v146 = vadd.f32 %v138, %v144
  %v147 = vadd.f32 %v139, %v144
  %148 = vst.msk [vmem:[%s6] sm:$0xff] %vm54, %v146
  %149 = vst.msk [vmem:[%s6 + $0x8] sm:$0xff] %vm54, %v147
  // Predicated region
  $region26: #{decoder_layer_forward.12} parent=0 // pred_check
    _
  $region27: #{decoder_layer_forward.12} parent=0 // pred_check_branch
    %151 = sbr.rel (0) target = $region29
  $region28: #{decoder_layer_forward.12} parent=0 // pred_region
    _
  $region29: #{decoder_layer_forward.12} parent=0 // pred_fallthru
    _
  // Predicated region
  $region30: #{decoder_layer_forward.12} parent=0 // pred_check
    _
  $region31: #{decoder_layer_forward.12} parent=0 // pred_check_branch
    %153 = sbr.rel (0) target = $region33
  $region32: #{decoder_layer_forward.12} parent=0 // pred_region
    _
  $region33: #{decoder_layer_forward.12} parent=0 // pred_fallthru
    _

// kernel: decoder_layer_forward.10
$region0: #{decoder_layer_forward.10}
  #allocation0 [shape = 'u32[]', space=smem, size = 0x4, offset = 0x4, fixed_abs, tag = 'smem constant byte address 0x4 - core index']
  #allocation1 [shape = 'u32[144,128]{1,0:T(1,128)}', space=vmem, size = 0x12000, scoped, tag = 'internal scratch']
  %s0 = inlined_call_operand.hbm [shape: f32[16,32], index: 0, kind: input, shape index: {}]
  %s1 = inlined_call_operand.vmem [shape: bf16[32,64], index: 1, kind: input, shape index: {}]
  %s2 = inlined_call_operand.vmem [shape: f32[1,64], index: 2, kind: input, shape index: {}]
  %s3 = inlined_call_operand.vmem [shape: bf16[16,64], index: 3, kind: output, shape index: {}]
  %s4 = sld [smem:[#allocation0]]
  $region26: #{decoder_layer_forward.10} parent=0
    _
  %s6 = ssub.s32 1, %s4
  %s7 = scalar_select 0, %s6, %s4
  $region1: #{decoder_layer_forward.10} parent=0
    #allocation2 [shape = 'u8[8192]{0}', space=vmem, size = 0x2000, scoped, tag = 'input window, operand 0, single buffered']
    #allocation3 [shape = 's32[1]{0}', space=sflag, size = 0x4, scoped, tag = 'scoped memory for decoder_layer_forward.10']
    %8 = vsyncpa [#allocation3], 0
    // Predicated region
    $region2: #{decoder_layer_forward.10} parent=1 // pred_check
      _
    $region3: #{decoder_layer_forward.10} parent=1 // pred_check_branch
      %10 = sbr.rel (0) target = $region5
    $region4: #{decoder_layer_forward.10} parent=1 // pred_region
      %s12 = ssub.s32 256, 256
      %13 = vsyncadd [#allocation3], %s12
      %s14 = sshll.u32 [#allocation2], 4
      %s15 = int_to_ptr.vmem [resolvable:$true] %s14
      %20 = dma.hbm_to_vmem [thread:$0]  %s0, 256, %s15, [#allocation3], 128, 128, 8
    $region5: #{decoder_layer_forward.10} parent=1 // pred_fallthru
      _
    // Predicated region
    $region6: #{decoder_layer_forward.10} parent=1 // pred_check
      _
    $region7: #{decoder_layer_forward.10} parent=1 // pred_check_branch
      %22 = sbr.rel (0) target = $region9
    $region8: #{decoder_layer_forward.10} parent=1 // pred_region
      _
    $region9: #{decoder_layer_forward.10} parent=1 // pred_fallthru
      _
    // Predicated region
    $region10: #{decoder_layer_forward.10} parent=1 // pred_check
      _
    $region11: #{decoder_layer_forward.10} parent=1 // pred_check_branch
      %24 = sbr.rel (0) target = $region13
    $region12: #{decoder_layer_forward.10} parent=1 // pred_region
      _
    $region13: #{decoder_layer_forward.10} parent=1 // pred_fallthru
      _
    // Predicated region
    $region14: #{decoder_layer_forward.10} parent=1 // pred_check
      _
    $region15: #{decoder_layer_forward.10} parent=1 // pred_check_branch
      %26 = sbr.rel (0) target = $region17
    $region16: #{decoder_layer_forward.10} parent=1 // pred_region
      %27 = dma.done [#allocation3], 256
    $region17: #{decoder_layer_forward.10} parent=1 // pred_fallthru
      _
    %v29 = vld [vmem:[#allocation2] sm:$0xff]
    %v30 = vld [vmem:[#allocation2 + $0x8] sm:$0xff]
    %v31 = vpack.c.bf16 %v30, %v29
    %v32 = vld [vmem:[%s1] sm:$0xf]
    %v33 = vld [vmem:[%s1 + $0x4] sm:$0xf]
    %v34 = vld [vmem:[%s1 + $0x8] sm:$0xf]
    %v35 = vld [vmem:[%s1 + $0xc] sm:$0xf]
    %v36 = vld [vmem:[%s2] sm:$0x1]
    %v38 = vlaneseq
    %v39 = vshrl.u32 %v38, 7
    %v40 = vsub.s32 0, %v39
    %v41 = vrot.slane %v36, %v40
    %v47 = vunpack.c.l.b16 %v32
    %v48 = vunpack.c.l.b16 %v33
    %v49 = vunpack.c.l.b16 %v34
    %v50 = vunpack.c.l.b16 %v35
    %v51 = vpack.c.b16 %v48, %v47
    %v52 = vpack.c.b16 %v50, %v49
    %vm55 = vcmask 261120
    %v57 = vsel %vm55, %v31, 0
    %59 = vmatprep.subr.bf16.mxu0 0
    %60 = vmatpush1.bf16.msra.mxu0 %v51
    %61 = vmatprep.subr.bf16.mxu0 0
    %62 = vmatpush1.bf16.msra.mxu0 %v52
    %63 = vmatprep.subr.bf16.mxu0 0
    %64 = vmatpush1.bf16.msra.mxu0 0
    %65 = vmatprep.subr.bf16.mxu0 0
    %66 = vmatpush1.bf16.msra.mxu0 0
    %67 = vmatprep.subr.bf16.mxu0 0
    %68 = vmatpush1.bf16.msra.mxu0 0
    %69 = vmatprep.subr.bf16.mxu0 0
    %70 = vmatpush1.bf16.msra.mxu0 0
    %71 = vmatprep.subr.bf16.mxu0 0
    %72 = vmatpush1.bf16.msra.mxu0 0
    %73 = vmatprep.subr.bf16.mxu0 0
    %74 = vmatpush1.bf16.msra.mxu0 0
    %75 = vmatprep.subr.bf16.mxu0 0
    %76 = vmatpush1.bf16.msra.mxu0 0
    %77 = vmatprep.subr.bf16.mxu0 0
    %78 = vmatpush1.bf16.msra.mxu0 0
    %79 = vmatprep.subr.bf16.mxu0 0
    %80 = vmatpush1.bf16.msra.mxu0 0
    %81 = vmatprep.subr.bf16.mxu0 0
    %82 = vmatpush1.bf16.msra.mxu0 0
    %83 = vmatprep.subr.bf16.mxu0 0
    %84 = vmatpush1.bf16.msra.mxu0 0
    %85 = vmatprep.subr.bf16.mxu0 0
    %86 = vmatpush1.bf16.msra.mxu0 0
    %87 = vmatprep.subr.bf16.mxu0 0
    %88 = vmatpush1.bf16.msra.mxu0 0
    %89 = vmatprep.subr.bf16.mxu0 0
    %90 = vmatpush1.bf16.msra.mxu0 0
    %91 = vmatprep.mubr.bf16.mxu0 0
    %92 = vmatmul.mubr.bf16.gmra.mrb[0].mxu0 %v57
    %v93 = vpop.f32.mrb[0].mxu0
    %v94 = vadd.f32 %v41, %v93
    %v95 = vpop.f32.mrb[0].mxu0
    %v96 = vpop.f32.mrb[0].mxu0
    %v97 = vadd.f32 %v41, %v96
    %v98 = vpop.f32.mrb[0].mxu0
    %99 = vdwg.mxu0
    %v100 = vpack.c.bf16 %v97, %v94
    %v102 = vunpack.c.l.b16 %v100
    %v103 = vunpack.c.h.b16 %v100
    %v104 = vpack.c.b16 %v102, %v102
    %v105 = vpack.c.b16 %v103, %v103
    %vm108 = vcmask 519168
    %109 = vst.msk [vmem:[%s3] sm:$0xf] %vm108, %v104
    %110 = vst.msk [vmem:[%s3 + $0x4] sm:$0xf] %vm108, %v105
    // Predicated region
    $region18: #{decoder_layer_forward.10} parent=1 // pred_check
      _
    $region19: #{decoder_layer_forward.10} parent=1 // pred_check_branch
      %112 = sbr.rel (0) target = $region21
    $region20: #{decoder_layer_forward.10} parent=1 // pred_region
      _
    $region21: #{decoder_layer_forward.10} parent=1 // pred_fallthru
      _
    // Predicated region
    $region22: #{decoder_layer_forward.10} parent=1 // pred_check
      _
    $region23: #{decoder_layer_forward.10} parent=1 // pred_check_branch
      %114 = sbr.rel (0) target = $region25
    $region24: #{decoder_layer_forward.10} parent=1 // pred_region
      _
    $region25: #{decoder_layer_forward.10} parent=1 // pred_fallthru
      _
    %115 = vsyncpa [#allocation3], 1

// kernel: decoder_layer_forward.9
$region0: #{decoder_layer_forward.9}
  #allocation0 [shape = 'u32[]', space=smem, size = 0x4, offset = 0x4, fixed_abs, tag = 'smem constant byte address 0x4 - core index']
  #allocation1 [shape = 'u32[144,128]{1,0:T(1,128)}', space=vmem, size = 0x12000, scoped, tag = 'internal scratch']
  %s0 = inlined_call_operand.vmem [shape: f32[16,32], index: 0, kind: input, shape index: {}]
  %s1 = inlined_call_operand.vmem [shape: bf16[32,32], index: 1, kind: input, shape index: {}]
  %s2 = inlined_call_operand.vmem [shape: f32[1,32], index: 2, kind: input, shape index: {}]
  %s3 = inlined_call_operand.vmem [shape: bf16[16,32], index: 3, kind: output, shape index: {}]
  %s4 = sld [smem:[#allocation0]]
  $region22: #{decoder_layer_forward.9} parent=0
    _
  %s6 = ssub.s32 1, %s4
  %s7 = scalar_select 0, %s6, %s4
  // Predicated region
  $region2: #{decoder_layer_forward.9} parent=0 // pred_check
    _
  $region3: #{decoder_layer_forward.9} parent=0 // pred_check_branch
    %9 = sbr.rel (0) target = $region5
  $region4: #{decoder_layer_forward.9} parent=0 // pred_region
    _
  $region5: #{decoder_layer_forward.9} parent=0 // pred_fallthru
    _
  // Predicated region
  $region6: #{decoder_layer_forward.9} parent=0 // pred_check
    _
  $region7: #{decoder_layer_forward.9} parent=0 // pred_check_branch
    %11 = sbr.rel (0) target = $region9
  $region8: #{decoder_layer_forward.9} parent=0 // pred_region
    _
  $region9: #{decoder_layer_forward.9} parent=0 // pred_fallthru
    _
  // Predicated region
  $region10: #{decoder_layer_forward.9} parent=0 // pred_check
    _
  $region11: #{decoder_layer_forward.9} parent=0 // pred_check_branch
    %13 = sbr.rel (0) target = $region13
  $region12: #{decoder_layer_forward.9} parent=0 // pred_region
    _
  $region13: #{decoder_layer_forward.9} parent=0 // pred_fallthru
    _
  %v15 = vld [vmem:[%s0] sm:$0xff]
  %v16 = vld [vmem:[%s0 + $0x8] sm:$0xff]
  %v17 = vpack.c.bf16 %v16, %v15
  %v18 = vld [vmem:[%s1] sm:$0xf]
  %v19 = vld [vmem:[%s1 + $0x4] sm:$0xf]
  %v20 = vld [vmem:[%s1 + $0x8] sm:$0xf]
  %v21 = vld [vmem:[%s1 + $0xc] sm:$0xf]
  %v22 = vld [vmem:[%s2] sm:$0x1]
  %v24 = vlaneseq
  %v25 = vshrl.u32 %v24, 7
  %v26 = vsub.s32 0, %v25
  %v27 = vrot.slane %v22, %v26
  %v33 = vunpack.c.l.b16 %v18
  %v34 = vunpack.c.l.b16 %v19
  %v35 = vunpack.c.l.b16 %v20
  %v36 = vunpack.c.l.b16 %v21
  %v37 = vpack.c.b16 %v34, %v33
  %v38 = vpack.c.b16 %v36, %v35
  %vm41 = vcmask 261120
  %v43 = vsel %vm41, %v17, 0
  %45 = vmatprep.subr.bf16.mxu0 0
  %46 = vmatpush1.bf16.msra.mxu0 %v37
  %47 = vmatprep.subr.bf16.mxu0 0
  %48 = vmatpush1.bf16.msra.mxu0 %v38
  %49 = vmatprep.subr.bf16.mxu0 0
  %50 = vmatpush1.bf16.msra.mxu0 0
  %51 = vmatprep.subr.bf16.mxu0 0
  %52 = vmatpush1.bf16.msra.mxu0 0
  %53 = vmatprep.subr.bf16.mxu0 0
  %54 = vmatpush1.bf16.msra.mxu0 0
  %55 = vmatprep.subr.bf16.mxu0 0
  %56 = vmatpush1.bf16.msra.mxu0 0
  %57 = vmatprep.subr.bf16.mxu0 0
  %58 = vmatpush1.bf16.msra.mxu0 0
  %59 = vmatprep.subr.bf16.mxu0 0
  %60 = vmatpush1.bf16.msra.mxu0 0
  %61 = vmatprep.subr.bf16.mxu0 0
  %62 = vmatpush1.bf16.msra.mxu0 0
  %63 = vmatprep.subr.bf16.mxu0 0
  %64 = vmatpush1.bf16.msra.mxu0 0
  %65 = vmatprep.subr.bf16.mxu0 0
  %66 = vmatpush1.bf16.msra.mxu0 0
  %67 = vmatprep.subr.bf16.mxu0 0
  %68 = vmatpush1.bf16.msra.mxu0 0
  %69 = vmatprep.subr.bf16.mxu0 0
  %70 = vmatpush1.bf16.msra.mxu0 0
  %71 = vmatprep.subr.bf16.mxu0 0
  %72 = vmatpush1.bf16.msra.mxu0 0
  %73 = vmatprep.subr.bf16.mxu0 0
  %74 = vmatpush1.bf16.msra.mxu0 0
  %75 = vmatprep.subr.bf16.mxu0 0
  %76 = vmatpush1.bf16.msra.mxu0 0
  %77 = vmatprep.mubr.bf16.mxu0 0
  %78 = vmatmul.mubr.bf16.gmra.mrb[0].mxu0 %v43
  %v79 = vpop.f32.mrb[0].mxu0
  %v80 = vadd.f32 %v27, %v79
  %v81 = vpop.f32.mrb[0].mxu0
  %v82 = vpop.f32.mrb[0].mxu0
  %v83 = vadd.f32 %v27, %v82
  %v84 = vpop.f32.mrb[0].mxu0
  %85 = vdwg.mxu0
  %v86 = vpack.c.bf16 %v83, %v80
  %v88 = vunpack.c.l.b16 %v86
  %v89 = vunpack.c.h.b16 %v86
  %v90 = vpack.c.b16 %v88, %v88
  %v91 = vpack.c.b16 %v89, %v89
  %vm94 = vcmask 257024
  %95 = vst.msk [vmem:[%s3] sm:$0xf] %vm94, %v90
  %96 = vst.msk [vmem:[%s3 + $0x4] sm:$0xf] %vm94, %v91
  // Predicated region
  $region14: #{decoder_layer_forward.9} parent=0 // pred_check
    _
  $region15: #{decoder_layer_forward.9} parent=0 // pred_check_branch
    %98 = sbr.rel (0) target = $region17
  $region16: #{decoder_layer_forward.9} parent=0 // pred_region
    _
  $region17: #{decoder_layer_forward.9} parent=0 // pred_fallthru
    _
  // Predicated region
  $region18: #{decoder_layer_forward.9} parent=0 // pred_check
    _
  $region19: #{decoder_layer_forward.9} parent=0 // pred_check_branch
    %100 = sbr.rel (0) target = $region21
  $region20: #{decoder_layer_forward.9} parent=0 // pred_region
    _
  $region21: #{decoder_layer_forward.9} parent=0 // pred_fallthru
    _

// kernel: decoder_layer_forward.14
$region0: #{decoder_layer_forward.14}
  #allocation0 [shape = 'u32[]', space=smem, size = 0x4, offset = 0x4, fixed_abs, tag = 'smem constant byte address 0x4 - core index']
  #allocation1 [shape = 'u32[144,128]{1,0:T(1,128)}', space=vmem, size = 0x12000, scoped, tag = 'internal scratch']
  %s0 = inlined_call_operand.vmem [shape: f32[16,32], index: 0, kind: input, shape index: {}]
  %s1 = inlined_call_operand.vmem [shape: bf16[32,64], index: 1, kind: input, shape index: {}]
  %s2 = inlined_call_operand.vmem [shape: f32[1,64], index: 2, kind: input, shape index: {}]
  %s3 = inlined_call_operand.vmem [shape: bf16[16,64], index: 3, kind: output, shape index: {}]
  %s4 = sld [smem:[#allocation0]]
  $region22: #{decoder_layer_forward.14} parent=0
    _
  %s6 = ssub.s32 1, %s4
  %s7 = scalar_select 0, %s6, %s4
  // Predicated region
  $region2: #{decoder_layer_forward.14} parent=0 // pred_check
    _
  $region3: #{decoder_layer_forward.14} parent=0 // pred_check_branch
    %9 = sbr.rel (0) target = $region5
  $region4: #{decoder_layer_forward.14} parent=0 // pred_region
    _
  $region5: #{decoder_layer_forward.14} parent=0 // pred_fallthru
    _
  // Predicated region
  $region6: #{decoder_layer_forward.14} parent=0 // pred_check
    _
  $region7: #{decoder_layer_forward.14} parent=0 // pred_check_branch
    %11 = sbr.rel (0) target = $region9
  $region8: #{decoder_layer_forward.14} parent=0 // pred_region
    _
  $region9: #{decoder_layer_forward.14} parent=0 // pred_fallthru
    _
  // Predicated region
  $region10: #{decoder_layer_forward.14} parent=0 // pred_check
    _
  $region11: #{decoder_layer_forward.14} parent=0 // pred_check_branch
    %13 = sbr.rel (0) target = $region13
  $region12: #{decoder_layer_forward.14} parent=0 // pred_region
    _
  $region13: #{decoder_layer_forward.14} parent=0 // pred_fallthru
    _
  %v15 = vld [vmem:[%s0] sm:$0xff]
  %v16 = vld [vmem:[%s0 + $0x8] sm:$0xff]
  %v17 = vpack.c.bf16 %v16, %v15
  %v18 = vld [vmem:[%s1] sm:$0xf]
  %v19 = vld [vmem:[%s1 + $0x4] sm:$0xf]
  %v20 = vld [vmem:[%s1 + $0x8] sm:$0xf]
  %v21 = vld [vmem:[%s1 + $0xc] sm:$0xf]
  %v22 = vld [vmem:[%s2] sm:$0x1]
  %v24 = vlaneseq
  %v25 = vshrl.u32 %v24, 7
  %v26 = vsub.s32 0, %v25
  %v27 = vrot.slane %v22, %v26
  %v33 = vunpack.c.l.b16 %v18
  %v34 = vunpack.c.l.b16 %v19
  %v35 = vunpack.c.l.b16 %v20
  %v36 = vunpack.c.l.b16 %v21
  %v37 = vpack.c.b16 %v34, %v33
  %v38 = vpack.c.b16 %v36, %v35
  %vm41 = vcmask 261120
  %v43 = vsel %vm41, %v17, 0
  %45 = vmatprep.subr.bf16.mxu0 0
  %46 = vmatpush1.bf16.msra.mxu0 %v37
  %47 = vmatprep.subr.bf16.mxu0 0
  %48 = vmatpush1.bf16.msra.mxu0 %v38
  %49 = vmatprep.subr.bf16.mxu0 0
  %50 = vmatpush1.bf16.msra.mxu0 0
  %51 = vmatprep.subr.bf16.mxu0 0
  %52 = vmatpush1.bf16.msra.mxu0 0
  %53 = vmatprep.subr.bf16.mxu0 0
  %54 = vmatpush1.bf16.msra.mxu0 0
  %55 = vmatprep.subr.bf16.mxu0 0
  %56 = vmatpush1.bf16.msra.mxu0 0
  %57 = vmatprep.subr.bf16.mxu0 0
  %58 = vmatpush1.bf16.msra.mxu0 0
  %59 = vmatprep.subr.bf16.mxu0 0
  %60 = vmatpush1.bf16.msra.mxu0 0
  %61 = vmatprep.subr.bf16.mxu0 0
  %62 = vmatpush1.bf16.msra.mxu0 0
  %63 = vmatprep.subr.bf16.mxu0 0
  %64 = vmatpush1.bf16.msra.mxu0 0
  %65 = vmatprep.subr.bf16.mxu0 0
  %66 = vmatpush1.bf16.msra.mxu0 0
  %67 = vmatprep.subr.bf16.mxu0 0
  %68 = vmatpush1.bf16.msra.mxu0 0
  %69 = vmatprep.subr.bf16.mxu0 0
  %70 = vmatpush1.bf16.msra.mxu0 0
  %71 = vmatprep.subr.bf16.mxu0 0
  %72 = vmatpush1.bf16.msra.mxu0 0
  %73 = vmatprep.subr.bf16.mxu0 0
  %74 = vmatpush1.bf16.msra.mxu0 0
  %75 = vmatprep.subr.bf16.mxu0 0
  %76 = vmatpush1.bf16.msra.mxu0 0
  %77 = vmatprep.mubr.bf16.mxu0 0
  %78 = vmatmul.mubr.bf16.gmra.mrb[0].mxu0 %v43
  %v79 = vpop.f32.mrb[0].mxu0
  %v80 = vadd.f32 %v27, %v79
  %v81 = vpop.f32.mrb[0].mxu0
  %v82 = vpop.f32.mrb[0].mxu0
  %v83 = vadd.f32 %v27, %v82
  %v84 = vpop.f32.mrb[0].mxu0
  %85 = vdwg.mxu0
  %v86 = vpack.c.bf16 %v83, %v80
  %v88 = vunpack.c.l.b16 %v86
  %v89 = vunpack.c.h.b16 %v86
  %v90 = vpack.c.b16 %v88, %v88
  %v91 = vpack.c.b16 %v89, %v89
  %vm94 = vcmask 519168
  %95 = vst.msk [vmem:[%s3] sm:$0xf] %vm94, %v90
  %96 = vst.msk [vmem:[%s3 + $0x4] sm:$0xf] %vm94, %v91
  // Predicated region
  $region14: #{decoder_layer_forward.14} parent=0 // pred_check
    _
  $region15: #{decoder_layer_forward.14} parent=0 // pred_check_branch
    %98 = sbr.rel (0) target = $region17
  $region16: #{decoder_layer_forward.14} parent=0 // pred_region
    _
  $region17: #{decoder_layer_forward.14} parent=0 // pred_fallthru
    _
  // Predicated region
  $region18: #{decoder_layer_forward.14} parent=0 // pred_check
    _
  $region19: #{decoder_layer_forward.14} parent=0 // pred_check_branch
    %100 = sbr.rel (0) target = $region21
  $region20: #{decoder_layer_forward.14} parent=0 // pred_region
    _
  $region21: #{decoder_layer_forward.14} parent=0 // pred_fallthru
    _

// kernel: decoder_layer_forward.11
$region0: #{decoder_layer_forward.11}
  #allocation0 [shape = 'u32[]', space=smem, size = 0x4, offset = 0x4, fixed_abs, tag = 'smem constant byte address 0x4 - core index']
  #allocation1 [shape = 'u32[144,128]{1,0:T(1,128)}', space=vmem, size = 0x12000, scoped, tag = 'internal scratch']
  %s0 = inlined_call_operand.vmem [shape: bf16[2,8,32], index: 0, kind: input, shape index: {}]
  %s1 = inlined_call_operand.vmem [shape: bf16[2,8,64], index: 1, kind: input, shape index: {}]
  %s2 = inlined_call_operand.vmem [shape: f32[2,8,8], index: 2, kind: input, shape index: {}]
  %s3 = inlined_call_operand.vmem [shape: bf16[2,8,32], index: 3, kind: output, shape index: {}]
  %s4 = sld [smem:[#allocation0]]
  $region45: #{decoder_layer_forward.11} parent=0
    _
  %s6 = ssub.s32 1, %s4
  %s7 = scalar_select 0, %s6, %s4
  loop: start=0, step=1, limit=4
  $region2: #{decoder_layer_forward.11} parent=0 // loop_pre_header
    _
  $region3: #{decoder_layer_forward.11} parent=0 // loop_header
    %s9 = sphi 0, %s13
    %p10 = scmp.ge.s32.totalorder %s9, 4
    %s16 = sphi 0, %s28
    %s17 = sphi 0, %s24
    %s18 = sphi 0, %s16
    %s19 = sphi 0, %s17
    %s20 = sphi 0, %s18
    %s21 = sphi 0, %s19
    %s33 = sphi 0, %s35
    %s36 = sphi 0, %s33
    %s37 = sphi 0, %s36
    %s53 = sphi 0, %s37
    %s59 = sphi 0, %s61
    %s62 = sphi 0, %s59
    %s63 = sphi 0, %s62
    %s79 = sphi 0, %s63
    %s87 = sphi 0, %s89
    %s90 = sphi 0, %s87
    %s91 = sphi 0, %s90
    %s107 = sphi 0, %s91
    %s115 = sphi 0, %s117
    %s118 = sphi 0, %s115
    %s119 = sphi 0, %s118
    %s135 = sphi 0, %s119
  $region4: #{decoder_layer_forward.11} parent=0 // loop_header_branch
    %12 = sbr.rel (%p10) target = $region8
  $region5: #{decoder_layer_forward.11} parent=0 // loop_body
    %s14 = ssub.s32 %s9, 1
    %s15 = ssub.s32 %s9, 2
    %s22 = sadd.s32 1, %s17
    %p23 = scmp.ge.s32.totalorder %s22, 1
    %s24 = scalar_select %p23, 0, %s22
    %s25 = sadd.s32 1, %s16
    %s26 = scalar_select %p23, %s25, %s16
    %p27 = scmp.ge.s32.totalorder %s26, 2
    %s28 = scalar_select %p27, 0, %s26
    %s29 = ssub.s32 %s16, %s28
    %s30 = ssub.s32 %s17, %s24
    %s31 = sor.u32 %s29, %s30
    %p32 = scmp.eq.s32.totalorder %s31, 0
    %s34 = sadd.s32 %s33, 1
    %s35 = scalar_select %p32, %s33, %s34
    %p38 = pneg %p32
    %p39 = scmp.eq.s32.totalorder %s9, 1
    %p40 = por %p38, %p39
    %p41 = scmp.ne.s32.totalorder %s33, %s36
    %p42 = scmp.eq.s32.totalorder %s9, 0
    %p43 = por %p41, %p42
    %p44 = scmp.ne.s32.totalorder %s33, %s36
    %p45 = scmp.eq.s32.totalorder %s14, 1
    %p46 = por %p44, %p45
    %p47 = scmp.ne.s32.totalorder %s36, %s37
    %p48 = scmp.eq.s32.totalorder %s14, 0
    %p49 = por %p47, %p48
    %p50 = scmp.ne.s32.totalorder %s36, %s37
    %p51 = scmp.eq.s32.totalorder %s15, 1
    %p52 = por %p50, %p51
    %p54 = scmp.ne.s32.totalorder %s37, %s53
    %p55 = scmp.eq.s32.totalorder %s15, 0
    %p56 = por %p54, %p55
    %s57 = ssub.s32 %s16, %s28
    %p58 = scmp.eq.s32.totalorder %s57, 0
    %s60 = sadd.s32 %s59, 1
    %s61 = scalar_select %p58, %s59, %s60
    %p64 = pneg %p58
    %p65 = scmp.eq.s32.totalorder %s9, 1
    %p66 = por %p64, %p65
    %p67 = scmp.ne.s32.totalorder %s59, %s62
    %p68 = scmp.eq.s32.totalorder %s9, 0
    %p69 = por %p67, %p68
    %p70 = scmp.ne.s32.totalorder %s59, %s62
    %p71 = scmp.eq.s32.totalorder %s14, 1
    %p72 = por %p70, %p71
    %p73 = scmp.ne.s32.totalorder %s62, %s63
    %p74 = scmp.eq.s32.totalorder %s14, 0
    %p75 = por %p73, %p74
    %p76 = scmp.ne.s32.totalorder %s62, %s63
    %p77 = scmp.eq.s32.totalorder %s15, 1
    %p78 = por %p76, %p77
    %p80 = scmp.ne.s32.totalorder %s63, %s79
    %p81 = scmp.eq.s32.totalorder %s15, 0
    %p82 = por %p80, %p81
    %s83 = ssub.s32 %s16, %s28
    %s84 = ssub.s32 %s17, %s24
    %s85 = sor.u32 %s83, %s84
    %p86 = scmp.eq.s32.totalorder %s85, 0
    %s88 = sadd.s32 %s87, 1
    %s89 = scalar_select %p86, %s87, %s88
    %p92 = pneg %p86
    %p93 = scmp.eq.s32.totalorder %s9, 1
    %p94 = por %p92, %p93
    %p95 = scmp.ne.s32.totalorder %s87, %s90
    %p96 = scmp.eq.s32.totalorder %s9, 0
    %p97 = por %p95, %p96
    %p98 = scmp.ne.s32.totalorder %s87, %s90
    %p99 = scmp.eq.s32.totalorder %s14, 1
    %p100 = por %p98, %p99
    %p101 = scmp.ne.s32.totalorder %s90, %s91
    %p102 = scmp.eq.s32.totalorder %s14, 0
    %p103 = por %p101, %p102
    %p104 = scmp.ne.s32.totalorder %s90, %s91
    %p105 = scmp.eq.s32.totalorder %s15, 1
    %p106 = por %p104, %p105
    %p108 = scmp.ne.s32.totalorder %s91, %s107
    %p109 = scmp.eq.s32.totalorder %s15, 0
    %p110 = por %p108, %p109
    %s111 = ssub.s32 %s16, %s28
    %s112 = ssub.s32 %s17, %s24
    %s113 = sor.u32 %s111, %s112
    %p114 = scmp.eq.s32.totalorder %s113, 0
    %s116 = sadd.s32 %s115, 1
    %s117 = scalar_select %p114, %s115, %s116
    %p120 = pneg %p114
    %p121 = scmp.eq.s32.totalorder %s9, 1
    %p122 = por %p120, %p121
    %p123 = scmp.ne.s32.totalorder %s115, %s118
    %p124 = scmp.eq.s32.totalorder %s9, 0
    %p125 = por %p123, %p124
    %p126 = scmp.ne.s32.totalorder %s115, %s118
    %p127 = scmp.eq.s32.totalorder %s14, 1
    %p128 = por %p126, %p127
    %p129 = scmp.ne.s32.totalorder %s118, %s119
    %p130 = scmp.eq.s32.totalorder %s14, 0
    %p131 = por %p129, %p130
    %p132 = scmp.ne.s32.totalorder %s118, %s119
    %p133 = scmp.eq.s32.totalorder %s15, 1
    %p134 = por %p132, %p133
    %p136 = scmp.ne.s32.totalorder %s119, %s135
    %p137 = scmp.eq.s32.totalorder %s15, 0
    %p138 = por %p136, %p137
    %p139 = scmp.le.s32.totalorder 1, %s9
    %p140 = scmp.lt.s32.totalorder %s9, 3
    %p141 = pnand %p139, %p140
    %p142 = pneg %p141
    // Predicated region
    $region9: #{decoder_layer_forward.11} parent=5 // pred_check
      _
    $region10: #{decoder_layer_forward.11} parent=5 // pred_check_branch
      %144 = sbr.rel (%p141) target = $region12
    $region11: #{decoder_layer_forward.11} parent=5 // pred_region
      %s145 = ssub.s32 %s9, 1
    $region12: #{decoder_layer_forward.11} parent=5 // pred_fallthru
      _
    %p146 = scmp.lt.s32.totalorder %s9, 2
    // Predicated region
    $region13: #{decoder_layer_forward.11} parent=5 // pred_check
      %p147 = pneg %p146
    $region14: #{decoder_layer_forward.11} parent=5 // pred_check_branch
      %149 = sbr.rel (%p147) target = $region16
    $region15: #{decoder_layer_forward.11} parent=5 // pred_region
      // Predicated region
      $region17: #{decoder_layer_forward.11} parent=15 // pred_check
        %p150 = pneg %p43
      $region18: #{decoder_layer_forward.11} parent=15 // pred_check_branch
        %152 = sbr.rel (%p150) target = $region20
      $region19: #{decoder_layer_forward.11} parent=15 // pred_region
        %p153 = scmp.lt.s32.totalorder %s16, 1
        %s154 = scalar_select %p153, %s16, 1
        %p155 = scmp.lt.s32.totalorder %s17, 0
        %s156 = scalar_select %p155, %s17, 0
        %s157 = sadd.s32 %s156, %s154
        %s158 = smul.addr %s157, 4
        %s159 = scalar_lea.vmem %s0, %s158
      $region20: #{decoder_layer_forward.11} parent=15 // pred_fallthru
        _
      // Predicated region
      $region21: #{decoder_layer_forward.11} parent=15 // pred_check
        %p160 = pneg %p69
      $region22: #{decoder_layer_forward.11} parent=15 // pred_check_branch
        %162 = sbr.rel (%p160) target = $region24
      $region23: #{decoder_layer_forward.11} parent=15 // pred_region
        %p163 = scmp.lt.s32.totalorder %s16, 1
        %s164 = scalar_select %p163, %s16, 1
        %s165 = smul.addr %s164, 4
        %s166 = scalar_lea.vmem %s1, %s165
      $region24: #{decoder_layer_forward.11} parent=15 // pred_fallthru
        _
      // Predicated region
      $region25: #{decoder_layer_forward.11} parent=15 // pred_check
        %p167 = pneg %p97
      $region26: #{decoder_layer_forward.11} parent=15 // pred_check_branch
        %169 = sbr.rel (%p167) target = $region28
      $region27: #{decoder_layer_forward.11} parent=15 // pred_region
        %p170 = scmp.lt.s32.totalorder %s16, 1
        %s171 = scalar_select %p170, %s16, 1
        %p172 = scmp.lt.s32.totalorder %s17, 0
        %s173 = scalar_select %p172, %s17, 0
        %s174 = sadd.s32 %s173, %s171
        %s175 = smul.addr %s174, 8
        %s176 = scalar_lea.vmem %s2, %s175
      $region28: #{decoder_layer_forward.11} parent=15 // pred_fallthru
        _
    $region16: #{decoder_layer_forward.11} parent=5 // pred_fallthru
      _
    %p177 = scmp.le.s32.totalorder 1, %s9
    %p178 = scmp.lt.s32.totalorder %s9, 3
    %p179 = pnand %p177, %p178
    %p180 = pneg %p179
    // Predicated region
    $region29: #{decoder_layer_forward.11} parent=5 // pred_check
      _
    $region30: #{decoder_layer_forward.11} parent=5 // pred_check_branch
      %182 = sbr.rel (%p179) target = $region32
    $region31: #{decoder_layer_forward.11} parent=5 // pred_region
      %s183 = ssub.s32 %s9, 1
      %p184 = scmp.lt.s32.totalorder %s18, 1
      %s185 = scalar_select %p184, %s18, 1
      %p186 = scmp.lt.s32.totalorder %s19, 0
      %s187 = scalar_select %p186, %s19, 0
      %s188 = sadd.s32 %s187, %s185
      %s189 = smul.addr %s188, 4
      %s190 = scalar_lea.vmem %s0, %s189
      %p191 = pneg %p49
      %p192 = pneg %p46
      %p193 = scmp.lt.s32.totalorder %s18, 1
      %s194 = scalar_select %p193, %s18, 1
      %s195 = smul.addr %s194, 4
      %s196 = scalar_lea.vmem %s1, %s195
      %p197 = pneg %p75
      %p198 = pneg %p72
      %p199 = scmp.lt.s32.totalorder %s18, 1
      %s200 = scalar_select %p199, %s18, 1
      %p201 = scmp.lt.s32.totalorder %s19, 0
      %s202 = scalar_select %p201, %s19, 0
      %s203 = sadd.s32 %s202, %s200
      %s204 = smul.addr %s203, 8
      %s205 = scalar_lea.vmem %s2, %s204
      %p206 = pneg %p103
      %p207 = pneg %p100
      %p208 = pneg %p131
      %p209 = pneg %p128
      %p210 = scmp.lt.s32.totalorder %s18, 1
      %s211 = scalar_select %p210, %s18, 1
      %p212 = scmp.lt.s32.totalorder %s19, 0
      %s213 = scalar_select %p212, %s19, 0
      %s214 = sadd.s32 %s213, %s211
      %s215 = smul.addr %s214, 4
      %s216 = scalar_lea.vmem %s3, %s215
      %p217 = scmp.lt.s32.totalorder %s18, 1
      %s218 = scalar_select %p217, %s18, 1
      %p219 = scmp.lt.s32.totalorder %s19, 0
      %s220 = scalar_select %p219, %s19, 0
      %s221 = sadd.s32 %s220, %s218
      %s222 = smul.addr %s221, 4
      %s223 = scalar_lea.vmem %s0, %s222
      %p224 = scmp.lt.s32.totalorder %s18, 1
      %s225 = scalar_select %p224, %s18, 1
      %s226 = smul.addr %s225, 4
      %s227 = scalar_lea.vmem %s1, %s226
      %p228 = scmp.lt.s32.totalorder %s18, 1
      %s229 = scalar_select %p228, %s18, 1
      %p230 = scmp.lt.s32.totalorder %s19, 0
      %s231 = scalar_select %p230, %s19, 0
      %s232 = sadd.s32 %s231, %s229
      %s233 = smul.addr %s232, 8
      %s234 = scalar_lea.vmem %s2, %s233
      %p235 = scmp.lt.s32.totalorder %s18, 1
      %s236 = scalar_select %p235, %s18, 1
      %p237 = scmp.lt.s32.totalorder %s19, 0
      %s238 = scalar_select %p237, %s19, 0
      %s239 = sadd.s32 %s238, %s236
      %s240 = smul.addr %s239, 4
      %s241 = scalar_lea.vmem %s3, %s240
      %v243 = vld [vmem:[%s223] sm:$0xf]
      %v244 = vld [vmem:[%s227] sm:$0xf]
      %v245 = vld [vmem:[%s234] sm:$0xff]
      %vm246 = vcmp.eq.f32.partialorder %v245, 0.0
      %v247 = vsel %vm246, -1e+09, 0.0
      %v248 = vunpack.c.l.bf16 %v243
      %v249 = vmul.f32 %v248, 0.35355338
      %v250 = vpack.c.bf16 %v249, %v249
      %vm251 = vcmask 64512
      %v253 = vsel %vm251, %v250, 0
      %v256 = vsel %vm251, %v244, 0
      %258 = vmatprep.subr.bf16.mxu0 0
      %259 = vmatpush1.bf16.xpose.msra.mxu0 %v256
      %260 = vmatprep.subr.bf16.mxu0 0
      %261 = vmatpush1.bf16.xpose.msra.mxu0 0
      %262 = vmatprep.subr.bf16.mxu0 0
      %263 = vmatpush1.bf16.xpose.msra.mxu0 0
      %264 = vmatprep.subr.bf16.mxu0 0
      %265 = vmatpush1.bf16.xpose.msra.mxu0 0
      %266 = vmatprep.subr.bf16.mxu0 0
      %267 = vmatpush1.bf16.xpose.msra.mxu0 0
      %268 = vmatprep.subr.bf16.mxu0 0
      %269 = vmatpush1.bf16.xpose.msra.mxu0 0
      %270 = vmatprep.subr.bf16.mxu0 0
      %271 = vmatpush1.bf16.xpose.msra.mxu0 0
      %272 = vmatprep.subr.bf16.mxu0 0
      %273 = vmatpush1.bf16.xpose.msra.mxu0 0
      %274 = vmatprep.subr.bf16.mxu0 0
      %275 = vmatpush1.bf16.xpose.msra.mxu0 0
      %276 = vmatprep.subr.bf16.mxu0 0
      %277 = vmatpush1.bf16.xpose.msra.mxu0 0
      %278 = vmatprep.subr.bf16.mxu0 0
      %279 = vmatpush1.bf16.xpose.msra.mxu0 0
      %280 = vmatprep.subr.bf16.mxu0 0
      %281 = vmatpush1.bf16.xpose.msra.mxu0 0
      %282 = vmatprep.subr.bf16.mxu0 0
      %283 = vmatpush1.bf16.xpose.msra.mxu0 0
      %284 = vmatprep.subr.bf16.mxu0 0
      %285 = vmatpush1.bf16.xpose.msra.mxu0 0
      %286 = vmatprep.subr.bf16.mxu0 0
      %287 = vmatpush1.bf16.xpose.msra.mxu0 0
      %288 = vmatprep.subr.bf16.mxu0 0
      %289 = vmatpush1.bf16.xpose.msra.mxu0 0
      %290 = vmatprep.mubr.bf16.mxu0 0
      %291 = vmatmul.mubr.bf16.gmra.mrb[0].mxu0 %v253
      %v292 = vpop.f32.mrb[0].mxu0
      %v293 = vadd.f32 %v247, %v292
      %v294 = vpop.f32.mrb[0].mxu0
      %v295 = vpop.f32.mrb[0].mxu0
      %v296 = vpop.f32.mrb[0].mxu0
      %297 = vdwg.mxu0
      %v298 = vsel %vm251, %v293, -inf
      %299 = vmax.xlane.f32.xlu0 %v298
      %v300 = vpop.xlane.xlu0 %299
      %v301 = vsub.f32 %v293, %v300
      %v302 = vmul.f32 %v301, 1.442695
      %v303 = vpow.pop %v302
      %v304 = vsel %vm251, %v303, 0.0
      %305 = vadd.xlane.f32.xlu0 %v304
      %v306 = vpop.xlane.xlu0 %305
      %v307 = vrcp.pop %v306
      %v308 = vpack.c.bf16 %v303, %v303
      %v310 = vunpack.c.l.b16 %v244
      %v311 = vpack.c.b16 %v310, %v310
      %312 = vrot.lane.b32.xlu0 %v311, 96
      %v313 = vpop.permute.xlu0 %312
      %v315 = vsel %vm251, %v308, 0
      %vm317 = vcmask 1043456
      %v319 = vsel %vm317, %v313, 0
      %321 = vmatprep.subr.bf16.mxu0 0
      %322 = vmatpush1.bf16.msra.mxu0 %v319
      %323 = vmatprep.subr.bf16.mxu0 0
      %324 = vmatpush1.bf16.msra.mxu0 0
      %325 = vmatprep.subr.bf16.mxu0 0
      %326 = vmatpush1.bf16.msra.mxu0 0
      %327 = vmatprep.subr.bf16.mxu0 0
      %328 = vmatpush1.bf16.msra.mxu0 0
      %329 = vmatprep.subr.bf16.mxu0 0
      %330 = vmatpush1.bf16.msra.mxu0 0
      %331 = vmatprep.subr.bf16.mxu0 0
      %332 = vmatpush1.bf16.msra.mxu0 0
      %333 = vmatprep.subr.bf16.mxu0 0
      %334 = vmatpush1.bf16.msra.mxu0 0
      %335 = vmatprep.subr.bf16.mxu0 0
      %336 = vmatpush1.bf16.msra.mxu0 0
      %337 = vmatprep.subr.bf16.mxu0 0
      %338 = vmatpush1.bf16.msra.mxu0 0
      %339 = vmatprep.subr.bf16.mxu0 0
      %340 = vmatpush1.bf16.msra.mxu0 0
      %341 = vmatprep.subr.bf16.mxu0 0
      %342 = vmatpush1.bf16.msra.mxu0 0
      %343 = vmatprep.subr.bf16.mxu0 0
      %344 = vmatpush1.bf16.msra.mxu0 0
      %345 = vmatprep.subr.bf16.mxu0 0
      %346 = vmatpush1.bf16.msra.mxu0 0
      %347 = vmatprep.subr.bf16.mxu0 0
      %348 = vmatpush1.bf16.msra.mxu0 0
      %349 = vmatprep.subr.bf16.mxu0 0
      %350 = vmatpush1.bf16.msra.mxu0 0
      %351 = vmatprep.subr.bf16.mxu0 0
      %352 = vmatpush1.bf16.msra.mxu0 0
      %353 = vmatprep.mubr.bf16.mxu0 0
      %354 = vmatmul.mubr.bf16.gmra.mrb[0].mxu0 %v315
      %v355 = vpop.f32.mrb[0].mxu0
      %v356 = vadd.f32 0.0, %v355
      %v357 = vpop.f32.mrb[0].mxu0
      %v358 = vpop.f32.mrb[0].mxu0
      %v359 = vpop.f32.mrb[0].mxu0
      %360 = vdwg.mxu0
      %v361 = vmul.f32 %v356, %v307
      %v362 = vpack.c.bf16 %v361, %v361
      %vm363 = vcmask 60416
      %364 = vst.msk [vmem:[%s241] sm:$0xf] %vm363, %v362
      %366 = vrot.lane.b32.xlu0 %v250, 120
      %v367 = vpop.permute.xlu0 %366
      %368 = vrot.lane.b32.xlu0 %v311, 120
      %v369 = vpop.permute.xlu0 %368
      %v371 = vsel %vm251, %v367, 0
      %v374 = vsel %vm251, %v369, 0
      %376 = vmatprep.subr.bf16.mxu0 0
      %377 = vmatpush1.bf16.xpose.msra.mxu0 %v374
      %378 = vmatprep.subr.bf16.mxu0 0
      %379 = vmatpush1.bf16.xpose.msra.mxu0 0
      %380 = vmatprep.subr.bf16.mxu0 0
      %381 = vmatpush1.bf16.xpose.msra.mxu0 0
      %382 = vmatprep.subr.bf16.mxu0 0
      %383 = vmatpush1.bf16.xpose.msra.mxu0 0
      %384 = vmatprep.subr.bf16.mxu0 0
      %385 = vmatpush1.bf16.xpose.msra.mxu0 0
      %386 = vmatprep.subr.bf16.mxu0 0
      %387 = vmatpush1.bf16.xpose.msra.mxu0 0
      %388 = vmatprep.subr.bf16.mxu0 0
      %389 = vmatpush1.bf16.xpose.msra.mxu0 0
      %390 = vmatprep.subr.bf16.mxu0 0
      %391 = vmatpush1.bf16.xpose.msra.mxu0 0
      %392 = vmatprep.subr.bf16.mxu0 0
      %393 = vmatpush1.bf16.xpose.msra.mxu0 0
      %394 = vmatprep.subr.bf16.mxu0 0
      %395 = vmatpush1.bf16.xpose.msra.mxu0 0
      %396 = vmatprep.subr.bf16.mxu0 0
      %397 = vmatpush1.bf16.xpose.msra.mxu0 0
      %398 = vmatprep.subr.bf16.mxu0 0
      %399 = vmatpush1.bf16.xpose.msra.mxu0 0
      %400 = vmatprep.subr.bf16.mxu0 0
      %401 = vmatpush1.bf16.xpose.msra.mxu0 0
      %402 = vmatprep.subr.bf16.mxu0 0
      %403 = vmatpush1.bf16.xpose.msra.mxu0 0
      %404 = vmatprep.subr.bf16.mxu0 0
      %405 = vmatpush1.bf16.xpose.msra.mxu0 0
      %406 = vmatprep.subr.bf16.mxu0 0
      %407 = vmatpush1.bf16.xpose.msra.mxu0 0
      %408 = vmatprep.mubr.bf16.mxu0 0
      %409 = vmatmul.mubr.bf16.gmra.mrb[0].mxu0 %v371
      %v410 = vpop.f32.mrb[0].mxu0
      %v411 = vadd.f32 %v247, %v410
      %v412 = vpop.f32.mrb[0].mxu0
      %v413 = vpop.f32.mrb[0].mxu0
      %v414 = vpop.f32.mrb[0].mxu0
      %415 = vdwg.mxu0
      %v416 = vsel %vm251, %v411, -inf
      %417 = vmax.xlane.f32.xlu0 %v416
      %v418 = vpop.xlane.xlu0 %417
      %v419 = vsub.f32 %v411, %v418
      %v420 = vmul.f32 %v419, 1.442695
      %v421 = vpow.pop %v420
      %v422 = vsel %vm251, %v421, 0.0
      %423 = vadd.xlane.f32.xlu0 %v422
      %v424 = vpop.xlane.xlu0 %423
      %v425 = vrcp.pop %v424
      %v426 = vpack.c.bf16 %v421, %v421
      %427 = vrot.lane.b32.xlu0 %v311, 88
      %v428 = vpop.permute.xlu0 %427
      %v430 = vsel %vm251, %v426, 0
      %v433 = vsel %vm317, %v428, 0
      %435 = vmatprep.subr.bf16.mxu0 0
      %436 = vmatpush1.bf16.msra.mxu0 %v433
      %437 = vmatprep.subr.bf16.mxu0 0
      %438 = vmatpush1.bf16.msra.mxu0 0
      %439 = vmatprep.subr.bf16.mxu0 0
      %440 = vmatpush1.bf16.msra.mxu0 0
      %441 = vmatprep.subr.bf16.mxu0 0
      %442 = vmatpush1.bf16.msra.mxu0 0
      %443 = vmatprep.subr.bf16.mxu0 0
      %444 = vmatpush1.bf16.msra.mxu0 0
      %445 = vmatprep.subr.bf16.mxu0 0
      %446 = vmatpush1.bf16.msra.mxu0 0
      %447 = vmatprep.subr.bf16.mxu0 0
      %448 = vmatpush1.bf16.msra.mxu0 0
      %449 = vmatprep.subr.bf16.mxu0 0
      %450 = vmatpush1.bf16.msra.mxu0 0
      %451 = vmatprep.subr.bf16.mxu0 0
      %452 = vmatpush1.bf16.msra.mxu0 0
      %453 = vmatprep.subr.bf16.mxu0 0
      %454 = vmatpush1.bf16.msra.mxu0 0
      %455 = vmatprep.subr.bf16.mxu0 0
      %456 = vmatpush1.bf16.msra.mxu0 0
      %457 = vmatprep.subr.bf16.mxu0 0
      %458 = vmatpush1.bf16.msra.mxu0 0
      %459 = vmatprep.subr.bf16.mxu0 0
      %460 = vmatpush1.bf16.msra.mxu0 0
      %461 = vmatprep.subr.bf16.mxu0 0
      %462 = vmatpush1.bf16.msra.mxu0 0
      %463 = vmatprep.subr.bf16.mxu0 0
      %464 = vmatpush1.bf16.msra.mxu0 0
      %465 = vmatprep.subr.bf16.mxu0 0
      %466 = vmatpush1.bf16.msra.mxu0 0
      %467 = vmatprep.mubr.bf16.mxu0 0
      %468 = vmatmul.mubr.bf16.gmra.mrb[0].mxu0 %v430
      %v469 = vpop.f32.mrb[0].mxu0
      %v470 = vadd.f32 0.0, %v469
      %v471 = vpop.f32.mrb[0].mxu0
      %v472 = vpop.f32.mrb[0].mxu0
      %v473 = vpop.f32.mrb[0].mxu0
      %474 = vdwg.mxu0
      %v475 = vmul.f32 %v470, %v425
      %v476 = vpack.c.bf16 %v475, %v475
      %v478 = vunpack.c.l.b16 %v476
      %v479 = vpack.c.b16 %v478, %v478
      %480 = vrot.lane.b32.xlu0 %v479, 8
      %v481 = vpop.permute.xlu0 %480
      %vm483 = vcmask 126016
      %484 = vst.msk [vmem:[%s241] sm:$0xf] %vm483, %v481
      %485 = vrot.lane.b32.xlu0 %v250, 112
      %v486 = vpop.permute.xlu0 %485
      %487 = vrot.lane.b32.xlu0 %v311, 112
      %v488 = vpop.permute.xlu0 %487
      %v490 = vsel %vm251, %v486, 0
      %v493 = vsel %vm251, %v488, 0
      %495 = vmatprep.subr.bf16.mxu0 0
      %496 = vmatpush1.bf16.xpose.msra.mxu0 %v493
      %497 = vmatprep.subr.bf16.mxu0 0
      %498 = vmatpush1.bf16.xpose.msra.mxu0 0
      %499 = vmatprep.subr.bf16.mxu0 0
      %500 = vmatpush1.bf16.xpose.msra.mxu0 0
      %501 = vmatprep.subr.bf16.mxu0 0
      %502 = vmatpush1.bf16.xpose.msra.mxu0 0
      %503 = vmatprep.subr.bf16.mxu0 0
      %504 = vmatpush1.bf16.xpose.msra.mxu0 0
      %505 = vmatprep.subr.bf16.mxu0 0
      %506 = vmatpush1.bf16.xpose.msra.mxu0 0
      %507 = vmatprep.subr.bf16.mxu0 0
      %508 = vmatpush1.bf16.xpose.msra.mxu0 0
      %509 = vmatprep.subr.bf16.mxu0 0
      %510 = vmatpush1.bf16.xpose.msra.mxu0 0
      %511 = vmatprep.subr.bf16.mxu0 0
      %512 = vmatpush1.bf16.xpose.msra.mxu0 0
      %513 = vmatprep.subr.bf16.mxu0 0
      %514 = vmatpush1.bf16.xpose.msra.mxu0 0
      %515 = vmatprep.subr.bf16.mxu0 0
      %516 = vmatpush1.bf16.xpose.msra.mxu0 0
      %517 = vmatprep.subr.bf16.mxu0 0
      %518 = vmatpush1.bf16.xpose.msra.mxu0 0
      %519 = vmatprep.subr.bf16.mxu0 0
      %520 = vmatpush1.bf16.xpose.msra.mxu0 0
      %521 = vmatprep.subr.bf16.mxu0 0
      %522 = vmatpush1.bf16.xpose.msra.mxu0 0
      %523 = vmatprep.subr.bf16.mxu0 0
      %524 = vmatpush1.bf16.xpose.msra.mxu0 0
      %525 = vmatprep.subr.bf16.mxu0 0
      %526 = vmatpush1.bf16.xpose.msra.mxu0 0
      %527 = vmatprep.mubr.bf16.mxu0 0
      %528 = vmatmul.mubr.bf16.gmra.mrb[0].mxu0 %v490
      %v529 = vpop.f32.mrb[0].mxu0
      %v530 = vadd.f32 %v247, %v529
      %v531 = vpop.f32.mrb[0].mxu0
      %v532 = vpop.f32.mrb[0].mxu0
      %v533 = vpop.f32.mrb[0].mxu0
      %534 = vdwg.mxu0
      %v535 = vsel %vm251, %v530, -inf
      %536 = vmax.xlane.f32.xlu0 %v535
      %v537 = vpop.xlane.xlu0 %536
      %v538 = vsub.f32 %v530, %v537
      %v539 = vmul.f32 %v538, 1.442695
      %v540 = vpow.pop %v539
      %v541 = vsel %vm251, %v540, 0.0
      %542 = vadd.xlane.f32.xlu0 %v541
      %v543 = vpop.xlane.xlu0 %542
      %v544 = vrcp.pop %v543
      %v545 = vpack.c.bf16 %v540, %v540
      %546 = vrot.lane.b32.xlu0 %v311, 80
      %v547 = vpop.permute.xlu0 %546
      %v549 = vsel %vm251, %v545, 0
      %v552 = vsel %vm317, %v547, 0
      %554 = vmatprep.subr.bf16.mxu0 0
      %555 = vmatpush1.bf16.msra.mxu0 %v552
      %556 = vmatprep.subr.bf16.mxu0 0
      %557 = vmatpush1.bf16.msra.mxu0 0
      %558 = vmatprep.subr.bf16.mxu0 0
      %559 = vmatpush1.bf16.msra.mxu0 0
      %560 = vmatprep.subr.bf16.mxu0 0
      %561 = vmatpush1.bf16.msra.mxu0 0
      %562 = vmatprep.subr.bf16.mxu0 0
      %563 = vmatpush1.bf16.msra.mxu0 0
      %564 = vmatprep.subr.bf16.mxu0 0
      %565 = vmatpush1.bf16.msra.mxu0 0
      %566 = vmatprep.subr.bf16.mxu0 0
      %567 = vmatpush1.bf16.msra.mxu0 0
      %568 = vmatprep.subr.bf16.mxu0 0
      %569 = vmatpush1.bf16.msra.mxu0 0
      %570 = vmatprep.subr.bf16.mxu0 0
      %571 = vmatpush1.bf16.msra.mxu0 0
      %572 = vmatprep.subr.bf16.mxu0 0
      %573 = vmatpush1.bf16.msra.mxu0 0
      %574 = vmatprep.subr.bf16.mxu0 0
      %575 = vmatpush1.bf16.msra.mxu0 0
      %576 = vmatprep.subr.bf16.mxu0 0
      %577 = vmatpush1.bf16.msra.mxu0 0
      %578 = vmatprep.subr.bf16.mxu0 0
      %579 = vmatpush1.bf16.msra.mxu0 0
      %580 = vmatprep.subr.bf16.mxu0 0
      %581 = vmatpush1.bf16.msra.mxu0 0
      %582 = vmatprep.subr.bf16.mxu0 0
      %583 = vmatpush1.bf16.msra.mxu0 0
      %584 = vmatprep.subr.bf16.mxu0 0
      %585 = vmatpush1.bf16.msra.mxu0 0
      %586 = vmatprep.mubr.bf16.mxu0 0
      %587 = vmatmul.mubr.bf16.gmra.mrb[0].mxu0 %v549
      %v588 = vpop.f32.mrb[0].mxu0
      %v589 = vadd.f32 0.0, %v588
      %v590 = vpop.f32.mrb[0].mxu0
      %v591 = vpop.f32.mrb[0].mxu0
      %v592 = vpop.f32.mrb[0].mxu0
      %593 = vdwg.mxu0
      %v594 = vmul.f32 %v589, %v544
      %v595 = vpack.c.bf16 %v594, %v594
      %v597 = vunpack.c.l.b16 %v595
      %v598 = vpack.c.b16 %v597, %v597
      %599 = vrot.lane.b32.xlu0 %v598, 16
      %v600 = vpop.permute.xlu0 %599
      %vm602 = vcmask 191616
      %603 = vst.msk [vmem:[%s241] sm:$0xf] %vm602, %v600
      %604 = vrot.lane.b32.xlu0 %v250, 104
      %v605 = vpop.permute.xlu0 %604
      %606 = vrot.lane.b32.xlu0 %v311, 104
      %v607 = vpop.permute.xlu0 %606
      %v609 = vsel %vm251, %v605, 0
      %v612 = vsel %vm251, %v607, 0
      %614 = vmatprep.subr.bf16.mxu0 0
      %615 = vmatpush1.bf16.xpose.msra.mxu0 %v612
      %616 = vmatprep.subr.bf16.mxu0 0
      %617 = vmatpush1.bf16.xpose.msra.mxu0 0
      %618 = vmatprep.subr.bf16.mxu0 0
      %619 = vmatpush1.bf16.xpose.msra.mxu0 0
      %620 = vmatprep.subr.bf16.mxu0 0
      %621 = vmatpush1.bf16.xpose.msra.mxu0 0
      %622 = vmatprep.subr.bf16.mxu0 0
      %623 = vmatpush1.bf16.xpose.msra.mxu0 0
      %624 = vmatprep.subr.bf16.mxu0 0
      %625 = vmatpush1.bf16.xpose.msra.mxu0 0
      %626 = vmatprep.subr.bf16.mxu0 0
      %627 = vmatpush1.bf16.xpose.msra.mxu0 0
      %628 = vmatprep.subr.bf16.mxu0 0
      %629 = vmatpush1.bf16.xpose.msra.mxu0 0
      %630 = vmatprep.subr.bf16.mxu0 0
      %631 = vmatpush1.bf16.xpose.msra.mxu0 0
      %632 = vmatprep.subr.bf16.mxu0 0
      %633 = vmatpush1.bf16.xpose.msra.mxu0 0
      %634 = vmatprep.subr.bf16.mxu0 0
      %635 = vmatpush1.bf16.xpose.msra.mxu0 0
      %636 = vmatprep.subr.bf16.mxu0 0
      %637 = vmatpush1.bf16.xpose.msra.mxu0 0
      %638 = vmatprep.subr.bf16.mxu0 0
      %639 = vmatpush1.bf16.xpose.msra.mxu0 0
      %640 = vmatprep.subr.bf16.mxu0 0
      %641 = vmatpush1.bf16.xpose.msra.mxu0 0
      %642 = vmatprep.subr.bf16.mxu0 0
      %643 = vmatpush1.bf16.xpose.msra.mxu0 0
      %644 = vmatprep.subr.bf16.mxu0 0
      %645 = vmatpush1.bf16.xpose.msra.mxu0 0
      %646 = vmatprep.mubr.bf16.mxu0 0
      %647 = vmatmul.mubr.bf16.gmra.mrb[0].mxu0 %v609
      %v648 = vpop.f32.mrb[0].mxu0
      %v649 = vadd.f32 %v247, %v648
      %v650 = vpop.f32.mrb[0].mxu0
      %v651 = vpop.f32.mrb[0].mxu0
      %v652 = vpop.f32.mrb[0].mxu0
      %653 = vdwg.mxu0
      %v654 = vsel %vm251, %v649, -inf
      %655 = vmax.xlane.f32.xlu0 %v654
      %v656 = vpop.xlane.xlu0 %655
      %v657 = vsub.f32 %v649, %v656
      %v658 = vmul.f32 %v657, 1.442695
      %v659 = vpow.pop %v658
      %v660 = vsel %vm251, %v659, 0.0
      %661 = vadd.xlane.f32.xlu0 %v660
      %v662 = vpop.xlane.xlu0 %661
      %v663 = vrcp.pop %v662
      %v664 = vpack.c.bf16 %v659, %v659
      %665 = vrot.lane.b32.xlu0 %v311, 72
      %v666 = vpop.permute.xlu0 %665
      %v668 = vsel %vm251, %v664, 0
      %v671 = vsel %vm317, %v666, 0
      %673 = vmatprep.subr.bf16.mxu0 0
      %674 = vmatpush1.bf16.msra.mxu0 %v671
      %675 = vmatprep.subr.bf16.mxu0 0
      %676 = vmatpush1.bf16.msra.mxu0 0
      %677 = vmatprep.subr.bf16.mxu0 0
      %678 = vmatpush1.bf16.msra.mxu0 0
      %679 = vmatprep.subr.bf16.mxu0 0
      %680 = vmatpush1.bf16.msra.mxu0 0
      %681 = vmatprep.subr.bf16.mxu0 0
      %682 = vmatpush1.bf16.msra.mxu0 0
      %683 = vmatprep.subr.bf16.mxu0 0
      %684 = vmatpush1.bf16.msra.mxu0 0
      %685 = vmatprep.subr.bf16.mxu0 0
      %686 = vmatpush1.bf16.msra.mxu0 0
      %687 = vmatprep.subr.bf16.mxu0 0
      %688 = vmatpush1.bf16.msra.mxu0 0
      %689 = vmatprep.subr.bf16.mxu0 0
      %690 = vmatpush1.bf16.msra.mxu0 0
      %691 = vmatprep.subr.bf16.mxu0 0
      %692 = vmatpush1.bf16.msra.mxu0 0
      %693 = vmatprep.subr.bf16.mxu0 0
      %694 = vmatpush1.bf16.msra.mxu0 0
      %695 = vmatprep.subr.bf16.mxu0 0
      %696 = vmatpush1.bf16.msra.mxu0 0
      %697 = vmatprep.subr.bf16.mxu0 0
      %698 = vmatpush1.bf16.msra.mxu0 0
      %699 = vmatprep.subr.bf16.mxu0 0
      %700 = vmatpush1.bf16.msra.mxu0 0
      %701 = vmatprep.subr.bf16.mxu0 0
      %702 = vmatpush1.bf16.msra.mxu0 0
      %703 = vmatprep.subr.bf16.mxu0 0
      %704 = vmatpush1.bf16.msra.mxu0 0
      %705 = vmatprep.mubr.bf16.mxu0 0
      %706 = vmatmul.mubr.bf16.gmra.mrb[0].mxu0 %v668
      %v707 = vpop.f32.mrb[0].mxu0
      %v708 = vadd.f32 0.0, %v707
      %v709 = vpop.f32.mrb[0].mxu0
      %v710 = vpop.f32.mrb[0].mxu0
      %v711 = vpop.f32.mrb[0].mxu0
      %712 = vdwg.mxu0
      %v713 = vmul.f32 %v708, %v663
      %v714 = vpack.c.bf16 %v713, %v713
      %v716 = vunpack.c.l.b16 %v714
      %v717 = vpack.c.b16 %v716, %v716
      %718 = vrot.lane.b32.xlu0 %v717, 24
      %v719 = vpop.permute.xlu0 %718
      %vm721 = vcmask 257216
      %722 = vst.msk [vmem:[%s241] sm:$0xf] %vm721, %v719
      %p723 = scmp.lt.s32.totalorder %s18, 1
      %s724 = scalar_select %p723, %s18, 1
      %p725 = scmp.lt.s32.totalorder %s19, 0
      %s726 = scalar_select %p725, %s19, 0
      %s727 = sadd.s32 %s726, %s724
      %s728 = smul.addr %s727, 4
      %s729 = scalar_lea.vmem %s3, %s728
      // Predicated region
      $region33: #{decoder_layer_forward.11} parent=31 // pred_check
        %p730 = pneg %p128
      $region34: #{decoder_layer_forward.11} parent=31 // pred_check_branch
        %732 = sbr.rel (%p730) target = $region36
      $region35: #{decoder_layer_forward.11} parent=31 // pred_region
        _
      $region36: #{decoder_layer_forward.11} parent=31 // pred_fallthru
        _
    $region32: #{decoder_layer_forward.11} parent=5 // pred_fallthru
      _
    %p733 = scmp.le.s32.totalorder 2, %s9
    // Predicated region
    $region37: #{decoder_layer_forward.11} parent=5 // pred_check
      %p734 = pneg %p733
    $region38: #{decoder_layer_forward.11} parent=5 // pred_check_branch
      %736 = sbr.rel (%p734) target = $region40
    $region39: #{decoder_layer_forward.11} parent=5 // pred_region
      %s737 = ssub.s32 %s9, 2
      // Predicated region
      $region41: #{decoder_layer_forward.11} parent=39 // pred_check
        %p738 = pneg %p134
      $region42: #{decoder_layer_forward.11} parent=39 // pred_check_branch
        %740 = sbr.rel (%p738) target = $region44
      $region43: #{decoder_layer_forward.11} parent=39 // pred_region
        %p741 = scmp.lt.s32.totalorder %s20, 1
        %s742 = scalar_select %p741, %s20, 1
        %p743 = scmp.lt.s32.totalorder %s21, 0
        %s744 = scalar_select %p743, %s21, 0
        %s745 = sadd.s32 %s744, %s742
        %s746 = smul.addr %s745, 4
        %s747 = scalar_lea.vmem %s3, %s746
      $region44: #{decoder_layer_forward.11} parent=39 // pred_fallthru
        _
    $region40: #{decoder_layer_forward.11} parent=5 // pred_fallthru
      _
  $region6: #{decoder_layer_forward.11} parent=0 // loop_footer
    %s13 = sadd.s32 1, %s9
  $region7: #{decoder_layer_forward.11} parent=0 // loop_footer_branch
    %8 = sbr.rel target = $region3
  $region8: #{decoder_layer_forward.11} parent=0 // loop_exit
    _

// kernel: decoder_layer_forward.17
$region0: #{decoder_layer_forward.17}
  #allocation0 [shape = 'u32[]', space=smem, size = 0x4, offset = 0x4, fixed_abs, tag = 'smem constant byte address 0x4 - core index']
  #allocation1 [shape = 'u32[144,128]{1,0:T(1,128)}', space=vmem, size = 0x12000, scoped, tag = 'internal scratch']
  #allocation2 [shape = 'f32[16,32]{1,0:T(8,128)}', space=vmem, size = 0x2000, scoped, tag = 'scratch operand']
  %s0 = inlined_call_operand.vmem [shape: f32[16,32], index: 0, kind: input, shape index: {}]
  %s1 = inlined_call_operand.vmem [shape: bf16[32,64], index: 1, kind: input, shape index: {}]
  %s2 = inlined_call_operand.vmem [shape: f32[1,64], index: 2, kind: input, shape index: {}]
  %s3 = inlined_call_operand.vmem [shape: bf16[64,32], index: 3, kind: input, shape index: {}]
  %s4 = inlined_call_operand.vmem [shape: f32[1,32], index: 4, kind: input, shape index: {}]
  %s5 = inlined_call_operand.vmem [shape: f32[1,32], index: 5, kind: input, shape index: {}]
  %s6 = inlined_call_operand.vmem [shape: f32[1,32], index: 6, kind: input, shape index: {}]
  %s7 = inlined_call_operand.hbm [shape: f32[16,32], index: 7, kind: output, shape index: {}]
  %s8 = sld [smem:[#allocation0]]
  $region46: #{decoder_layer_forward.17} parent=0
    _
  %s10 = ssub.s32 1, %s8
  %s11 = scalar_select 0, %s10, %s8
  $region1: #{decoder_layer_forward.17} parent=0
    #allocation3 [shape = 'u8[8192]{0}', space=vmem, size = 0x2000, scoped, tag = 'output window, operand 0, single buffered']
    #allocation4 [shape = 's32[1]{0}', space=sflag, size = 0x4, scoped, tag = 'scoped memory for decoder_layer_forward.17']
    %12 = vsyncpa [#allocation4], 0
    // Predicated region
    $region2: #{decoder_layer_forward.17} parent=1 // pred_check
      _
    $region3: #{decoder_layer_forward.17} parent=1 // pred_check_branch
      %14 = sbr.rel (0) target = $region5
    $region4: #{decoder_layer_forward.17} parent=1 // pred_region
      _
    $region5: #{decoder_layer_forward.17} parent=1 // pred_fallthru
      _
    // Predicated region
    $region6: #{decoder_layer_forward.17} parent=1 // pred_check
      _
    $region7: #{decoder_layer_forward.17} parent=1 // pred_check_branch
      %16 = sbr.rel (0) target = $region9
    $region8: #{decoder_layer_forward.17} parent=1 // pred_region
      _
    $region9: #{decoder_layer_forward.17} parent=1 // pred_fallthru
      _
    // Predicated region
    $region10: #{decoder_layer_forward.17} parent=1 // pred_check
      _
    $region11: #{decoder_layer_forward.17} parent=1 // pred_check_branch
      %18 = sbr.rel (0) target = $region13
    $region12: #{decoder_layer_forward.17} parent=1 // pred_region
      _
    $region13: #{decoder_layer_forward.17} parent=1 // pred_fallthru
      _
    // Predicated region
    $region14: #{decoder_layer_forward.17} parent=1 // pred_check
      _
    $region15: #{decoder_layer_forward.17} parent=1 // pred_check_branch
      %20 = sbr.rel (0) target = $region17
    $region16: #{decoder_layer_forward.17} parent=1 // pred_region
      _
    $region17: #{decoder_layer_forward.17} parent=1 // pred_fallthru
      _
    // Predicated region
    $region18: #{decoder_layer_forward.17} parent=1 // pred_check
      _
    $region19: #{decoder_layer_forward.17} parent=1 // pred_check_branch
      %22 = sbr.rel (0) target = $region21
    $region20: #{decoder_layer_forward.17} parent=1 // pred_region
      _
    $region21: #{decoder_layer_forward.17} parent=1 // pred_fallthru
      _
    // Predicated region
    $region22: #{decoder_layer_forward.17} parent=1 // pred_check
      _
    $region23: #{decoder_layer_forward.17} parent=1 // pred_check_branch
      %24 = sbr.rel (0) target = $region25
    $region24: #{decoder_layer_forward.17} parent=1 // pred_region
      _
    $region25: #{decoder_layer_forward.17} parent=1 // pred_fallthru
      _
    // Predicated region
    $region26: #{decoder_layer_forward.17} parent=1 // pred_check
      _
    $region27: #{decoder_layer_forward.17} parent=1 // pred_check_branch
      %26 = sbr.rel (0) target = $region29
    $region28: #{decoder_layer_forward.17} parent=1 // pred_region
      _
    $region29: #{decoder_layer_forward.17} parent=1 // pred_fallthru
      _
    %p28 = scmp.eq.s32.totalorder 0, 0
    // Predicated region
    $region30: #{decoder_layer_forward.17} parent=1 // pred_check
      %p29 = pneg %p28
    $region31: #{decoder_layer_forward.17} parent=1 // pred_check_branch
      %31 = sbr.rel (%p29) target = $region33
    $region32: #{decoder_layer_forward.17} parent=1 // pred_region
      %vm32 = vcmask 261120
      %33 = vst.msk [vmem:[#allocation2] sm:$0xff] %vm32, 0.0
      %34 = vst.msk [vmem:[#allocation2 + $0x8] sm:$0xff] %vm32, 0.0
    $region33: #{decoder_layer_forward.17} parent=1 // pred_fallthru
      _
    %v35 = vld [vmem:[%s0] sm:$0xff]
    %v36 = vld [vmem:[%s0 + $0x8] sm:$0xff]
    %v37 = vpack.c.bf16 %v36, %v35
    %v38 = vld [vmem:[%s1] sm:$0xf]
    %v39 = vld [vmem:[%s1 + $0x4] sm:$0xf]
    %v40 = vld [vmem:[%s1 + $0x8] sm:$0xf]
    %v41 = vld [vmem:[%s1 + $0xc] sm:$0xf]
    %v42 = vld [vmem:[%s2] sm:$0x1]
    %v44 = vlaneseq
    %v45 = vshrl.u32 %v44, 7
    %v46 = vsub.s32 0, %v45
    %v47 = vrot.slane %v42, %v46
    %v53 = vunpack.c.l.b16 %v38
    %v54 = vunpack.c.l.b16 %v39
    %v55 = vunpack.c.l.b16 %v40
    %v56 = vunpack.c.l.b16 %v41
    %v57 = vpack.c.b16 %v54, %v53
    %v58 = vpack.c.b16 %v56, %v55
    %vm61 = vcmask 261120
    %v63 = vsel %vm61, %v37, 0
    %65 = vmatprep.subr.bf16.mxu0 0
    %66 = vmatpush1.bf16.msra.mxu0 %v57
    %67 = vmatprep.subr.bf16.mxu0 0
    %68 = vmatpush1.bf16.msra.mxu0 %v58
    %69 = vmatprep.subr.bf16.mxu0 0
    %70 = vmatpush1.bf16.msra.mxu0 0
    %71 = vmatprep.subr.bf16.mxu0 0
    %72 = vmatpush1.bf16.msra.mxu0 0
    %73 = vmatprep.subr.bf16.mxu0 0
    %74 = vmatpush1.bf16.msra.mxu0 0
    %75 = vmatprep.subr.bf16.mxu0 0
    %76 = vmatpush1.bf16.msra.mxu0 0
    %77 = vmatprep.subr.bf16.mxu0 0
    %78 = vmatpush1.bf16.msra.mxu0 0
    %79 = vmatprep.subr.bf16.mxu0 0
    %80 = vmatpush1.bf16.msra.mxu0 0
    %81 = vmatprep.subr.bf16.mxu0 0
    %82 = vmatpush1.bf16.msra.mxu0 0
    %83 = vmatprep.subr.bf16.mxu0 0
    %84 = vmatpush1.bf16.msra.mxu0 0
    %85 = vmatprep.subr.bf16.mxu0 0
    %86 = vmatpush1.bf16.msra.mxu0 0
    %87 = vmatprep.subr.bf16.mxu0 0
    %88 = vmatpush1.bf16.msra.mxu0 0
    %89 = vmatprep.subr.bf16.mxu0 0
    %90 = vmatpush1.bf16.msra.mxu0 0
    %91 = vmatprep.subr.bf16.mxu0 0
    %92 = vmatpush1.bf16.msra.mxu0 0
    %93 = vmatprep.subr.bf16.mxu0 0
    %94 = vmatpush1.bf16.msra.mxu0 0
    %95 = vmatprep.subr.bf16.mxu0 0
    %96 = vmatpush1.bf16.msra.mxu0 0
    %97 = vmatprep.mubr.bf16.mxu0 0
    %98 = vmatmul.mubr.bf16.gmra.mrb[0].mxu0 %v63
    %v99 = vpop.f32.mrb[0].mxu0
    %v100 = vadd.f32 %v47, %v99
    %v101 = vpop.f32.mrb[0].mxu0
    %v102 = vpop.f32.mrb[0].mxu0
    %v103 = vadd.f32 %v47, %v102
    %v104 = vpop.f32.mrb[0].mxu0
    %105 = vdwg.mxu0
    %v106 = vmax.f32 %v100, 0.0
    %v107 = vmax.f32 %v103, 0.0
    %v108 = vld [vmem:[#allocation2] sm:$0xff]
    %v109 = vld [vmem:[#allocation2 + $0x8] sm:$0xff]
    %v110 = vpack.c.bf16 %v107, %v106
    %v111 = vld [vmem:[%s3] sm:$0xf]
    %v112 = vld [vmem:[%s3 + $0x4] sm:$0xf]
    %v113 = vld [vmem:[%s3 + $0x8] sm:$0xf]
    %v114 = vld [vmem:[%s3 + $0xc] sm:$0xf]
    %v115 = vld [vmem:[%s3 + $0x10] sm:$0xf]
    %v116 = vld [vmem:[%s3 + $0x14] sm:$0xf]
    %v117 = vld [vmem:[%s3 + $0x18] sm:$0xf]
    %v118 = vld [vmem:[%s3 + $0x1c] sm:$0xf]
    %v127 = vunpack.c.l.b16 %v111
    %v128 = vunpack.c.l.b16 %v112
    %v129 = vunpack.c.l.b16 %v113
    %v130 = vunpack.c.l.b16 %v114
    %v131 = vunpack.c.l.b16 %v115
    %v132 = vunpack.c.l.b16 %v116
    %v133 = vunpack.c.l.b16 %v117
    %v134 = vunpack.c.l.b16 %v118
    %v135 = vpack.c.b16 %v128, %v127
    %v136 = vpack.c.b16 %v130, %v129
    %v137 = vpack.c.b16 %v132, %v131
    %v138 = vpack.c.b16 %v134, %v133
    %vm143 = vcmask 523264
    %v145 = vsel %vm143, %v110, 0
    %147 = vmatprep.subr.bf16.mxu0 0
    %148 = vmatpush1.bf16.msra.mxu0 %v135
    %149 = vmatprep.subr.bf16.mxu0 0
    %150 = vmatpush1.bf16.msra.mxu0 %v136
    %151 = vmatprep.subr.bf16.mxu0 0
    %152 = vmatpush1.bf16.msra.mxu0 %v137
    %153 = vmatprep.subr.bf16.mxu0 0
    %154 = vmatpush1.bf16.msra.mxu0 %v138
    %155 = vmatprep.subr.bf16.mxu0 0
    %156 = vmatpush1.bf16.msra.mxu0 0
    %157 = vmatprep.subr.bf16.mxu0 0
    %158 = vmatpush1.bf16.msra.mxu0 0
    %159 = vmatprep.subr.bf16.mxu0 0
    %160 = vmatpush1.bf16.msra.mxu0 0
    %161 = vmatprep.subr.bf16.mxu0 0
    %162 = vmatpush1.bf16.msra.mxu0 0
    %163 = vmatprep.subr.bf16.mxu0 0
    %164 = vmatpush1.bf16.msra.mxu0 0
    %165 = vmatprep.subr.bf16.mxu0 0
    %166 = vmatpush1.bf16.msra.mxu0 0
    %167 = vmatprep.subr.bf16.mxu0 0
    %168 = vmatpush1.bf16.msra.mxu0 0
    %169 = vmatprep.subr.bf16.mxu0 0
    %170 = vmatpush1.bf16.msra.mxu0 0
    %171 = vmatprep.subr.bf16.mxu0 0
    %172 = vmatpush1.bf16.msra.mxu0 0
    %173 = vmatprep.subr.bf16.mxu0 0
    %174 = vmatpush1.bf16.msra.mxu0 0
    %175 = vmatprep.subr.bf16.mxu0 0
    %176 = vmatpush1.bf16.msra.mxu0 0
    %177 = vmatprep.subr.bf16.mxu0 0
    %178 = vmatpush1.bf16.msra.mxu0 0
    %179 = vmatprep.mubr.bf16.mxu0 0
    %180 = vmatmul.mubr.bf16.gmra.mrb[0].mxu0 %v145
    %v181 = vpop.f32.mrb[0].mxu0
    %v182 = vadd.f32 0.0, %v181
    %v183 = vpop.f32.mrb[0].mxu0
    %v184 = vpop.f32.mrb[0].mxu0
    %v185 = vadd.f32 0.0, %v184
    %v186 = vpop.f32.mrb[0].mxu0
    %187 = vdwg.mxu0
    %v188 = vadd.f32 %v108, %v182
    %v189 = vadd.f32 %v109, %v185
    %190 = vst.msk [vmem:[#allocation2] sm:$0xff] %vm61, %v188
    %191 = vst.msk [vmem:[#allocation2 + $0x8] sm:$0xff] %vm61, %v189
    // Predicated region
    $region34: #{decoder_layer_forward.17} parent=1 // pred_check
      %p192 = pneg %p28
    $region35: #{decoder_layer_forward.17} parent=1 // pred_check_branch
      %194 = sbr.rel (%p192) target = $region37
    $region36: #{decoder_layer_forward.17} parent=1 // pred_region
      %v195 = vld [vmem:[%s0] sm:$0xff]
      %v196 = vld [vmem:[%s0 + $0x8] sm:$0xff]
      %v197 = vld [vmem:[#allocation2] sm:$0xff]
      %v198 = vld [vmem:[#allocation2 + $0x8] sm:$0xff]
      %v199 = vadd.f32 %v195, %v197
      %v200 = vadd.f32 %v196, %v198
      %v201 = vld [vmem:[%s4] sm:$0x1]
      %v203 = vlaneseq
      %v204 = vshrl.u32 %v203, 7
      %v205 = vsub.s32 0, %v204
      %v206 = vrot.slane %v201, %v205
      %v208 = vadd.f32 %v199, %v206
      %v209 = vadd.f32 %v200, %v206
      %v210 = vld [vmem:[%s5] sm:$0x1]
      %v211 = vld [vmem:[%s6] sm:$0x1]
      %v212 = vsel %vm61, %v208, 0.0
      %213 = vadd.xlane.f32.xlu0 %v212
      %v214 = vpop.xlane.xlu0 %213
      %v215 = vsel %vm61, %v209, 0.0
      %216 = vadd.xlane.f32.xlu0 %v215
      %v217 = vpop.xlane.xlu0 %216
      %v218 = vrcp.pop 32.0
      %v219 = vmul.f32 %v214, %v218
      %v220 = vmul.f32 %v217, %v218
      %v221 = vsub.f32 %v208, %v219
      %v222 = vsub.f32 %v209, %v220
      %v223 = vmul.f32 %v221, %v221
      %v224 = vmul.f32 %v222, %v222
      %v225 = vsel %vm61, %v223, 0.0
      %226 = vadd.xlane.f32.xlu0 %v225
      %v227 = vpop.xlane.xlu0 %226
      %v228 = vsel %vm61, %v224, 0.0
      %229 = vadd.xlane.f32.xlu0 %v228
      %v230 = vpop.xlane.xlu0 %229
      %v231 = vmul.f32 %v227, %v218
      %v232 = vmul.f32 %v230, %v218
      %v233 = vadd.f32 %v231, 1e-05
      %v234 = vadd.f32 %v232, 1e-05
      %v235 = vrsqrt.pop %v233
      %v236 = vrsqrt.pop %v234
      %v237 = vmul.f32 %v221, %v235
      %v238 = vmul.f32 %v222, %v236
      %v240 = vlaneseq
      %v241 = vshrl.u32 %v240, 7
      %v242 = vsub.s32 0, %v241
      %v243 = vrot.slane %v210, %v242
      %v245 = vmul.f32 %v237, %v243
      %v246 = vmul.f32 %v238, %v243
      %v248 = vlaneseq
      %v249 = vshrl.u32 %v248, 7
      %v250 = vsub.s32 0, %v249
      %v251 = vrot.slane %v211, %v250
      %v253 = vadd.f32 %v245, %v251
      %v254 = vadd.f32 %v246, %v251
      %255 = vst.msk [vmem:[#allocation3] sm:$0xff] %vm61, %v253
      %256 = vst.msk [vmem:[#allocation3 + $0x8] sm:$0xff] %vm61, %v254
    $region37: #{decoder_layer_forward.17} parent=1 // pred_fallthru
      _
    // Predicated region
    $region38: #{decoder_layer_forward.17} parent=1 // pred_check
      _
    $region39: #{decoder_layer_forward.17} parent=1 // pred_check_branch
      %258 = sbr.rel (0) target = $region41
    $region40: #{decoder_layer_forward.17} parent=1 // pred_region
      %s260 = ssub.s32 256, 256
      %261 = vsyncadd [#allocation4], %s260
      %s262 = sshll.u32 [#allocation3], 4
      %s263 = int_to_ptr.vmem [resolvable:$true] %s262
      %268 = dma.vmem_to_hbm [thread:$0]  %s263, 256, %s7, [#allocation4], 128, 128, 8
    $region41: #{decoder_layer_forward.17} parent=1 // pred_fallthru
      _
    // Predicated region
    $region42: #{decoder_layer_forward.17} parent=1 // pred_check
      _
    $region43: #{decoder_layer_forward.17} parent=1 // pred_check_branch
      %270 = sbr.rel (0) target = $region45
    $region44: #{decoder_layer_forward.17} parent=1 // pred_region
      %271 = dma.done [#allocation4], 256
    $region45: #{decoder_layer_forward.17} parent=1 // pred_fallthru
      _
    %272 = vsyncpa [#allocation4], 1

</llo_original>
